<compile_context>
chip_gen: v5e
topology: v5e:2x2
jax: 0.10.0
libtpu: 0.0.40
codegen_flags: <defaults>
</compile_context>

<pallas_src>
import functools

import jax
import jax.numpy as jnp
from jax import lax
from jax.experimental import pallas as pl
from jax.experimental.pallas import tpu as pltpu

EPS = 1e-5
_VMEM_LIMIT = 32 * 1024 * 1024   # safe on v5e/v6e/v7x; raises v5e's 16MiB default


def _cparams(*sem):
    return pltpu.CompilerParams(dimension_semantics=tuple(sem),
                                vmem_limit_bytes=_VMEM_LIMIT)


def _pad_rows_to8(ps):
    """(1, C) partial stat -> (8, C) block: data in row 0, zeros elsewhere."""
    row = lax.broadcasted_iota(jnp.int32, (8, ps.shape[1]), 0)
    return jnp.where(row == 0, ps, 0.0)


# ---------------------------------------------------------------------------
# Kernel A: 1x1 conv (matmul) + per-tile partial per-channel sum / sum-of-sq
# ---------------------------------------------------------------------------
def _conv1x1_stats_kernel(x_ref, w_ref, y_ref, sum_ref, sq_ref):
    y = jnp.dot(x_ref[...].astype(w_ref.dtype), w_ref[...],
                preferred_element_type=jnp.float32)
    y_ref[...] = y.astype(y_ref.dtype)
    sum_ref[...] = _pad_rows_to8(jnp.sum(y, axis=0, keepdims=True))
    sq_ref[...] = _pad_rows_to8(jnp.sum(y * y, axis=0, keepdims=True))


def conv1x1_stats(x, w, *, tm, mxu_dtype):
    M, K = x.shape
    C = w.shape[1]
    T = M // tm
    return pl.pallas_call(
        _conv1x1_stats_kernel,
        out_shape=(jax.ShapeDtypeStruct((M, C), mxu_dtype),
                   jax.ShapeDtypeStruct((8 * T, C), jnp.float32),
                   jax.ShapeDtypeStruct((8 * T, C), jnp.float32)),
        grid=(T,),
        in_specs=[pl.BlockSpec((tm, K), lambda i: (i, 0)),
                  pl.BlockSpec((K, C), lambda i: (0, 0))],
        out_specs=(pl.BlockSpec((tm, C), lambda i: (i, 0)),
                   pl.BlockSpec((8, C), lambda i: (i, 0)),
                   pl.BlockSpec((8, C), lambda i: (i, 0))),
        compiler_params=_cparams("parallel"),
    )(x, w.astype(mxu_dtype))


# ---------------------------------------------------------------------------
# Kernel B: BN1-apply + ReLU fused into the 3x3 conv (in-kernel halo) + stats
# ---------------------------------------------------------------------------
def _bn_relu_conv3x3_stats_kernel(y1_ref, s_ref, b_ref, w_ref,
                                  y2_ref, sum_ref, sq_ref, hpad_ref,
                                  *, H, W, PAD, merge_dx):
    m_img = H * W
    C1 = y1_ref.shape[1]
    C2 = y2_ref.shape[1]
    cdt = hpad_ref.dtype

    # Zero the row halos every step (cheap; keeps the kernel megacore-safe).
    hpad_ref[0:PAD, :] = jnp.zeros((PAD, C1), cdt)
    hpad_ref[PAD + m_img:PAD + m_img + PAD, :] = jnp.zeros((PAD, C1), cdt)

    # BN1 apply + ReLU on the tile while it is already in VMEM.
    h = jnp.maximum(y1_ref[...].astype(jnp.float32) * s_ref[...] + b_ref[...],
                    0.0)
    hpad_ref[PAD:PAD + m_img, :] = h.astype(cdt)

    # Column-validity masks built in-kernel (output col j + dx must be in [0, W)).
    col = lax.broadcasted_iota(jnp.int32, (m_img, 1), 0) % W
    mask_l = (col >= 1).astype(cdt)
    mask_r = (col <= W - 2).astype(cdt)

    acc = jnp.zeros((m_img, C2), jnp.float32)
    if merge_dx:
        # 3 matmuls of K = 3*C1 (lane-aligned concat, C1 % 128 == 0).
        for dy in (-1, 0, 1):
            base = PAD + dy * W
            left = hpad_ref[base - 1:base - 1 + m_img, :] * mask_l
            mid = hpad_ref[base:base + m_img, :]
            right = hpad_ref[base + 1:base + 1 + m_img, :] * mask_r
            src = jnp.concatenate([left, mid, right], axis=1)
            acc = acc + jnp.dot(src, w_ref[dy + 1],
                                preferred_element_type=jnp.float32)
    else:
        # 9 row/col-shifted matmuls of K = C1.
        for dy in (-1, 0, 1):
            for dx in (-1, 0, 1):
                off = PAD + dy * W + dx
                src = hpad_ref[off:off + m_img, :]
                if dx == -1:
                    src = src * mask_l
                elif dx == 1:
                    src = src * mask_r
                acc = acc + jnp.dot(src, w_ref[(dy + 1) * 3 + (dx + 1)],
                                    preferred_element_type=jnp.float32)

    y2_ref[...] = acc.astype(y2_ref.dtype)
    sum_ref[...] = _pad_rows_to8(jnp.sum(acc, axis=0, keepdims=True))
    sq_ref[...] = _pad_rows_to8(jnp.sum(acc * acc, axis=0, keepdims=True))


def bn_relu_conv3x3_stats(y1, scale, shift, w2, *, N, H, W, mxu_dtype):
    M, C1 = y1.shape
    C2 = w2.shape[-1]
    m_img = H * W
    assert M == N * m_img and m_img % 8 == 0
    pad = ((W + 1 + 7) // 8) * 8   # halo depth, 8-aligned, >= W+1

    merge_dx = (C1 % 128 == 0)
    w_tap = w2.reshape(3, 3 * C1, C2) if merge_dx else w2.reshape(9, C1, C2)

    kernel = functools.partial(_bn_relu_conv3x3_stats_kernel,
                               H=H, W=W, PAD=pad, merge_dx=merge_dx)
    vec = lambda: pl.BlockSpec((1, C1), lambda n: (0, 0))
    return pl.pallas_call(
        kernel,
        out_shape=(jax.ShapeDtypeStruct((M, C2), mxu_dtype),
                   jax.ShapeDtypeStruct((8 * N, C2), jnp.float32),
                   jax.ShapeDtypeStruct((8 * N, C2), jnp.float32)),
        grid=(N,),
        in_specs=[pl.BlockSpec((m_img, C1), lambda n: (n, 0)), vec(), vec(),
                  pl.BlockSpec(w_tap.shape, lambda n: (0, 0, 0))],
        out_specs=(pl.BlockSpec((m_img, C2), lambda n: (n, 0)),
                   pl.BlockSpec((8, C2), lambda n: (n, 0)),
                   pl.BlockSpec((8, C2), lambda n: (n, 0))),
        scratch_shapes=[pltpu.VMEM((m_img + 2 * pad, C1), mxu_dtype)],
        compiler_params=_cparams("parallel"),
    )(y1, scale, shift, w_tap.astype(mxu_dtype))


# ---------------------------------------------------------------------------
# Kernel C: BN2-apply + ReLU fused into the 1x1 conv (matmul) + stats
# ---------------------------------------------------------------------------
def _bn_relu_conv1x1_stats_kernel(x_ref, s_ref, b_ref, w_ref,
                                  y_ref, sum_ref, sq_ref):
    h = jnp.maximum(x_ref[...].astype(jnp.float32) * s_ref[...] + b_ref[...],
                    0.0)
    y = jnp.dot(h.astype(w_ref.dtype), w_ref[...],
                preferred_element_type=jnp.float32)
    y_ref[...] = y.astype(y_ref.dtype)
    sum_ref[...] = _pad_rows_to8(jnp.sum(y, axis=0, keepdims=True))
    sq_ref[...] = _pad_rows_to8(jnp.sum(y * y, axis=0, keepdims=True))


def bn_relu_conv1x1_stats(x, scale, shift, w, *, tm, mxu_dtype):
    M, K = x.shape
    C = w.shape[1]
    T = M // tm
    vec = lambda: pl.BlockSpec((1, K), lambda i: (0, 0))
    return pl.pallas_call(
        _bn_relu_conv1x1_stats_kernel,
        out_shape=(jax.ShapeDtypeStruct((M, C), mxu_dtype),
                   jax.ShapeDtypeStruct((8 * T, C), jnp.float32),
                   jax.ShapeDtypeStruct((8 * T, C), jnp.float32)),
        grid=(T,),
        in_specs=[pl.BlockSpec((tm, K), lambda i: (i, 0)), vec(), vec(),
                  pl.BlockSpec((K, C), lambda i: (0, 0))],
        out_specs=(pl.BlockSpec((tm, C), lambda i: (i, 0)),
                   pl.BlockSpec((8, C), lambda i: (i, 0)),
                   pl.BlockSpec((8, C), lambda i: (i, 0))),
        compiler_params=_cparams("parallel"),
    )(x, scale, shift, w.astype(mxu_dtype))


# ---------------------------------------------------------------------------
# Kernel D: BN3-apply + residual add + ReLU (streaming, lane-dense output)
# ---------------------------------------------------------------------------
def _bn_add_relu_kernel(y_ref, s_ref, b_ref, res_ref, o_ref):
    o_ref[...] = jnp.maximum(
        y_ref[...].astype(jnp.float32) * s_ref[...] + b_ref[...]
        + res_ref[...].astype(jnp.float32), 0.0)


def _fold_factor(M, C, target=128):
    """Smallest row-fold f so f*C >= target lanes, with M % f == 0 and
    (M//f) % 8 == 0; falls back toward 1 if no such factor exists."""
    if C >= target:
        return 1
    f = -(-target // C)          # ceil
    while f > 1 and (M % f or (M // f) % 8):
        f -= 1
    return f


def bn_add_relu(y, scale, shift, residual, *, tm_target):
    M, C = y.shape
    f = _fold_factor(M, C)
    Mf, Cf = M // f, C * f
    yf = y.reshape(Mf, Cf)
    rf = residual.reshape(Mf, Cf)
    sf = jnp.tile(scale, (1, f))
    bf = jnp.tile(shift, (1, f))
    tm = _pick_tm(Mf, tm_target)
    vec = lambda: pl.BlockSpec((1, Cf), lambda i: (0, 0))
    out = pl.pallas_call(
        _bn_add_relu_kernel,
        out_shape=jax.ShapeDtypeStruct((Mf, Cf), jnp.float32),
        grid=(Mf // tm,),
        in_specs=[pl.BlockSpec((tm, Cf), lambda i: (i, 0)), vec(), vec(),
                  pl.BlockSpec((tm, Cf), lambda i: (i, 0))],
        out_specs=pl.BlockSpec((tm, Cf), lambda i: (i, 0)),
        compiler_params=_cparams("parallel"),
    )(yf, sf, bf, rf)
    return out.reshape(M, C)


# ---------------------------------------------------------------------------
# Host-side glue
# ---------------------------------------------------------------------------
def _bn_scale_shift(psum, psq, m, gamma, beta):
    """Fold train-mode BN (batch stats, biased var) into y*scale + shift."""
    s = jnp.sum(psum, axis=0, keepdims=True)
    sq = jnp.sum(psq, axis=0, keepdims=True)
    mean = s / m
    var = jnp.maximum(sq / m - mean * mean, 0.0)   # guard tiny negatives
    scale = gamma.reshape(1, -1) * lax.rsqrt(var + EPS)
    shift = beta.reshape(1, -1) - mean * scale
    return scale, shift


def _pick_tm(m, target):
    """Largest multiple-of-8 tile <= target that divides m.
    TODO(synk): pad M to a multiple of the target tile (with masked stats
                tail) so an awkward M never collapses to tiny tiles."""
    t = max(8, min(target, m) // 8 * 8)
    while m % t:
        t -= 8
    return t


def bottleneck_forward(x, p, *, mxu_dtype=jnp.bfloat16, tm_target=1024):
    N, H, W, Cin = x.shape
    M = N * H * W
    assert M % 8 == 0
    x_flat = x.reshape(M, Cin)
    tm = _pick_tm(M, tm_target)

    # conv1 (1x1) + stats.  Conv biases are mathematically absorbed by the
    # batch-stat BN that follows, so they are not applied in the kernel path.
    y1, ps1, pq1 = conv1x1_stats(x_flat, p["w1"], tm=tm, mxu_dtype=mxu_dtype)
    sc1, sh1 = _bn_scale_shift(ps1, pq1, M, p["g1"], p["be1"])

    # bn1 + relu fused into conv2 (3x3, pad 1, in-kernel halo) + stats
    y2, ps2, pq2 = bn_relu_conv3x3_stats(y1, sc1, sh1, p["w2"],
                                         N=N, H=H, W=W, mxu_dtype=mxu_dtype)
    sc2, sh2 = _bn_scale_shift(ps2, pq2, M, p["g2"], p["be2"])

    # bn2 + relu fused into conv3 (1x1) + stats
    y3, ps3, pq3 = bn_relu_conv1x1_stats(y2, sc2, sh2, p["w3"],
                                         tm=tm, mxu_dtype=mxu_dtype)
    sc3, sh3 = _bn_scale_shift(ps3, pq3, M, p["g3"], p["be3"])

    # bn3 + residual add + relu
    out = bn_add_relu(y3, sc3, sh3, x_flat, tm_target=tm_target)
    return out.reshape(N, H, W, -1)


# ---------------------------------------------------------------------------
# Pure-JAX reference (independent of the Pallas kernels, biases included)
# ---------------------------------------------------------------------------
def ref_forward(x, p):
    def bn(y, g, b):
        mean = y.mean(axis=0, keepdims=True)
        var = ((y - mean) ** 2).mean(axis=0, keepdims=True)
        return (y - mean) / jnp.sqrt(var + EPS) * g + b

    N, H, W, Cin = x.shape
    xf = x.reshape(-1, Cin)
    h1 = jax.nn.relu(bn(xf @ p["w1"] + p["b1"], p["g1"], p["be1"]))
    planes = p["w1"].shape[1]
    w2_hwio = p["w2"].reshape(3, 3, planes, planes)
    y2 = lax.conv_general_dilated(
        h1.reshape(N, H, W, planes), w2_hwio, (1, 1), "SAME",
        dimension_numbers=("NHWC", "HWIO", "NHWC"))
    h2 = jax.nn.relu(bn(y2.reshape(-1, planes) + p["b2"], p["g2"], p["be2"]))
    y3 = bn(h2 @ p["w3"] + p["b3"], p["g3"], p["be3"])
    return jax.nn.relu(y3 + xf).reshape(N, H, W, -1)


def make_params(key, inplanes, planes, expansion):
    ks = jax.random.split(key, 12)
    f32 = jnp.float32
    cout = planes * expansion
    return {
        "w1": jax.random.normal(ks[0], (inplanes, planes), f32) * 0.1,
        "b1": jax.random.normal(ks[1], (planes,), f32) * 0.1,
        "g1": 1.0 + 0.1 * jax.random.normal(ks[2], (planes,), f32),
        "be1": 0.1 * jax.random.normal(ks[3], (planes,), f32),
        "w2": jax.random.normal(ks[4], (9 * planes, planes), f32) * 0.1,
        "b2": jax.random.normal(ks[5], (planes,), f32) * 0.1,
        "g2": 1.0 + 0.1 * jax.random.normal(ks[6], (planes,), f32),
        "be2": 0.1 * jax.random.normal(ks[7], (planes,), f32),
        "w3": jax.random.normal(ks[8], (planes, cout), f32) * 0.1,
        "b3": jax.random.normal(ks[9], (cout,), f32) * 0.1,
        "g3": 1.0 + 0.1 * jax.random.normal(ks[10], (cout,), f32),
        "be3": 0.1 * jax.random.normal(ks[11], (cout,), f32),
    }


if __name__ == "__main__":
    key = jax.random.PRNGKey(0)
    k1, k2, k3, k4 = jax.random.split(key, 4)

    fwd_f32 = jax.jit(functools.partial(bottleneck_forward, mxu_dtype=jnp.float32))
    fwd_bf16 = jax.jit(functools.partial(bottleneck_forward, mxu_dtype=jnp.bfloat16))

    # ---- Test 1: small toy shapes (identity shortcut), f32 and bf16 paths --
    inplanes, planes, expansion = 16, 4, 4
    N, H, W = 2, 16, 16
    params = make_params(k1, inplanes, planes, expansion)
    x = jax.random.normal(k2, (N, H, W, inplanes), jnp.float32)

    ref = jax.block_until_ready(ref_forward(x, params))

    out = jax.block_until_ready(fwd_f32(x, params))
    assert out.shape == (N, H, W, planes * expansion)
    assert jnp.allclose(out, ref, atol=5e-3, rtol=5e-3), (
        f"f32 max abs diff {jnp.max(jnp.abs(out - ref))}")

    out_bf = jax.block_until_ready(fwd_bf16(x, params))
    assert jnp.allclose(out_bf, ref, atol=1e-1, rtol=1e-1), (
        f"bf16 max abs diff {jnp.max(jnp.abs(out_bf - ref))}")

    # ---- Test 2: lane-aligned channels (C1 % 128 == 0) -> merged 3x3 path --
    inplanes2, planes2, expansion2 = 256, 128, 2
    N2, H2, W2 = 1, 8, 8
    params2 = make_params(k3, inplanes2, planes2, expansion2)
    x2 = jax.random.normal(k4, (N2, H2, W2, inplanes2), jnp.float32)

    ref2 = jax.block_until_ready(ref_forward(x2, params2))
    out2 = jax.block_until_ready(fwd_bf16(x2, params2))
    assert out2.shape == (N2, H2, W2, planes2 * expansion2)
    assert jnp.allclose(out2, ref2, atol=1.5e-1, rtol=1.5e-1), (
        f"bf16 merged-path max abs diff {jnp.max(jnp.abs(out2 - ref2))}")

    print("KERNEL_OK")
</pallas_src>

<mosaic_0001>
module attributes {stable_mosaic.version = 11 : i64} {
  func.func @_conv1x1_stats_kernel(%arg0: i32, %arg1: memref<512x16xf32, #tpu.memory_space<vmem>>, %arg2: memref<16x4xf32, #tpu.memory_space<vmem>>, %arg3: memref<512x4xf32, #tpu.memory_space<vmem>>, %arg4: memref<8x4xf32, #tpu.memory_space<vmem>>, %arg5: memref<8x4xf32, #tpu.memory_space<vmem>>) attributes {dimension_semantics = [#tpu.dimension_semantics<parallel>], iteration_bounds = array<i64: 1>, scalar_prefetch = 0 : i64, scratch_operands = 0 : i64, tpu.core_type = #tpu.core_type<tc>, window_params = [{transform_indices = @transform_0, window_bounds = array<i64: 512, 16>}, {pipeline_mode = #tpu.pipeline_mode<synchronous>, transform_indices = @transform_1, window_bounds = array<i64: 16, 4>}, {transform_indices = @transform_2, window_bounds = array<i64: 512, 4>}, {transform_indices = @transform_3, window_bounds = array<i64: 8, 4>}, {transform_indices = @transform_4, window_bounds = array<i64: 8, 4>}]} {
    %c0 = arith.constant 0 : index
    %c0_0 = arith.constant 0 : index
    %0 = vector.load %arg1[%c0, %c0_0] : memref<512x16xf32, #tpu.memory_space<vmem>>, vector<512x16xf32>
    %c0_1 = arith.constant 0 : index
    %c0_2 = arith.constant 0 : index
    %1 = vector.load %arg2[%c0_1, %c0_2] : memref<16x4xf32, #tpu.memory_space<vmem>>, vector<16x4xf32>
    %cst = arith.constant dense<0.000000e+00> : vector<512x4xf32>
    %2 = tpu.matmul %0, %1, %cst {dimension_numbers = #tpu.dot_dimension_numbers<[1], [0], [0], [1], [0, 0, 1, 1], [], []>} : vector<512x16xf32>, vector<16x4xf32>, vector<512x4xf32> -> vector<512x4xf32>
    %c0_3 = arith.constant 0 : index
    %c0_4 = arith.constant 0 : index
    %3 = vector.load %arg3[%c0_3, %c0_4] : memref<512x4xf32, #tpu.memory_space<vmem>>, vector<512x4xf32>
    tpu.vector_store %arg3[%c0_3, %c0_4], %2 {strides = array<i32>} : memref<512x4xf32, #tpu.memory_space<vmem>>, vector<512x4xf32>,
    %cst_5 = arith.constant dense<0.000000e+00> : vector<4xf32>
    %4 = vector.multi_reduction <add>, %2, %cst_5 [0] : vector<512x4xf32> to vector<4xf32>
    %5 = vector.shape_cast %4 : vector<4xf32> to vector<1x4xf32>
    %6 = tpu.iota {dimensions = array<i32: 0>} : vector<8x4xi32>
    %c0_i32 = arith.constant 0 : i32
    %7 = vector.broadcast %c0_i32 : i32 to vector<8x4xi32>
    %8 = arith.cmpi eq, %6, %7 : vector<8x4xi32>
    %cst_6 = arith.constant 0.000000e+00 : f32
    %9 = vector.shape_cast %5 : vector<1x4xf32> to vector<1x4xf32>
    %10 = vector.broadcast %9 : vector<1x4xf32> to vector<8x4xf32>
    %11 = vector.broadcast %cst_6 : f32 to vector<8x4xf32>
    %12 = arith.select %8, %10, %11 : vector<8x4xi1>, vector<8x4xf32>
    %c0_7 = arith.constant 0 : index
    %c0_8 = arith.constant 0 : index
    %13 = vector.load %arg4[%c0_7, %c0_8] : memref<8x4xf32, #tpu.memory_space<vmem>>, vector<8x4xf32>
    tpu.vector_store %arg4[%c0_7, %c0_8], %12 {strides = array<i32>} : memref<8x4xf32, #tpu.memory_space<vmem>>, vector<8x4xf32>,
    %14 = arith.mulf %2, %2 : vector<512x4xf32>
    %cst_9 = arith.constant dense<0.000000e+00> : vector<4xf32>
    %15 = vector.multi_reduction <add>, %14, %cst_9 [0] : vector<512x4xf32> to vector<4xf32>
    %16 = vector.shape_cast %15 : vector<4xf32> to vector<1x4xf32>
    %17 = tpu.iota {dimensions = array<i32: 0>} : vector<8x4xi32>
    %c0_i32_10 = arith.constant 0 : i32
    %18 = vector.broadcast %c0_i32_10 : i32 to vector<8x4xi32>
    %19 = arith.cmpi eq, %17, %18 : vector<8x4xi32>
    %cst_11 = arith.constant 0.000000e+00 : f32
    %20 = vector.shape_cast %16 : vector<1x4xf32> to vector<1x4xf32>
    %21 = vector.broadcast %20 : vector<1x4xf32> to vector<8x4xf32>
    %22 = vector.broadcast %cst_11 : f32 to vector<8x4xf32>
    %23 = arith.select %19, %21, %22 : vector<8x4xi1>, vector<8x4xf32>
    %c0_12 = arith.constant 0 : index
    %c0_13 = arith.constant 0 : index
    %24 = vector.load %arg5[%c0_12, %c0_13] : memref<8x4xf32, #tpu.memory_space<vmem>>, vector<8x4xf32>
    tpu.vector_store %arg5[%c0_12, %c0_13], %23 {strides = array<i32>} : memref<8x4xf32, #tpu.memory_space<vmem>>, vector<8x4xf32>,
    return
  }
  func.func @transform_0(%arg0: i32) -> (i32, i32) {
    %c0_i32 = arith.constant 0 : i32
    %c0_i32_0 = arith.constant 0 : i32
    return %arg0, %c0_i32 : i32, i32
  }
  func.func @transform_1(%arg0: i32) -> (i32, i32) {
    %c0_i32 = arith.constant 0 : i32
    %c0_i32_0 = arith.constant 0 : i32
    %c0_i32_1 = arith.constant 0 : i32
    return %c0_i32, %c0_i32_0 : i32, i32
  }
  func.func @transform_2(%arg0: i32) -> (i32, i32) {
    %c0_i32 = arith.constant 0 : i32
    %c0_i32_0 = arith.constant 0 : i32
    return %arg0, %c0_i32 : i32, i32
  }
  func.func @transform_3(%arg0: i32) -> (i32, i32) {
    %c0_i32 = arith.constant 0 : i32
    %c0_i32_0 = arith.constant 0 : i32
    return %arg0, %c0_i32 : i32, i32
  }
  func.func @transform_4(%arg0: i32) -> (i32, i32) {
    %c0_i32 = arith.constant 0 : i32
    %c0_i32_0 = arith.constant 0 : i32
    return %arg0, %c0_i32 : i32, i32
  }
}

module attributes {stable_mosaic.version = 11 : i64} {
  func.func @_bn_relu_conv3x3_stats_kernel(%arg0: i32, %arg1: memref<256x4xf32, #tpu.memory_space<vmem>>, %arg2: memref<1x4xf32, #tpu.memory_space<vmem>>, %arg3: memref<1x4xf32, #tpu.memory_space<vmem>>, %arg4: memref<9x4x4xf32, #tpu.memory_space<vmem>>, %arg5: memref<256x4xf32, #tpu.memory_space<vmem>>, %arg6: memref<8x4xf32, #tpu.memory_space<vmem>>, %arg7: memref<8x4xf32, #tpu.memory_space<vmem>>, %arg8: memref<304x4xf32, #tpu.memory_space<vmem>>) attributes {dimension_semantics = [#tpu.dimension_semantics<parallel>], iteration_bounds = array<i64: 2>, scalar_prefetch = 0 : i64, scratch_operands = 1 : i64, tpu.core_type = #tpu.core_type<tc>, window_params = [{transform_indices = @transform_0, window_bounds = array<i64: 256, 4>}, {pipeline_mode = #tpu.pipeline_mode<synchronous>, transform_indices = @transform_1, window_bounds = array<i64: 1, 4>}, {pipeline_mode = #tpu.pipeline_mode<synchronous>, transform_indices = @transform_2, window_bounds = array<i64: 1, 4>}, {pipeline_mode = #tpu.pipeline_mode<synchronous>, transform_indices = @transform_3, window_bounds = array<i64: 9, 4, 4>}, {transform_indices = @transform_4, window_bounds = array<i64: 256, 4>}, {transform_indices = @transform_5, window_bounds = array<i64: 8, 4>}, {transform_indices = @transform_6, window_bounds = array<i64: 8, 4>}]} {
    %cst = arith.constant 0.000000e+00 : f32
    %0 = vector.broadcast %cst : f32 to vector<24x4xf32>
    %c0 = arith.constant 0 : index
    %c0_0 = arith.constant 0 : index
    %1 = vector.load %arg8[%c0, %c0_0] : memref<304x4xf32, #tpu.memory_space<vmem>>, vector<24x4xf32>
    tpu.vector_store %arg8[%c0, %c0_0], %0 {strides = array<i32>} : memref<304x4xf32, #tpu.memory_space<vmem>>, vector<24x4xf32>,
    %cst_1 = arith.constant 0.000000e+00 : f32
    %2 = vector.broadcast %cst_1 : f32 to vector<24x4xf32>
    %c280 = arith.constant 280 : index
    %c0_2 = arith.constant 0 : index
    %3 = vector.load %arg8[%c280, %c0_2] : memref<304x4xf32, #tpu.memory_space<vmem>>, vector<24x4xf32>
    tpu.vector_store %arg8[%c280, %c0_2], %2 {strides = array<i32>} : memref<304x4xf32, #tpu.memory_space<vmem>>, vector<24x4xf32>,
    %c0_3 = arith.constant 0 : index
    %c0_4 = arith.constant 0 : index
    %4 = vector.load %arg1[%c0_3, %c0_4] : memref<256x4xf32, #tpu.memory_space<vmem>>, vector<256x4xf32>
    %c0_5 = arith.constant 0 : index
    %c0_6 = arith.constant 0 : index
    %5 = vector.load %arg2[%c0_5, %c0_6] : memref<1x4xf32, #tpu.memory_space<vmem>>, vector<1x4xf32>
    %6 = vector.broadcast %5 : vector<1x4xf32> to vector<256x4xf32>
    %7 = arith.mulf %4, %6 : vector<256x4xf32>
    %c0_7 = arith.constant 0 : index
    %c0_8 = arith.constant 0 : index
    %8 = vector.load %arg3[%c0_7, %c0_8] : memref<1x4xf32, #tpu.memory_space<vmem>>, vector<1x4xf32>
    %9 = vector.broadcast %8 : vector<1x4xf32> to vector<256x4xf32>
    %10 = arith.addf %7, %9 : vector<256x4xf32>
    %cst_9 = arith.constant 0.000000e+00 : f32
    %11 = vector.broadcast %cst_9 : f32 to vector<256x4xf32>
    %12 = arith.maximumf %10, %11 : vector<256x4xf32>
    %c24 = arith.constant 24 : index
    %c0_10 = arith.constant 0 : index
    %13 = vector.load %arg8[%c24, %c0_10] : memref<304x4xf32, #tpu.memory_space<vmem>>, vector<256x4xf32>
    tpu.vector_store %arg8[%c24, %c0_10], %12 {strides = array<i32>} : memref<304x4xf32, #tpu.memory_space<vmem>>, vector<256x4xf32>,
    %14 = tpu.iota {dimensions = array<i32: 0>} : vector<256x1xi32>
    %c16_i32 = arith.constant 16 : i32
    %c0_i32 = arith.constant 0 : i32
    %15 = arith.cmpi eq, %c16_i32, %c0_i32 : i32
    %c1_i32 = arith.constant 1 : i32
    %16 = arith.select %15, %c1_i32, %c16_i32 : i32
    %17 = vector.broadcast %16 : i32 to vector<256x1xi32>
    %18 = arith.remsi %14, %17 : vector<256x1xi32>
    %c0_i32_11 = arith.constant 0 : i32
    %19 = vector.broadcast %c0_i32_11 : i32 to vector<256x1xi32>
    %20 = arith.cmpi ne, %18, %19 : vector<256x1xi32>
    %c0_i32_12 = arith.constant 0 : i32
    %21 = vector.broadcast %c0_i32_12 : i32 to vector<256x1xi32>
    %22 = arith.cmpi slt, %18, %21 : vector<256x1xi32>
    %c0_i32_13 = arith.constant 0 : i32
    %23 = arith.cmpi slt, %16, %c0_i32_13 : i32
    %24 = vector.broadcast %23 : i1 to vector<256x1xi1>
    %25 = vector.broadcast %24 : vector<256x1xi1> to vector<256x1xi1>
    %26 = arith.xori %22, %25 : vector<256x1xi1>
    %27 = arith.andi %26, %20 : vector<256x1xi1>
    %28 = vector.broadcast %16 : i32 to vector<256x1xi32>
    %29 = arith.addi %18, %28 : vector<256x1xi32>
    %30 = arith.select %27, %29, %18 : vector<256x1xi1>, vector<256x1xi32>
    %c1_i32_14 = arith.constant 1 : i32
    %31 = vector.broadcast %c1_i32_14 : i32 to vector<256x1xi32>
    %32 = arith.cmpi sge, %30, %31 : vector<256x1xi32>
    %33 = arith.extui %32 : vector<256x1xi1> to vector<256x1xi32>
    %34 = arith.sitofp %33 : vector<256x1xi32> to vector<256x1xf32>
    %c14_i32 = arith.constant 14 : i32
    %35 = vector.broadcast %c14_i32 : i32 to vector<256x1xi32>
    %36 = arith.cmpi sle, %30, %35 : vector<256x1xi32>
    %37 = arith.extui %36 : vector<256x1xi1> to vector<256x1xi32>
    %38 = arith.sitofp %37 : vector<256x1xi32> to vector<256x1xf32>
    %cst_15 = arith.constant 0.000000e+00 : f32
    %39 = vector.broadcast %cst_15 : f32 to vector<256x4xf32>
    %c7 = arith.constant 7 : index
    %c0_16 = arith.constant 0 : index
    %40 = vector.load %arg8[%c7, %c0_16] : memref<304x4xf32, #tpu.memory_space<vmem>>, vector<256x4xf32>
    %41 = vector.broadcast %34 : vector<256x1xf32> to vector<256x4xf32>
    %42 = arith.mulf %40, %41 : vector<256x4xf32>
    %c0_17 = arith.constant 0 : index
    %c0_18 = arith.constant 0 : index
    %c0_19 = arith.constant 0 : index
    %43 = vector.load %arg4[%c0_17, %c0_18, %c0_19] : memref<9x4x4xf32, #tpu.memory_space<vmem>>, vector<1x4x4xf32>
    %44 = vector.shape_cast %43 : vector<1x4x4xf32> to vector<4x4xf32>
    %cst_20 = arith.constant dense<0.000000e+00> : vector<256x4xf32>
    %45 = tpu.matmul %42, %44, %cst_20 {dimension_numbers = #tpu.dot_dimension_numbers<[1], [0], [0], [1], [0, 0, 1, 1], [], []>} : vector<256x4xf32>, vector<4x4xf32>, vector<256x4xf32> -> vector<256x4xf32>
    %46 = arith.addf %39, %45 : vector<256x4xf32>
    %c8 = arith.constant 8 : index
    %c0_21 = arith.constant 0 : index
    %47 = vector.load %arg8[%c8, %c0_21] : memref<304x4xf32, #tpu.memory_space<vmem>>, vector<256x4xf32>
    %c1 = arith.constant 1 : index
    %c0_22 = arith.constant 0 : index
    %c0_23 = arith.constant 0 : index
    %48 = vector.load %arg4[%c1, %c0_22, %c0_23] : memref<9x4x4xf32, #tpu.memory_space<vmem>>, vector<1x4x4xf32>
    %49 = vector.shape_cast %48 : vector<1x4x4xf32> to vector<4x4xf32>
    %cst_24 = arith.constant dense<0.000000e+00> : vector<256x4xf32>
    %50 = tpu.matmul %47, %49, %cst_24 {dimension_numbers = #tpu.dot_dimension_numbers<[1], [0], [0], [1], [0, 0, 1, 1], [], []>} : vector<256x4xf32>, vector<4x4xf32>, vector<256x4xf32> -> vector<256x4xf32>
    %51 = arith.addf %46, %50 : vector<256x4xf32>
    %c9 = arith.constant 9 : index
    %c0_25 = arith.constant 0 : index
    %52 = vector.load %arg8[%c9, %c0_25] : memref<304x4xf32, #tpu.memory_space<vmem>>, vector<256x4xf32>
    %53 = vector.broadcast %38 : vector<256x1xf32> to vector<256x4xf32>
    %54 = arith.mulf %52, %53 : vector<256x4xf32>
    %c2 = arith.constant 2 : index
    %c0_26 = arith.constant 0 : index
    %c0_27 = arith.constant 0 : index
    %55 = vector.load %arg4[%c2, %c0_26, %c0_27] : memref<9x4x4xf32, #tpu.memory_space<vmem>>, vector<1x4x4xf32>
    %56 = vector.shape_cast %55 : vector<1x4x4xf32> to vector<4x4xf32>
    %cst_28 = arith.constant dense<0.000000e+00> : vector<256x4xf32>
    %57 = tpu.matmul %54, %56, %cst_28 {dimension_numbers = #tpu.dot_dimension_numbers<[1], [0], [0], [1], [0, 0, 1, 1], [], []>} : vector<256x4xf32>, vector<4x4xf32>, vector<256x4xf32> -> vector<256x4xf32>
    %58 = arith.addf %51, %57 : vector<256x4xf32>
    %c23 = arith.constant 23 : index
    %c0_29 = arith.constant 0 : index
    %59 = vector.load %arg8[%c23, %c0_29] : memref<304x4xf32, #tpu.memory_space<vmem>>, vector<256x4xf32>
    %60 = vector.broadcast %34 : vector<256x1xf32> to vector<256x4xf32>
    %61 = arith.mulf %59, %60 : vector<256x4xf32>
    %c3 = arith.constant 3 : index
    %c0_30 = arith.constant 0 : index
    %c0_31 = arith.constant 0 : index
    %62 = vector.load %arg4[%c3, %c0_30, %c0_31] : memref<9x4x4xf32, #tpu.memory_space<vmem>>, vector<1x4x4xf32>
    %63 = vector.shape_cast %62 : vector<1x4x4xf32> to vector<4x4xf32>
    %cst_32 = arith.constant dense<0.000000e+00> : vector<256x4xf32>
    %64 = tpu.matmul %61, %63, %cst_32 {dimension_numbers = #tpu.dot_dimension_numbers<[1], [0], [0], [1], [0, 0, 1, 1], [], []>} : vector<256x4xf32>, vector<4x4xf32>, vector<256x4xf32> -> vector<256x4xf32>
    %65 = arith.addf %58, %64 : vector<256x4xf32>
    %c24_33 = arith.constant 24 : index
    %c0_34 = arith.constant 0 : index
    %66 = vector.load %arg8[%c24_33, %c0_34] : memref<304x4xf32, #tpu.memory_space<vmem>>, vector<256x4xf32>
    %c4 = arith.constant 4 : index
    %c0_35 = arith.constant 0 : index
    %c0_36 = arith.constant 0 : index
    %67 = vector.load %arg4[%c4, %c0_35, %c0_36] : memref<9x4x4xf32, #tpu.memory_space<vmem>>, vector<1x4x4xf32>
    %68 = vector.shape_cast %67 : vector<1x4x4xf32> to vector<4x4xf32>
    %cst_37 = arith.constant dense<0.000000e+00> : vector<256x4xf32>
    %69 = tpu.matmul %66, %68, %cst_37 {dimension_numbers = #tpu.dot_dimension_numbers<[1], [0], [0], [1], [0, 0, 1, 1], [], []>} : vector<256x4xf32>, vector<4x4xf32>, vector<256x4xf32> -> vector<256x4xf32>
    %70 = arith.addf %65, %69 : vector<256x4xf32>
    %c25 = arith.constant 25 : index
    %c0_38 = arith.constant 0 : index
    %71 = vector.load %arg8[%c25, %c0_38] : memref<304x4xf32, #tpu.memory_space<vmem>>, vector<256x4xf32>
    %72 = vector.broadcast %38 : vector<256x1xf32> to vector<256x4xf32>
    %73 = arith.mulf %71, %72 : vector<256x4xf32>
    %c5 = arith.constant 5 : index
    %c0_39 = arith.constant 0 : index
    %c0_40 = arith.constant 0 : index
    %74 = vector.load %arg4[%c5, %c0_39, %c0_40] : memref<9x4x4xf32, #tpu.memory_space<vmem>>, vector<1x4x4xf32>
    %75 = vector.shape_cast %74 : vector<1x4x4xf32> to vector<4x4xf32>
    %cst_41 = arith.constant dense<0.000000e+00> : vector<256x4xf32>
    %76 = tpu.matmul %73, %75, %cst_41 {dimension_numbers = #tpu.dot_dimension_numbers<[1], [0], [0], [1], [0, 0, 1, 1], [], []>} : vector<256x4xf32>, vector<4x4xf32>, vector<256x4xf32> -> vector<256x4xf32>
    %77 = arith.addf %70, %76 : vector<256x4xf32>
    %c39 = arith.constant 39 : index
    %c0_42 = arith.constant 0 : index
    %78 = vector.load %arg8[%c39, %c0_42] : memref<304x4xf32, #tpu.memory_space<vmem>>, vector<256x4xf32>
    %79 = vector.broadcast %34 : vector<256x1xf32> to vector<256x4xf32>
    %80 = arith.mulf %78, %79 : vector<256x4xf32>
    %c6 = arith.constant 6 : index
    %c0_43 = arith.constant 0 : index
    %c0_44 = arith.constant 0 : index
    %81 = vector.load %arg4[%c6, %c0_43, %c0_44] : memref<9x4x4xf32, #tpu.memory_space<vmem>>, vector<1x4x4xf32>
    %82 = vector.shape_cast %81 : vector<1x4x4xf32> to vector<4x4xf32>
    %cst_45 = arith.constant dense<0.000000e+00> : vector<256x4xf32>
    %83 = tpu.matmul %80, %82, %cst_45 {dimension_numbers = #tpu.dot_dimension_numbers<[1], [0], [0], [1], [0, 0, 1, 1], [], []>} : vector<256x4xf32>, vector<4x4xf32>, vector<256x4xf32> -> vector<256x4xf32>
    %84 = arith.addf %77, %83 : vector<256x4xf32>
    %c40 = arith.constant 40 : index
    %c0_46 = arith.constant 0 : index
    %85 = vector.load %arg8[%c40, %c0_46] : memref<304x4xf32, #tpu.memory_space<vmem>>, vector<256x4xf32>
    %c7_47 = arith.constant 7 : index
    %c0_48 = arith.constant 0 : index
    %c0_49 = arith.constant 0 : index
    %86 = vector.load %arg4[%c7_47, %c0_48, %c0_49] : memref<9x4x4xf32, #tpu.memory_space<vmem>>, vector<1x4x4xf32>
    %87 = vector.shape_cast %86 : vector<1x4x4xf32> to vector<4x4xf32>
    %cst_50 = arith.constant dense<0.000000e+00> : vector<256x4xf32>
    %88 = tpu.matmul %85, %87, %cst_50 {dimension_numbers = #tpu.dot_dimension_numbers<[1], [0], [0], [1], [0, 0, 1, 1], [], []>} : vector<256x4xf32>, vector<4x4xf32>, vector<256x4xf32> -> vector<256x4xf32>
    %89 = arith.addf %84, %88 : vector<256x4xf32>
    %c41 = arith.constant 41 : index
    %c0_51 = arith.constant 0 : index
    %90 = vector.load %arg8[%c41, %c0_51] : memref<304x4xf32, #tpu.memory_space<vmem>>, vector<256x4xf32>
    %91 = vector.broadcast %38 : vector<256x1xf32> to vector<256x4xf32>
    %92 = arith.mulf %90, %91 : vector<256x4xf32>
    %c8_52 = arith.constant 8 : index
    %c0_53 = arith.constant 0 : index
    %c0_54 = arith.constant 0 : index
    %93 = vector.load %arg4[%c8_52, %c0_53, %c0_54] : memref<9x4x4xf32, #tpu.memory_space<vmem>>, vector<1x4x4xf32>
    %94 = vector.shape_cast %93 : vector<1x4x4xf32> to vector<4x4xf32>
    %cst_55 = arith.constant dense<0.000000e+00> : vector<256x4xf32>
    %95 = tpu.matmul %92, %94, %cst_55 {dimension_numbers = #tpu.dot_dimension_numbers<[1], [0], [0], [1], [0, 0, 1, 1], [], []>} : vector<256x4xf32>, vector<4x4xf32>, vector<256x4xf32> -> vector<256x4xf32>
    %96 = arith.addf %89, %95 : vector<256x4xf32>
    %c0_56 = arith.constant 0 : index
    %c0_57 = arith.constant 0 : index
    %97 = vector.load %arg5[%c0_56, %c0_57] : memref<256x4xf32, #tpu.memory_space<vmem>>, vector<256x4xf32>
    tpu.vector_store %arg5[%c0_56, %c0_57], %96 {strides = array<i32>} : memref<256x4xf32, #tpu.memory_space<vmem>>, vector<256x4xf32>,
    %cst_58 = arith.constant dense<0.000000e+00> : vector<4xf32>
    %98 = vector.multi_reduction <add>, %96, %cst_58 [0] : vector<256x4xf32> to vector<4xf32>
    %99 = vector.shape_cast %98 : vector<4xf32> to vector<1x4xf32>
    %100 = tpu.iota {dimensions = array<i32: 0>} : vector<8x4xi32>
    %c0_i32_59 = arith.constant 0 : i32
    %101 = vector.broadcast %c0_i32_59 : i32 to vector<8x4xi32>
    %102 = arith.cmpi eq, %100, %101 : vector<8x4xi32>
    %cst_60 = arith.constant 0.000000e+00 : f32
    %103 = vector.shape_cast %99 : vector<1x4xf32> to vector<1x4xf32>
    %104 = vector.broadcast %103 : vector<1x4xf32> to vector<8x4xf32>
    %105 = vector.broadcast %cst_60 : f32 to vector<8x4xf32>
    %106 = arith.select %102, %104, %105 : vector<8x4xi1>, vector<8x4xf32>
    %c0_61 = arith.constant 0 : index
    %c0_62 = arith.constant 0 : index
    %107 = vector.load %arg6[%c0_61, %c0_62] : memref<8x4xf32, #tpu.memory_space<vmem>>, vector<8x4xf32>
    tpu.vector_store %arg6[%c0_61, %c0_62], %106 {strides = array<i32>} : memref<8x4xf32, #tpu.memory_space<vmem>>, vector<8x4xf32>,
    %108 = arith.mulf %96, %96 : vector<256x4xf32>
    %cst_63 = arith.constant dense<0.000000e+00> : vector<4xf32>
    %109 = vector.multi_reduction <add>, %108, %cst_63 [0] : vector<256x4xf32> to vector<4xf32>
    %110 = vector.shape_cast %109 : vector<4xf32> to vector<1x4xf32>
    %111 = tpu.iota {dimensions = array<i32: 0>} : vector<8x4xi32>
    %c0_i32_64 = arith.constant 0 : i32
    %112 = vector.broadcast %c0_i32_64 : i32 to vector<8x4xi32>
    %113 = arith.cmpi eq, %111, %112 : vector<8x4xi32>
    %cst_65 = arith.constant 0.000000e+00 : f32
    %114 = vector.shape_cast %110 : vector<1x4xf32> to vector<1x4xf32>
    %115 = vector.broadcast %114 : vector<1x4xf32> to vector<8x4xf32>
    %116 = vector.broadcast %cst_65 : f32 to vector<8x4xf32>
    %117 = arith.select %113, %115, %116 : vector<8x4xi1>, vector<8x4xf32>
    %c0_66 = arith.constant 0 : index
    %c0_67 = arith.constant 0 : index
    %118 = vector.load %arg7[%c0_66, %c0_67] : memref<8x4xf32, #tpu.memory_space<vmem>>, vector<8x4xf32>
    tpu.vector_store %arg7[%c0_66, %c0_67], %117 {strides = array<i32>} : memref<8x4xf32, #tpu.memory_space<vmem>>, vector<8x4xf32>,
    return
  }
  func.func @transform_0(%arg0: i32) -> (i32, i32) {
    %c0_i32 = arith.constant 0 : i32
    %c0_i32_0 = arith.constant 0 : i32
    return %arg0, %c0_i32 : i32, i32
  }
  func.func @transform_1(%arg0: i32) -> (i32, i32) {
    %c0_i32 = arith.constant 0 : i32
    %c0_i32_0 = arith.constant 0 : i32
    %c0_i32_1 = arith.constant 0 : i32
    return %c0_i32, %c0_i32_0 : i32, i32
  }
  func.func @transform_2(%arg0: i32) -> (i32, i32) {
    %c0_i32 = arith.constant 0 : i32
    %c0_i32_0 = arith.constant 0 : i32
    %c0_i32_1 = arith.constant 0 : i32
    return %c0_i32, %c0_i32_0 : i32, i32
  }
  func.func @transform_3(%arg0: i32) -> (i32, i32, i32) {
    %c0_i32 = arith.constant 0 : i32
    %c0_i32_0 = arith.constant 0 : i32
    %c0_i32_1 = arith.constant 0 : i32
    %c0_i32_2 = arith.constant 0 : i32
    return %c0_i32, %c0_i32_0, %c0_i32_1 : i32, i32, i32
  }
  func.func @transform_4(%arg0: i32) -> (i32, i32) {
    %c0_i32 = arith.constant 0 : i32
    %c0_i32_0 = arith.constant 0 : i32
    return %arg0, %c0_i32 : i32, i32
  }
  func.func @transform_5(%arg0: i32) -> (i32, i32) {
    %c0_i32 = arith.constant 0 : i32
    %c0_i32_0 = arith.constant 0 : i32
    return %arg0, %c0_i32 : i32, i32
  }
  func.func @transform_6(%arg0: i32) -> (i32, i32) {
    %c0_i32 = arith.constant 0 : i32
    %c0_i32_0 = arith.constant 0 : i32
    return %arg0, %c0_i32 : i32, i32
  }
}

module attributes {stable_mosaic.version = 11 : i64} {
  func.func @_bn_relu_conv1x1_stats_kernel(%arg0: i32, %arg1: memref<512x4xf32, #tpu.memory_space<vmem>>, %arg2: memref<1x4xf32, #tpu.memory_space<vmem>>, %arg3: memref<1x4xf32, #tpu.memory_space<vmem>>, %arg4: memref<4x16xf32, #tpu.memory_space<vmem>>, %arg5: memref<512x16xf32, #tpu.memory_space<vmem>>, %arg6: memref<8x16xf32, #tpu.memory_space<vmem>>, %arg7: memref<8x16xf32, #tpu.memory_space<vmem>>) attributes {dimension_semantics = [#tpu.dimension_semantics<parallel>], iteration_bounds = array<i64: 1>, scalar_prefetch = 0 : i64, scratch_operands = 0 : i64, tpu.core_type = #tpu.core_type<tc>, window_params = [{transform_indices = @transform_0, window_bounds = array<i64: 512, 4>}, {pipeline_mode = #tpu.pipeline_mode<synchronous>, transform_indices = @transform_1, window_bounds = array<i64: 1, 4>}, {pipeline_mode = #tpu.pipeline_mode<synchronous>, transform_indices = @transform_2, window_bounds = array<i64: 1, 4>}, {pipeline_mode = #tpu.pipeline_mode<synchronous>, transform_indices = @transform_3, window_bounds = array<i64: 4, 16>}, {transform_indices = @transform_4, window_bounds = array<i64: 512, 16>}, {transform_indices = @transform_5, window_bounds = array<i64: 8, 16>}, {transform_indices = @transform_6, window_bounds = array<i64: 8, 16>}]} {
    %c0 = arith.constant 0 : index
    %c0_0 = arith.constant 0 : index
    %0 = vector.load %arg1[%c0, %c0_0] : memref<512x4xf32, #tpu.memory_space<vmem>>, vector<512x4xf32>
    %c0_1 = arith.constant 0 : index
    %c0_2 = arith.constant 0 : index
    %1 = vector.load %arg2[%c0_1, %c0_2] : memref<1x4xf32, #tpu.memory_space<vmem>>, vector<1x4xf32>
    %2 = vector.broadcast %1 : vector<1x4xf32> to vector<512x4xf32>
    %3 = arith.mulf %0, %2 : vector<512x4xf32>
    %c0_3 = arith.constant 0 : index
    %c0_4 = arith.constant 0 : index
    %4 = vector.load %arg3[%c0_3, %c0_4] : memref<1x4xf32, #tpu.memory_space<vmem>>, vector<1x4xf32>
    %5 = vector.broadcast %4 : vector<1x4xf32> to vector<512x4xf32>
    %6 = arith.addf %3, %5 : vector<512x4xf32>
    %cst = arith.constant 0.000000e+00 : f32
    %7 = vector.broadcast %cst : f32 to vector<512x4xf32>
    %8 = arith.maximumf %6, %7 : vector<512x4xf32>
    %c0_5 = arith.constant 0 : index
    %c0_6 = arith.constant 0 : index
    %9 = vector.load %arg4[%c0_5, %c0_6] : memref<4x16xf32, #tpu.memory_space<vmem>>, vector<4x16xf32>
    %cst_7 = arith.constant dense<0.000000e+00> : vector<512x16xf32>
    %10 = tpu.matmul %8, %9, %cst_7 {dimension_numbers = #tpu.dot_dimension_numbers<[1], [0], [0], [1], [0, 0, 1, 1], [], []>} : vector<512x4xf32>, vector<4x16xf32>, vector<512x16xf32> -> vector<512x16xf32>
    %c0_8 = arith.constant 0 : index
    %c0_9 = arith.constant 0 : index
    %11 = vector.load %arg5[%c0_8, %c0_9] : memref<512x16xf32, #tpu.memory_space<vmem>>, vector<512x16xf32>
    tpu.vector_store %arg5[%c0_8, %c0_9], %10 {strides = array<i32>} : memref<512x16xf32, #tpu.memory_space<vmem>>, vector<512x16xf32>,
    %cst_10 = arith.constant dense<0.000000e+00> : vector<16xf32>
    %12 = vector.multi_reduction <add>, %10, %cst_10 [0] : vector<512x16xf32> to vector<16xf32>
    %13 = vector.shape_cast %12 : vector<16xf32> to vector<1x16xf32>
    %14 = tpu.iota {dimensions = array<i32: 0>} : vector<8x16xi32>
    %c0_i32 = arith.constant 0 : i32
    %15 = vector.broadcast %c0_i32 : i32 to vector<8x16xi32>
    %16 = arith.cmpi eq, %14, %15 : vector<8x16xi32>
    %cst_11 = arith.constant 0.000000e+00 : f32
    %17 = vector.shape_cast %13 : vector<1x16xf32> to vector<1x16xf32>
    %18 = vector.broadcast %17 : vector<1x16xf32> to vector<8x16xf32>
    %19 = vector.broadcast %cst_11 : f32 to vector<8x16xf32>
    %20 = arith.select %16, %18, %19 : vector<8x16xi1>, vector<8x16xf32>
    %c0_12 = arith.constant 0 : index
    %c0_13 = arith.constant 0 : index
    %21 = vector.load %arg6[%c0_12, %c0_13] : memref<8x16xf32, #tpu.memory_space<vmem>>, vector<8x16xf32>
    tpu.vector_store %arg6[%c0_12, %c0_13], %20 {strides = array<i32>} : memref<8x16xf32, #tpu.memory_space<vmem>>, vector<8x16xf32>,
    %22 = arith.mulf %10, %10 : vector<512x16xf32>
    %cst_14 = arith.constant dense<0.000000e+00> : vector<16xf32>
    %23 = vector.multi_reduction <add>, %22, %cst_14 [0] : vector<512x16xf32> to vector<16xf32>
    %24 = vector.shape_cast %23 : vector<16xf32> to vector<1x16xf32>
    %25 = tpu.iota {dimensions = array<i32: 0>} : vector<8x16xi32>
    %c0_i32_15 = arith.constant 0 : i32
    %26 = vector.broadcast %c0_i32_15 : i32 to vector<8x16xi32>
    %27 = arith.cmpi eq, %25, %26 : vector<8x16xi32>
    %cst_16 = arith.constant 0.000000e+00 : f32
    %28 = vector.shape_cast %24 : vector<1x16xf32> to vector<1x16xf32>
    %29 = vector.broadcast %28 : vector<1x16xf32> to vector<8x16xf32>
    %30 = vector.broadcast %cst_16 : f32 to vector<8x16xf32>
    %31 = arith.select %27, %29, %30 : vector<8x16xi1>, vector<8x16xf32>
    %c0_17 = arith.constant 0 : index
    %c0_18 = arith.constant 0 : index
    %32 = vector.load %arg7[%c0_17, %c0_18] : memref<8x16xf32, #tpu.memory_space<vmem>>, vector<8x16xf32>
    tpu.vector_store %arg7[%c0_17, %c0_18], %31 {strides = array<i32>} : memref<8x16xf32, #tpu.memory_space<vmem>>, vector<8x16xf32>,
    return
  }
  func.func @transform_0(%arg0: i32) -> (i32, i32) {
    %c0_i32 = arith.constant 0 : i32
    %c0_i32_0 = arith.constant 0 : i32
    return %arg0, %c0_i32 : i32, i32
  }
  func.func @transform_1(%arg0: i32) -> (i32, i32) {
    %c0_i32 = arith.constant 0 : i32
    %c0_i32_0 = arith.constant 0 : i32
    %c0_i32_1 = arith.constant 0 : i32
    return %c0_i32, %c0_i32_0 : i32, i32
  }
  func.func @transform_2(%arg0: i32) -> (i32, i32) {
    %c0_i32 = arith.constant 0 : i32
    %c0_i32_0 = arith.constant 0 : i32
    %c0_i32_1 = arith.constant 0 : i32
    return %c0_i32, %c0_i32_0 : i32, i32
  }
  func.func @transform_3(%arg0: i32) -> (i32, i32) {
    %c0_i32 = arith.constant 0 : i32
    %c0_i32_0 = arith.constant 0 : i32
    %c0_i32_1 = arith.constant 0 : i32
    return %c0_i32, %c0_i32_0 : i32, i32
  }
  func.func @transform_4(%arg0: i32) -> (i32, i32) {
    %c0_i32 = arith.constant 0 : i32
    %c0_i32_0 = arith.constant 0 : i32
    return %arg0, %c0_i32 : i32, i32
  }
  func.func @transform_5(%arg0: i32) -> (i32, i32) {
    %c0_i32 = arith.constant 0 : i32
    %c0_i32_0 = arith.constant 0 : i32
    return %arg0, %c0_i32 : i32, i32
  }
  func.func @transform_6(%arg0: i32) -> (i32, i32) {
    %c0_i32 = arith.constant 0 : i32
    %c0_i32_0 = arith.constant 0 : i32
    return %arg0, %c0_i32 : i32, i32
  }
}

module attributes {stable_mosaic.version = 11 : i64} {
  func.func @_bn_add_relu_kernel(%arg0: i32, %arg1: memref<64x128xf32, #tpu.memory_space<vmem>>, %arg2: memref<1x128xf32, #tpu.memory_space<vmem>>, %arg3: memref<1x128xf32, #tpu.memory_space<vmem>>, %arg4: memref<64x128xf32, #tpu.memory_space<vmem>>, %arg5: memref<64x128xf32, #tpu.memory_space<vmem>>) attributes {dimension_semantics = [#tpu.dimension_semantics<parallel>], iteration_bounds = array<i64: 1>, scalar_prefetch = 0 : i64, scratch_operands = 0 : i64, tpu.core_type = #tpu.core_type<tc>, window_params = [{transform_indices = @transform_0, window_bounds = array<i64: 64, 128>}, {pipeline_mode = #tpu.pipeline_mode<synchronous>, transform_indices = @transform_1, window_bounds = array<i64: 1, 128>}, {pipeline_mode = #tpu.pipeline_mode<synchronous>, transform_indices = @transform_2, window_bounds = array<i64: 1, 128>}, {transform_indices = @transform_3, window_bounds = array<i64: 64, 128>}, {transform_indices = @transform_4, window_bounds = array<i64: 64, 128>}]} {
    %c0 = arith.constant 0 : index
    %c0_0 = arith.constant 0 : index
    %0 = vector.load %arg1[%c0, %c0_0] : memref<64x128xf32, #tpu.memory_space<vmem>>, vector<64x128xf32>
    %c0_1 = arith.constant 0 : index
    %c0_2 = arith.constant 0 : index
    %1 = vector.load %arg2[%c0_1, %c0_2] : memref<1x128xf32, #tpu.memory_space<vmem>>, vector<1x128xf32>
    %2 = vector.broadcast %1 : vector<1x128xf32> to vector<64x128xf32>
    %3 = arith.mulf %0, %2 : vector<64x128xf32>
    %c0_3 = arith.constant 0 : index
    %c0_4 = arith.constant 0 : index
    %4 = vector.load %arg3[%c0_3, %c0_4] : memref<1x128xf32, #tpu.memory_space<vmem>>, vector<1x128xf32>
    %5 = vector.broadcast %4 : vector<1x128xf32> to vector<64x128xf32>
    %6 = arith.addf %3, %5 : vector<64x128xf32>
    %c0_5 = arith.constant 0 : index
    %c0_6 = arith.constant 0 : index
    %7 = vector.load %arg4[%c0_5, %c0_6] : memref<64x128xf32, #tpu.memory_space<vmem>>, vector<64x128xf32>
    %8 = arith.addf %6, %7 : vector<64x128xf32>
    %cst = arith.constant 0.000000e+00 : f32
    %9 = vector.broadcast %cst : f32 to vector<64x128xf32>
    %10 = arith.maximumf %8, %9 : vector<64x128xf32>
    %c0_7 = arith.constant 0 : index
    %c0_8 = arith.constant 0 : index
    %11 = vector.load %arg5[%c0_7, %c0_8] : memref<64x128xf32, #tpu.memory_space<vmem>>, vector<64x128xf32>
    tpu.vector_store %arg5[%c0_7, %c0_8], %10 {strides = array<i32>} : memref<64x128xf32, #tpu.memory_space<vmem>>, vector<64x128xf32>,
    return
  }
  func.func @transform_0(%arg0: i32) -> (i32, i32) {
    %c0_i32 = arith.constant 0 : i32
    %c0_i32_0 = arith.constant 0 : i32
    return %arg0, %c0_i32 : i32, i32
  }
  func.func @transform_1(%arg0: i32) -> (i32, i32) {
    %c0_i32 = arith.constant 0 : i32
    %c0_i32_0 = arith.constant 0 : i32
    %c0_i32_1 = arith.constant 0 : i32
    return %c0_i32, %c0_i32_0 : i32, i32
  }
  func.func @transform_2(%arg0: i32) -> (i32, i32) {
    %c0_i32 = arith.constant 0 : i32
    %c0_i32_0 = arith.constant 0 : i32
    %c0_i32_1 = arith.constant 0 : i32
    return %c0_i32, %c0_i32_0 : i32, i32
  }
  func.func @transform_3(%arg0: i32) -> (i32, i32) {
    %c0_i32 = arith.constant 0 : i32
    %c0_i32_0 = arith.constant 0 : i32
    return %arg0, %c0_i32 : i32, i32
  }
  func.func @transform_4(%arg0: i32) -> (i32, i32) {
    %c0_i32 = arith.constant 0 : i32
    %c0_i32_0 = arith.constant 0 : i32
    return %arg0, %c0_i32 : i32, i32
  }
}

</mosaic_0001>

<llo_original>
// kernel: bottleneck_forward.7
$region0: #{bottleneck_forward.7}
  #allocation0 [shape = 'u32[]', space=smem, size = 0x4, offset = 0x4, fixed_abs, tag = 'smem constant byte address 0x4 - core index']
  #allocation1 [shape = 'u32[72,128]{1,0:T(1,128)}', space=vmem, size = 0x9000, scoped, tag = 'internal scratch']
  %s0 = inlined_call_operand.vmem [shape: f32[64,128], index: 0, kind: input, shape index: {}]
  %s1 = inlined_call_operand.vmem [shape: f32[1,128], index: 1, kind: input, shape index: {}]
  %s2 = inlined_call_operand.vmem [shape: f32[1,128], index: 2, kind: input, shape index: {}]
  %s3 = inlined_call_operand.vmem [shape: f32[64,128], index: 3, kind: input, shape index: {}]
  %s4 = inlined_call_operand.vmem [shape: f32[64,128], index: 4, kind: output, shape index: {}]
  %s5 = sld [smem:[#allocation0]]
  $region26: #{bottleneck_forward.7} parent=0
    _
  %s7 = ssub.s32 1, %s5
  %s8 = scalar_select 0, %s7, %s5
  // Predicated region
  $region2: #{bottleneck_forward.7} parent=0 // pred_check
    _
  $region3: #{bottleneck_forward.7} parent=0 // pred_check_branch
    %10 = sbr.rel (0) target = $region5
  $region4: #{bottleneck_forward.7} parent=0 // pred_region
    _
  $region5: #{bottleneck_forward.7} parent=0 // pred_fallthru
    _
  // Predicated region
  $region6: #{bottleneck_forward.7} parent=0 // pred_check
    _
  $region7: #{bottleneck_forward.7} parent=0 // pred_check_branch
    %12 = sbr.rel (0) target = $region9
  $region8: #{bottleneck_forward.7} parent=0 // pred_region
    _
  $region9: #{bottleneck_forward.7} parent=0 // pred_fallthru
    _
  // Predicated region
  $region10: #{bottleneck_forward.7} parent=0 // pred_check
    _
  $region11: #{bottleneck_forward.7} parent=0 // pred_check_branch
    %14 = sbr.rel (0) target = $region13
  $region12: #{bottleneck_forward.7} parent=0 // pred_region
    _
  $region13: #{bottleneck_forward.7} parent=0 // pred_fallthru
    _
  // Predicated region
  $region14: #{bottleneck_forward.7} parent=0 // pred_check
    _
  $region15: #{bottleneck_forward.7} parent=0 // pred_check_branch
    %16 = sbr.rel (0) target = $region17
  $region16: #{bottleneck_forward.7} parent=0 // pred_region
    _
  $region17: #{bottleneck_forward.7} parent=0 // pred_fallthru
    _
  %v17 = vld [vmem:[%s0] sm:$0xff]
  %v18 = vld [vmem:[%s0 + $0x8] sm:$0xff]
  %v19 = vld [vmem:[%s0 + $0x10] sm:$0xff]
  %v20 = vld [vmem:[%s0 + $0x18] sm:$0xff]
  %v21 = vld [vmem:[%s0 + $0x20] sm:$0xff]
  %v22 = vld [vmem:[%s0 + $0x28] sm:$0xff]
  %v23 = vld [vmem:[%s0 + $0x30] sm:$0xff]
  %v24 = vld [vmem:[%s0 + $0x38] sm:$0xff]
  %v25 = vld [vmem:[%s1] sm:$0x1]
  %v27 = vperm.slane %v25, 0
  %v29 = vmul.f32 %v17, %v27
  %v30 = vmul.f32 %v18, %v27
  %v31 = vmul.f32 %v19, %v27
  %v32 = vmul.f32 %v20, %v27
  %v33 = vmul.f32 %v21, %v27
  %v34 = vmul.f32 %v22, %v27
  %v35 = vmul.f32 %v23, %v27
  %v36 = vmul.f32 %v24, %v27
  %v37 = vld [vmem:[%s2] sm:$0x1]
  %v39 = vperm.slane %v37, 0
  %v41 = vadd.f32 %v29, %v39
  %v42 = vadd.f32 %v30, %v39
  %v43 = vadd.f32 %v31, %v39
  %v44 = vadd.f32 %v32, %v39
  %v45 = vadd.f32 %v33, %v39
  %v46 = vadd.f32 %v34, %v39
  %v47 = vadd.f32 %v35, %v39
  %v48 = vadd.f32 %v36, %v39
  %v49 = vld [vmem:[%s3] sm:$0xff]
  %v50 = vld [vmem:[%s3 + $0x8] sm:$0xff]
  %v51 = vld [vmem:[%s3 + $0x10] sm:$0xff]
  %v52 = vld [vmem:[%s3 + $0x18] sm:$0xff]
  %v53 = vld [vmem:[%s3 + $0x20] sm:$0xff]
  %v54 = vld [vmem:[%s3 + $0x28] sm:$0xff]
  %v55 = vld [vmem:[%s3 + $0x30] sm:$0xff]
  %v56 = vld [vmem:[%s3 + $0x38] sm:$0xff]
  %v57 = vadd.f32 %v41, %v49
  %v58 = vadd.f32 %v42, %v50
  %v59 = vadd.f32 %v43, %v51
  %v60 = vadd.f32 %v44, %v52
  %v61 = vadd.f32 %v45, %v53
  %v62 = vadd.f32 %v46, %v54
  %v63 = vadd.f32 %v47, %v55
  %v64 = vadd.f32 %v48, %v56
  %v65 = vmax.f32 %v57, 0.0
  %v66 = vmax.f32 %v58, 0.0
  %v67 = vmax.f32 %v59, 0.0
  %v68 = vmax.f32 %v60, 0.0
  %v69 = vmax.f32 %v61, 0.0
  %v70 = vmax.f32 %v62, 0.0
  %v71 = vmax.f32 %v63, 0.0
  %v72 = vmax.f32 %v64, 0.0
  %73 = vst [vmem:[%s4] sm:$0xff] %v65
  %74 = vst [vmem:[%s4 + $0x8] sm:$0xff] %v66
  %75 = vst [vmem:[%s4 + $0x10] sm:$0xff] %v67
  %76 = vst [vmem:[%s4 + $0x18] sm:$0xff] %v68
  %77 = vst [vmem:[%s4 + $0x20] sm:$0xff] %v69
  %78 = vst [vmem:[%s4 + $0x28] sm:$0xff] %v70
  %79 = vst [vmem:[%s4 + $0x30] sm:$0xff] %v71
  %80 = vst [vmem:[%s4 + $0x38] sm:$0xff] %v72
  // Predicated region
  $region18: #{bottleneck_forward.7} parent=0 // pred_check
    _
  $region19: #{bottleneck_forward.7} parent=0 // pred_check_branch
    %82 = sbr.rel (0) target = $region21
  $region20: #{bottleneck_forward.7} parent=0 // pred_region
    _
  $region21: #{bottleneck_forward.7} parent=0 // pred_fallthru
    _
  // Predicated region
  $region22: #{bottleneck_forward.7} parent=0 // pred_check
    _
  $region23: #{bottleneck_forward.7} parent=0 // pred_check_branch
    %84 = sbr.rel (0) target = $region25
  $region24: #{bottleneck_forward.7} parent=0 // pred_region
    _
  $region25: #{bottleneck_forward.7} parent=0 // pred_fallthru
    _

// kernel: bottleneck_forward.4
$region0: #{bottleneck_forward.4}
  #allocation0 [shape = 'u32[]', space=smem, size = 0x4, offset = 0x4, fixed_abs, tag = 'smem constant byte address 0x4 - core index']
  #allocation1 [shape = 'u32[72,128]{1,0:T(1,128)}', space=vmem, size = 0x9000, scoped, tag = 'internal scratch']
  %s0 = inlined_call_operand.hbm [shape: f32[512,16], index: 0, kind: input, shape index: {}]
  %s1 = inlined_call_operand.vmem [shape: f32[16,4], index: 1, kind: input, shape index: {}]
  %s2 = inlined_call_operand.vmem [shape: f32[512,4], index: 2, kind: output, shape index: {0}]
  %s3 = inlined_call_operand.vmem [shape: f32[8,4], index: 3, kind: output, shape index: {1}]
  %s4 = inlined_call_operand.vmem [shape: f32[8,4], index: 4, kind: output, shape index: {2}]
  %5 = xla_tuple %s2, %s3, %s4
  %s6 = sld [smem:[#allocation0]]
  $region38: #{bottleneck_forward.4} parent=0
    _
  %s8 = ssub.s32 1, %s6
  %s9 = scalar_select 0, %s8, %s6
  $region1: #{bottleneck_forward.4} parent=0
    #allocation2 [shape = 'u8[262144]{0}', space=vmem, size = 0x40000, scoped, tag = 'input window, operand 0, single buffered']
    #allocation3 [shape = 's32[1]{0}', space=sflag, size = 0x4, scoped, tag = 'scoped memory for bottleneck_forward.4']
    %10 = vsyncpa [#allocation3], 0
    // Predicated region
    $region2: #{bottleneck_forward.4} parent=1 // pred_check
      _
    $region3: #{bottleneck_forward.4} parent=1 // pred_check_branch
      %12 = sbr.rel (0) target = $region5
    $region4: #{bottleneck_forward.4} parent=1 // pred_region
      %14 = vsyncadd [#allocation3], 0
      %s15 = sshll.u32 %s0, 4
      %s16 = int_to_ptr.hbm [resolvable:$true] %s15
      %s17 = sshll.u32 [#allocation2], 4
      %s18 = int_to_ptr.vmem [resolvable:$true] %s17
      %23 = dma.hbm_to_vmem [thread:$0]  %s16, 8192, %s18, [#allocation3], 128, 128, 8
    $region5: #{bottleneck_forward.4} parent=1 // pred_fallthru
      _
    // Predicated region
    $region6: #{bottleneck_forward.4} parent=1 // pred_check
      _
    $region7: #{bottleneck_forward.4} parent=1 // pred_check_branch
      %25 = sbr.rel (0) target = $region9
    $region8: #{bottleneck_forward.4} parent=1 // pred_region
      _
    $region9: #{bottleneck_forward.4} parent=1 // pred_fallthru
      _
    // Predicated region
    $region10: #{bottleneck_forward.4} parent=1 // pred_check
      _
    $region11: #{bottleneck_forward.4} parent=1 // pred_check_branch
      %27 = sbr.rel (0) target = $region13
    $region12: #{bottleneck_forward.4} parent=1 // pred_region
      %29 = dma.done [#allocation3], 8192
    $region13: #{bottleneck_forward.4} parent=1 // pred_fallthru
      _
    %v30 = vld [vmem:[#allocation2] sm:$0xff]
    %v31 = vld [vmem:[#allocation2 + $0x8] sm:$0xff]
    %v32 = vld [vmem:[#allocation2 + $0x10] sm:$0xff]
    %v33 = vld [vmem:[#allocation2 + $0x18] sm:$0xff]
    %v34 = vld [vmem:[#allocation2 + $0x20] sm:$0xff]
    %v35 = vld [vmem:[#allocation2 + $0x28] sm:$0xff]
    %v36 = vld [vmem:[#allocation2 + $0x30] sm:$0xff]
    %v37 = vld [vmem:[#allocation2 + $0x38] sm:$0xff]
    %v38 = vld [vmem:[#allocation2 + $0x40] sm:$0xff]
    %v39 = vld [vmem:[#allocation2 + $0x48] sm:$0xff]
    %v40 = vld [vmem:[#allocation2 + $0x50] sm:$0xff]
    %v41 = vld [vmem:[#allocation2 + $0x58] sm:$0xff]
    %v42 = vld [vmem:[#allocation2 + $0x60] sm:$0xff]
    %v43 = vld [vmem:[#allocation2 + $0x68] sm:$0xff]
    %v44 = vld [vmem:[#allocation2 + $0x70] sm:$0xff]
    %v45 = vld [vmem:[#allocation2 + $0x78] sm:$0xff]
    %v46 = vld [vmem:[#allocation2 + $0x80] sm:$0xff]
    %v47 = vld [vmem:[#allocation2 + $0x88] sm:$0xff]
    %v48 = vld [vmem:[#allocation2 + $0x90] sm:$0xff]
    %v49 = vld [vmem:[#allocation2 + $0x98] sm:$0xff]
    %v50 = vld [vmem:[#allocation2 + $0xa0] sm:$0xff]
    %v51 = vld [vmem:[#allocation2 + $0xa8] sm:$0xff]
    %v52 = vld [vmem:[#allocation2 + $0xb0] sm:$0xff]
    %v53 = vld [vmem:[#allocation2 + $0xb8] sm:$0xff]
    %v54 = vld [vmem:[#allocation2 + $0xc0] sm:$0xff]
    %v55 = vld [vmem:[#allocation2 + $0xc8] sm:$0xff]
    %v56 = vld [vmem:[#allocation2 + $0xd0] sm:$0xff]
    %v57 = vld [vmem:[#allocation2 + $0xd8] sm:$0xff]
    %v58 = vld [vmem:[#allocation2 + $0xe0] sm:$0xff]
    %v59 = vld [vmem:[#allocation2 + $0xe8] sm:$0xff]
    %v60 = vld [vmem:[#allocation2 + $0xf0] sm:$0xff]
    %v61 = vld [vmem:[#allocation2 + $0xf8] sm:$0xff]
    %v62 = vld [vmem:[#allocation2 + $0x100] sm:$0xff]
    %v63 = vld [vmem:[#allocation2 + $0x108] sm:$0xff]
    %v64 = vld [vmem:[#allocation2 + $0x110] sm:$0xff]
    %v65 = vld [vmem:[#allocation2 + $0x118] sm:$0xff]
    %v66 = vld [vmem:[#allocation2 + $0x120] sm:$0xff]
    %v67 = vld [vmem:[#allocation2 + $0x128] sm:$0xff]
    %v68 = vld [vmem:[#allocation2 + $0x130] sm:$0xff]
    %v69 = vld [vmem:[#allocation2 + $0x138] sm:$0xff]
    %v70 = vld [vmem:[#allocation2 + $0x140] sm:$0xff]
    %v71 = vld [vmem:[#allocation2 + $0x148] sm:$0xff]
    %v72 = vld [vmem:[#allocation2 + $0x150] sm:$0xff]
    %v73 = vld [vmem:[#allocation2 + $0x158] sm:$0xff]
    %v74 = vld [vmem:[#allocation2 + $0x160] sm:$0xff]
    %v75 = vld [vmem:[#allocation2 + $0x168] sm:$0xff]
    %v76 = vld [vmem:[#allocation2 + $0x170] sm:$0xff]
    %v77 = vld [vmem:[#allocation2 + $0x178] sm:$0xff]
    %v78 = vld [vmem:[#allocation2 + $0x180] sm:$0xff]
    %v79 = vld [vmem:[#allocation2 + $0x188] sm:$0xff]
    %v80 = vld [vmem:[#allocation2 + $0x190] sm:$0xff]
    %v81 = vld [vmem:[#allocation2 + $0x198] sm:$0xff]
    %v82 = vld [vmem:[#allocation2 + $0x1a0] sm:$0xff]
    %v83 = vld [vmem:[#allocation2 + $0x1a8] sm:$0xff]
    %v84 = vld [vmem:[#allocation2 + $0x1b0] sm:$0xff]
    %v85 = vld [vmem:[#allocation2 + $0x1b8] sm:$0xff]
    %v86 = vld [vmem:[#allocation2 + $0x1c0] sm:$0xff]
    %v87 = vld [vmem:[#allocation2 + $0x1c8] sm:$0xff]
    %v88 = vld [vmem:[#allocation2 + $0x1d0] sm:$0xff]
    %v89 = vld [vmem:[#allocation2 + $0x1d8] sm:$0xff]
    %v90 = vld [vmem:[#allocation2 + $0x1e0] sm:$0xff]
    %v91 = vld [vmem:[#allocation2 + $0x1e8] sm:$0xff]
    %v92 = vld [vmem:[#allocation2 + $0x1f0] sm:$0xff]
    %v93 = vld [vmem:[#allocation2 + $0x1f8] sm:$0xff]
    %v94 = vld [vmem:[%s1] sm:$0xff]
    %v95 = vld [vmem:[%s1 + $0x8] sm:$0xff]
    %vm96 = vcmask 130048
    %v98 = vsel %vm96, %v30, 0
    %v101 = vsel %vm96, %v31, 0
    %v104 = vsel %vm96, %v32, 0
    %v107 = vsel %vm96, %v33, 0
    %v110 = vsel %vm96, %v34, 0
    %v113 = vsel %vm96, %v35, 0
    %v116 = vsel %vm96, %v36, 0
    %v119 = vsel %vm96, %v37, 0
    %v122 = vsel %vm96, %v38, 0
    %v125 = vsel %vm96, %v39, 0
    %v128 = vsel %vm96, %v40, 0
    %v131 = vsel %vm96, %v41, 0
    %v134 = vsel %vm96, %v42, 0
    %v137 = vsel %vm96, %v43, 0
    %v140 = vsel %vm96, %v44, 0
    %v143 = vsel %vm96, %v45, 0
    %v146 = vsel %vm96, %v46, 0
    %v149 = vsel %vm96, %v47, 0
    %v152 = vsel %vm96, %v48, 0
    %v155 = vsel %vm96, %v49, 0
    %v158 = vsel %vm96, %v50, 0
    %v161 = vsel %vm96, %v51, 0
    %v164 = vsel %vm96, %v52, 0
    %v167 = vsel %vm96, %v53, 0
    %v170 = vsel %vm96, %v54, 0
    %v173 = vsel %vm96, %v55, 0
    %v176 = vsel %vm96, %v56, 0
    %v179 = vsel %vm96, %v57, 0
    %v182 = vsel %vm96, %v58, 0
    %v185 = vsel %vm96, %v59, 0
    %v188 = vsel %vm96, %v60, 0
    %v191 = vsel %vm96, %v61, 0
    %v194 = vsel %vm96, %v62, 0
    %v197 = vsel %vm96, %v63, 0
    %v200 = vsel %vm96, %v64, 0
    %v203 = vsel %vm96, %v65, 0
    %v206 = vsel %vm96, %v66, 0
    %v209 = vsel %vm96, %v67, 0
    %v212 = vsel %vm96, %v68, 0
    %v215 = vsel %vm96, %v69, 0
    %v218 = vsel %vm96, %v70, 0
    %v221 = vsel %vm96, %v71, 0
    %v224 = vsel %vm96, %v72, 0
    %v227 = vsel %vm96, %v73, 0
    %v230 = vsel %vm96, %v74, 0
    %v233 = vsel %vm96, %v75, 0
    %v236 = vsel %vm96, %v76, 0
    %v239 = vsel %vm96, %v77, 0
    %v242 = vsel %vm96, %v78, 0
    %v245 = vsel %vm96, %v79, 0
    %v248 = vsel %vm96, %v80, 0
    %v251 = vsel %vm96, %v81, 0
    %v254 = vsel %vm96, %v82, 0
    %v257 = vsel %vm96, %v83, 0
    %v260 = vsel %vm96, %v84, 0
    %v263 = vsel %vm96, %v85, 0
    %v266 = vsel %vm96, %v86, 0
    %v269 = vsel %vm96, %v87, 0
    %v272 = vsel %vm96, %v88, 0
    %v275 = vsel %vm96, %v89, 0
    %v278 = vsel %vm96, %v90, 0
    %v281 = vsel %vm96, %v91, 0
    %v284 = vsel %vm96, %v92, 0
    %v287 = vsel %vm96, %v93, 0
    %289 = vmatpush.msra.mxu0 0.0
    %290 = vmatpush.msra.mxu0 0.0
    %291 = vmatpush.msra.mxu0 0.0
    %292 = vmatpush.msra.mxu0 0.0
    %293 = vmatpush.msra.mxu0 0.0
    %294 = vmatpush.msra.mxu0 0.0
    %295 = vmatpush.msra.mxu0 0.0
    %296 = vmatpush.msra.mxu0 0.0
    %297 = vmatpush.msra.mxu0 0.0
    %298 = vmatpush.msra.mxu0 0.0
    %299 = vmatpush.msra.mxu0 0.0
    %300 = vmatpush.msra.mxu0 0.0
    %301 = vmatpush.msra.mxu0 0.0
    %302 = vmatpush.msra.mxu0 0.0
    %303 = vmatpush.msra.mxu0 %v95
    %304 = vmatpush.msra.mxu0 %v94
    %305 = vmatmul.f32.gmra.mxu0 %v98
    %v306 = vpop.f32.mrf.mxu0
    %v307 = vadd.f32 0.0, %v306
    %308 = vmatmul.f32.gmra.mxu0 %v101
    %v309 = vpop.f32.mrf.mxu0
    %v310 = vadd.f32 0.0, %v309
    %311 = vmatmul.f32.gmra.mxu0 %v104
    %v312 = vpop.f32.mrf.mxu0
    %v313 = vadd.f32 0.0, %v312
    %314 = vmatmul.f32.gmra.mxu0 %v107
    %v315 = vpop.f32.mrf.mxu0
    %v316 = vadd.f32 0.0, %v315
    %317 = vmatmul.f32.gmra.mxu0 %v110
    %v318 = vpop.f32.mrf.mxu0
    %v319 = vadd.f32 0.0, %v318
    %320 = vmatmul.f32.gmra.mxu0 %v113
    %v321 = vpop.f32.mrf.mxu0
    %v322 = vadd.f32 0.0, %v321
    %323 = vmatmul.f32.gmra.mxu0 %v116
    %v324 = vpop.f32.mrf.mxu0
    %v325 = vadd.f32 0.0, %v324
    %326 = vmatmul.f32.gmra.mxu0 %v119
    %v327 = vpop.f32.mrf.mxu0
    %v328 = vadd.f32 0.0, %v327
    %329 = vmatmul.f32.gmra.mxu0 %v122
    %v330 = vpop.f32.mrf.mxu0
    %v331 = vadd.f32 0.0, %v330
    %332 = vmatmul.f32.gmra.mxu0 %v125
    %v333 = vpop.f32.mrf.mxu0
    %v334 = vadd.f32 0.0, %v333
    %335 = vmatmul.f32.gmra.mxu0 %v128
    %v336 = vpop.f32.mrf.mxu0
    %v337 = vadd.f32 0.0, %v336
    %338 = vmatmul.f32.gmra.mxu0 %v131
    %v339 = vpop.f32.mrf.mxu0
    %v340 = vadd.f32 0.0, %v339
    %341 = vmatmul.f32.gmra.mxu0 %v134
    %v342 = vpop.f32.mrf.mxu0
    %v343 = vadd.f32 0.0, %v342
    %344 = vmatmul.f32.gmra.mxu0 %v137
    %v345 = vpop.f32.mrf.mxu0
    %v346 = vadd.f32 0.0, %v345
    %347 = vmatmul.f32.gmra.mxu0 %v140
    %v348 = vpop.f32.mrf.mxu0
    %v349 = vadd.f32 0.0, %v348
    %350 = vmatmul.f32.gmra.mxu0 %v143
    %v351 = vpop.f32.mrf.mxu0
    %v352 = vadd.f32 0.0, %v351
    %353 = vmatmul.f32.gmra.mxu0 %v146
    %v354 = vpop.f32.mrf.mxu0
    %v355 = vadd.f32 0.0, %v354
    %356 = vmatmul.f32.gmra.mxu0 %v149
    %v357 = vpop.f32.mrf.mxu0
    %v358 = vadd.f32 0.0, %v357
    %359 = vmatmul.f32.gmra.mxu0 %v152
    %v360 = vpop.f32.mrf.mxu0
    %v361 = vadd.f32 0.0, %v360
    %362 = vmatmul.f32.gmra.mxu0 %v155
    %v363 = vpop.f32.mrf.mxu0
    %v364 = vadd.f32 0.0, %v363
    %365 = vmatmul.f32.gmra.mxu0 %v158
    %v366 = vpop.f32.mrf.mxu0
    %v367 = vadd.f32 0.0, %v366
    %368 = vmatmul.f32.gmra.mxu0 %v161
    %v369 = vpop.f32.mrf.mxu0
    %v370 = vadd.f32 0.0, %v369
    %371 = vmatmul.f32.gmra.mxu0 %v164
    %v372 = vpop.f32.mrf.mxu0
    %v373 = vadd.f32 0.0, %v372
    %374 = vmatmul.f32.gmra.mxu0 %v167
    %v375 = vpop.f32.mrf.mxu0
    %v376 = vadd.f32 0.0, %v375
    %377 = vmatmul.f32.gmra.mxu0 %v170
    %v378 = vpop.f32.mrf.mxu0
    %v379 = vadd.f32 0.0, %v378
    %380 = vmatmul.f32.gmra.mxu0 %v173
    %v381 = vpop.f32.mrf.mxu0
    %v382 = vadd.f32 0.0, %v381
    %383 = vmatmul.f32.gmra.mxu0 %v176
    %v384 = vpop.f32.mrf.mxu0
    %v385 = vadd.f32 0.0, %v384
    %386 = vmatmul.f32.gmra.mxu0 %v179
    %v387 = vpop.f32.mrf.mxu0
    %v388 = vadd.f32 0.0, %v387
    %389 = vmatmul.f32.gmra.mxu0 %v182
    %v390 = vpop.f32.mrf.mxu0
    %v391 = vadd.f32 0.0, %v390
    %392 = vmatmul.f32.gmra.mxu0 %v185
    %v393 = vpop.f32.mrf.mxu0
    %v394 = vadd.f32 0.0, %v393
    %395 = vmatmul.f32.gmra.mxu0 %v188
    %v396 = vpop.f32.mrf.mxu0
    %v397 = vadd.f32 0.0, %v396
    %398 = vmatmul.f32.gmra.mxu0 %v191
    %v399 = vpop.f32.mrf.mxu0
    %v400 = vadd.f32 0.0, %v399
    %401 = vmatmul.f32.gmra.mxu0 %v194
    %v402 = vpop.f32.mrf.mxu0
    %v403 = vadd.f32 0.0, %v402
    %404 = vmatmul.f32.gmra.mxu0 %v197
    %v405 = vpop.f32.mrf.mxu0
    %v406 = vadd.f32 0.0, %v405
    %407 = vmatmul.f32.gmra.mxu0 %v200
    %v408 = vpop.f32.mrf.mxu0
    %v409 = vadd.f32 0.0, %v408
    %410 = vmatmul.f32.gmra.mxu0 %v203
    %v411 = vpop.f32.mrf.mxu0
    %v412 = vadd.f32 0.0, %v411
    %413 = vmatmul.f32.gmra.mxu0 %v206
    %v414 = vpop.f32.mrf.mxu0
    %v415 = vadd.f32 0.0, %v414
    %416 = vmatmul.f32.gmra.mxu0 %v209
    %v417 = vpop.f32.mrf.mxu0
    %v418 = vadd.f32 0.0, %v417
    %419 = vmatmul.f32.gmra.mxu0 %v212
    %v420 = vpop.f32.mrf.mxu0
    %v421 = vadd.f32 0.0, %v420
    %422 = vmatmul.f32.gmra.mxu0 %v215
    %v423 = vpop.f32.mrf.mxu0
    %v424 = vadd.f32 0.0, %v423
    %425 = vmatmul.f32.gmra.mxu0 %v218
    %v426 = vpop.f32.mrf.mxu0
    %v427 = vadd.f32 0.0, %v426
    %428 = vmatmul.f32.gmra.mxu0 %v221
    %v429 = vpop.f32.mrf.mxu0
    %v430 = vadd.f32 0.0, %v429
    %431 = vmatmul.f32.gmra.mxu0 %v224
    %v432 = vpop.f32.mrf.mxu0
    %v433 = vadd.f32 0.0, %v432
    %434 = vmatmul.f32.gmra.mxu0 %v227
    %v435 = vpop.f32.mrf.mxu0
    %v436 = vadd.f32 0.0, %v435
    %437 = vmatmul.f32.gmra.mxu0 %v230
    %v438 = vpop.f32.mrf.mxu0
    %v439 = vadd.f32 0.0, %v438
    %440 = vmatmul.f32.gmra.mxu0 %v233
    %v441 = vpop.f32.mrf.mxu0
    %v442 = vadd.f32 0.0, %v441
    %443 = vmatmul.f32.gmra.mxu0 %v236
    %v444 = vpop.f32.mrf.mxu0
    %v445 = vadd.f32 0.0, %v444
    %446 = vmatmul.f32.gmra.mxu0 %v239
    %v447 = vpop.f32.mrf.mxu0
    %v448 = vadd.f32 0.0, %v447
    %449 = vmatmul.f32.gmra.mxu0 %v242
    %v450 = vpop.f32.mrf.mxu0
    %v451 = vadd.f32 0.0, %v450
    %452 = vmatmul.f32.gmra.mxu0 %v245
    %v453 = vpop.f32.mrf.mxu0
    %v454 = vadd.f32 0.0, %v453
    %455 = vmatmul.f32.gmra.mxu0 %v248
    %v456 = vpop.f32.mrf.mxu0
    %v457 = vadd.f32 0.0, %v456
    %458 = vmatmul.f32.gmra.mxu0 %v251
    %v459 = vpop.f32.mrf.mxu0
    %v460 = vadd.f32 0.0, %v459
    %461 = vmatmul.f32.gmra.mxu0 %v254
    %v462 = vpop.f32.mrf.mxu0
    %v463 = vadd.f32 0.0, %v462
    %464 = vmatmul.f32.gmra.mxu0 %v257
    %v465 = vpop.f32.mrf.mxu0
    %v466 = vadd.f32 0.0, %v465
    %467 = vmatmul.f32.gmra.mxu0 %v260
    %v468 = vpop.f32.mrf.mxu0
    %v469 = vadd.f32 0.0, %v468
    %470 = vmatmul.f32.gmra.mxu0 %v263
    %v471 = vpop.f32.mrf.mxu0
    %v472 = vadd.f32 0.0, %v471
    %473 = vmatmul.f32.gmra.mxu0 %v266
    %v474 = vpop.f32.mrf.mxu0
    %v475 = vadd.f32 0.0, %v474
    %476 = vmatmul.f32.gmra.mxu0 %v269
    %v477 = vpop.f32.mrf.mxu0
    %v478 = vadd.f32 0.0, %v477
    %479 = vmatmul.f32.gmra.mxu0 %v272
    %v480 = vpop.f32.mrf.mxu0
    %v481 = vadd.f32 0.0, %v480
    %482 = vmatmul.f32.gmra.mxu0 %v275
    %v483 = vpop.f32.mrf.mxu0
    %v484 = vadd.f32 0.0, %v483
    %485 = vmatmul.f32.gmra.mxu0 %v278
    %v486 = vpop.f32.mrf.mxu0
    %v487 = vadd.f32 0.0, %v486
    %488 = vmatmul.f32.gmra.mxu0 %v281
    %v489 = vpop.f32.mrf.mxu0
    %v490 = vadd.f32 0.0, %v489
    %491 = vmatmul.f32.gmra.mxu0 %v284
    %v492 = vpop.f32.mrf.mxu0
    %v493 = vadd.f32 0.0, %v492
    %494 = vmatmul.f32.gmra.mxu0 %v287
    %v495 = vpop.f32.mrf.mxu0
    %v496 = vadd.f32 0.0, %v495
    %497 = vdwg.mxu0
    %vm498 = vcmask 31744
    %499 = vst.msk [vmem:[%s2] sm:$0xff] %vm498, %v307
    %500 = vst.msk [vmem:[%s2 + $0x8] sm:$0xff] %vm498, %v310
    %501 = vst.msk [vmem:[%s2 + $0x10] sm:$0xff] %vm498, %v313
    %502 = vst.msk [vmem:[%s2 + $0x18] sm:$0xff] %vm498, %v316
    %503 = vst.msk [vmem:[%s2 + $0x20] sm:$0xff] %vm498, %v319
    %504 = vst.msk [vmem:[%s2 + $0x28] sm:$0xff] %vm498, %v322
    %505 = vst.msk [vmem:[%s2 + $0x30] sm:$0xff] %vm498, %v325
    %506 = vst.msk [vmem:[%s2 + $0x38] sm:$0xff] %vm498, %v328
    %507 = vst.msk [vmem:[%s2 + $0x40] sm:$0xff] %vm498, %v331
    %508 = vst.msk [vmem:[%s2 + $0x48] sm:$0xff] %vm498, %v334
    %509 = vst.msk [vmem:[%s2 + $0x50] sm:$0xff] %vm498, %v337
    %510 = vst.msk [vmem:[%s2 + $0x58] sm:$0xff] %vm498, %v340
    %511 = vst.msk [vmem:[%s2 + $0x60] sm:$0xff] %vm498, %v343
    %512 = vst.msk [vmem:[%s2 + $0x68] sm:$0xff] %vm498, %v346
    %513 = vst.msk [vmem:[%s2 + $0x70] sm:$0xff] %vm498, %v349
    %514 = vst.msk [vmem:[%s2 + $0x78] sm:$0xff] %vm498, %v352
    %515 = vst.msk [vmem:[%s2 + $0x80] sm:$0xff] %vm498, %v355
    %516 = vst.msk [vmem:[%s2 + $0x88] sm:$0xff] %vm498, %v358
    %517 = vst.msk [vmem:[%s2 + $0x90] sm:$0xff] %vm498, %v361
    %518 = vst.msk [vmem:[%s2 + $0x98] sm:$0xff] %vm498, %v364
    %519 = vst.msk [vmem:[%s2 + $0xa0] sm:$0xff] %vm498, %v367
    %520 = vst.msk [vmem:[%s2 + $0xa8] sm:$0xff] %vm498, %v370
    %521 = vst.msk [vmem:[%s2 + $0xb0] sm:$0xff] %vm498, %v373
    %522 = vst.msk [vmem:[%s2 + $0xb8] sm:$0xff] %vm498, %v376
    %523 = vst.msk [vmem:[%s2 + $0xc0] sm:$0xff] %vm498, %v379
    %524 = vst.msk [vmem:[%s2 + $0xc8] sm:$0xff] %vm498, %v382
    %525 = vst.msk [vmem:[%s2 + $0xd0] sm:$0xff] %vm498, %v385
    %526 = vst.msk [vmem:[%s2 + $0xd8] sm:$0xff] %vm498, %v388
    %527 = vst.msk [vmem:[%s2 + $0xe0] sm:$0xff] %vm498, %v391
    %528 = vst.msk [vmem:[%s2 + $0xe8] sm:$0xff] %vm498, %v394
    %529 = vst.msk [vmem:[%s2 + $0xf0] sm:$0xff] %vm498, %v397
    %530 = vst.msk [vmem:[%s2 + $0xf8] sm:$0xff] %vm498, %v400
    %531 = vst.msk [vmem:[%s2 + $0x100] sm:$0xff] %vm498, %v403
    %532 = vst.msk [vmem:[%s2 + $0x108] sm:$0xff] %vm498, %v406
    %533 = vst.msk [vmem:[%s2 + $0x110] sm:$0xff] %vm498, %v409
    %534 = vst.msk [vmem:[%s2 + $0x118] sm:$0xff] %vm498, %v412
    %535 = vst.msk [vmem:[%s2 + $0x120] sm:$0xff] %vm498, %v415
    %536 = vst.msk [vmem:[%s2 + $0x128] sm:$0xff] %vm498, %v418
    %537 = vst.msk [vmem:[%s2 + $0x130] sm:$0xff] %vm498, %v421
    %538 = vst.msk [vmem:[%s2 + $0x138] sm:$0xff] %vm498, %v424
    %539 = vst.msk [vmem:[%s2 + $0x140] sm:$0xff] %vm498, %v427
    %540 = vst.msk [vmem:[%s2 + $0x148] sm:$0xff] %vm498, %v430
    %541 = vst.msk [vmem:[%s2 + $0x150] sm:$0xff] %vm498, %v433
    %542 = vst.msk [vmem:[%s2 + $0x158] sm:$0xff] %vm498, %v436
    %543 = vst.msk [vmem:[%s2 + $0x160] sm:$0xff] %vm498, %v439
    %544 = vst.msk [vmem:[%s2 + $0x168] sm:$0xff] %vm498, %v442
    %545 = vst.msk [vmem:[%s2 + $0x170] sm:$0xff] %vm498, %v445
    %546 = vst.msk [vmem:[%s2 + $0x178] sm:$0xff] %vm498, %v448
    %547 = vst.msk [vmem:[%s2 + $0x180] sm:$0xff] %vm498, %v451
    %548 = vst.msk [vmem:[%s2 + $0x188] sm:$0xff] %vm498, %v454
    %549 = vst.msk [vmem:[%s2 + $0x190] sm:$0xff] %vm498, %v457
    %550 = vst.msk [vmem:[%s2 + $0x198] sm:$0xff] %vm498, %v460
    %551 = vst.msk [vmem:[%s2 + $0x1a0] sm:$0xff] %vm498, %v463
    %552 = vst.msk [vmem:[%s2 + $0x1a8] sm:$0xff] %vm498, %v466
    %553 = vst.msk [vmem:[%s2 + $0x1b0] sm:$0xff] %vm498, %v469
    %554 = vst.msk [vmem:[%s2 + $0x1b8] sm:$0xff] %vm498, %v472
    %555 = vst.msk [vmem:[%s2 + $0x1c0] sm:$0xff] %vm498, %v475
    %556 = vst.msk [vmem:[%s2 + $0x1c8] sm:$0xff] %vm498, %v478
    %557 = vst.msk [vmem:[%s2 + $0x1d0] sm:$0xff] %vm498, %v481
    %558 = vst.msk [vmem:[%s2 + $0x1d8] sm:$0xff] %vm498, %v484
    %559 = vst.msk [vmem:[%s2 + $0x1e0] sm:$0xff] %vm498, %v487
    %560 = vst.msk [vmem:[%s2 + $0x1e8] sm:$0xff] %vm498, %v490
    %561 = vst.msk [vmem:[%s2 + $0x1f0] sm:$0xff] %vm498, %v493
    %562 = vst.msk [vmem:[%s2 + $0x1f8] sm:$0xff] %vm498, %v496
    %v563 = vsel %vm498, %v307, 0.0
    %v564 = vsel %vm498, %v310, 0.0
    %v565 = vadd.f32 %v563, %v564
    %v566 = vsel %vm498, %v313, 0.0
    %v567 = vadd.f32 %v565, %v566
    %v568 = vsel %vm498, %v316, 0.0
    %v569 = vadd.f32 %v567, %v568
    %v570 = vsel %vm498, %v319, 0.0
    %v571 = vadd.f32 %v569, %v570
    %v572 = vsel %vm498, %v322, 0.0
    %v573 = vadd.f32 %v571, %v572
    %v574 = vsel %vm498, %v325, 0.0
    %v575 = vadd.f32 %v573, %v574
    %v576 = vsel %vm498, %v328, 0.0
    %v577 = vadd.f32 %v575, %v576
    %v578 = vsel %vm498, %v331, 0.0
    %v579 = vadd.f32 %v577, %v578
    %v580 = vsel %vm498, %v334, 0.0
    %v581 = vadd.f32 %v579, %v580
    %v582 = vsel %vm498, %v337, 0.0
    %v583 = vadd.f32 %v581, %v582
    %v584 = vsel %vm498, %v340, 0.0
    %v585 = vadd.f32 %v583, %v584
    %v586 = vsel %vm498, %v343, 0.0
    %v587 = vadd.f32 %v585, %v586
    %v588 = vsel %vm498, %v346, 0.0
    %v589 = vadd.f32 %v587, %v588
    %v590 = vsel %vm498, %v349, 0.0
    %v591 = vadd.f32 %v589, %v590
    %v592 = vsel %vm498, %v352, 0.0
    %v593 = vadd.f32 %v591, %v592
    %v594 = vsel %vm498, %v355, 0.0
    %v595 = vadd.f32 %v593, %v594
    %v596 = vsel %vm498, %v358, 0.0
    %v597 = vadd.f32 %v595, %v596
    %v598 = vsel %vm498, %v361, 0.0
    %v599 = vadd.f32 %v597, %v598
    %v600 = vsel %vm498, %v364, 0.0
    %v601 = vadd.f32 %v599, %v600
    %v602 = vsel %vm498, %v367, 0.0
    %v603 = vadd.f32 %v601, %v602
    %v604 = vsel %vm498, %v370, 0.0
    %v605 = vadd.f32 %v603, %v604
    %v606 = vsel %vm498, %v373, 0.0
    %v607 = vadd.f32 %v605, %v606
    %v608 = vsel %vm498, %v376, 0.0
    %v609 = vadd.f32 %v607, %v608
    %v610 = vsel %vm498, %v379, 0.0
    %v611 = vadd.f32 %v609, %v610
    %v612 = vsel %vm498, %v382, 0.0
    %v613 = vadd.f32 %v611, %v612
    %v614 = vsel %vm498, %v385, 0.0
    %v615 = vadd.f32 %v613, %v614
    %v616 = vsel %vm498, %v388, 0.0
    %v617 = vadd.f32 %v615, %v616
    %v618 = vsel %vm498, %v391, 0.0
    %v619 = vadd.f32 %v617, %v618
    %v620 = vsel %vm498, %v394, 0.0
    %v621 = vadd.f32 %v619, %v620
    %v622 = vsel %vm498, %v397, 0.0
    %v623 = vadd.f32 %v621, %v622
    %v624 = vsel %vm498, %v400, 0.0
    %v625 = vadd.f32 %v623, %v624
    %v626 = vsel %vm498, %v403, 0.0
    %v627 = vadd.f32 %v625, %v626
    %v628 = vsel %vm498, %v406, 0.0
    %v629 = vadd.f32 %v627, %v628
    %v630 = vsel %vm498, %v409, 0.0
    %v631 = vadd.f32 %v629, %v630
    %v632 = vsel %vm498, %v412, 0.0
    %v633 = vadd.f32 %v631, %v632
    %v634 = vsel %vm498, %v415, 0.0
    %v635 = vadd.f32 %v633, %v634
    %v636 = vsel %vm498, %v418, 0.0
    %v637 = vadd.f32 %v635, %v636
    %v638 = vsel %vm498, %v421, 0.0
    %v639 = vadd.f32 %v637, %v638
    %v640 = vsel %vm498, %v424, 0.0
    %v641 = vadd.f32 %v639, %v640
    %v642 = vsel %vm498, %v427, 0.0
    %v643 = vadd.f32 %v641, %v642
    %v644 = vsel %vm498, %v430, 0.0
    %v645 = vadd.f32 %v643, %v644
    %v646 = vsel %vm498, %v433, 0.0
    %v647 = vadd.f32 %v645, %v646
    %v648 = vsel %vm498, %v436, 0.0
    %v649 = vadd.f32 %v647, %v648
    %v650 = vsel %vm498, %v439, 0.0
    %v651 = vadd.f32 %v649, %v650
    %v652 = vsel %vm498, %v442, 0.0
    %v653 = vadd.f32 %v651, %v652
    %v654 = vsel %vm498, %v445, 0.0
    %v655 = vadd.f32 %v653, %v654
    %v656 = vsel %vm498, %v448, 0.0
    %v657 = vadd.f32 %v655, %v656
    %v658 = vsel %vm498, %v451, 0.0
    %v659 = vadd.f32 %v657, %v658
    %v660 = vsel %vm498, %v454, 0.0
    %v661 = vadd.f32 %v659, %v660
    %v662 = vsel %vm498, %v457, 0.0
    %v663 = vadd.f32 %v661, %v662
    %v664 = vsel %vm498, %v460, 0.0
    %v665 = vadd.f32 %v663, %v664
    %v666 = vsel %vm498, %v463, 0.0
    %v667 = vadd.f32 %v665, %v666
    %v668 = vsel %vm498, %v466, 0.0
    %v669 = vadd.f32 %v667, %v668
    %v670 = vsel %vm498, %v469, 0.0
    %v671 = vadd.f32 %v669, %v670
    %v672 = vsel %vm498, %v472, 0.0
    %v673 = vadd.f32 %v671, %v672
    %v674 = vsel %vm498, %v475, 0.0
    %v675 = vadd.f32 %v673, %v674
    %v676 = vsel %vm498, %v478, 0.0
    %v677 = vadd.f32 %v675, %v676
    %v678 = vsel %vm498, %v481, 0.0
    %v679 = vadd.f32 %v677, %v678
    %v680 = vsel %vm498, %v484, 0.0
    %v681 = vadd.f32 %v679, %v680
    %v682 = vsel %vm498, %v487, 0.0
    %v683 = vadd.f32 %v681, %v682
    %v684 = vsel %vm498, %v490, 0.0
    %v685 = vadd.f32 %v683, %v684
    %v686 = vsel %vm498, %v493, 0.0
    %v687 = vadd.f32 %v685, %v686
    %v688 = vsel %vm498, %v496, 0.0
    %v689 = vadd.f32 %v687, %v688
    %v690 = vrot.slane %v689, 4
    %v691 = vadd.f32 %v689, %v690
    %v692 = vrot.slane %v691, 2
    %v693 = vadd.f32 %v691, %v692
    %v694 = vrot.slane %v693, 1
    %v695 = vadd.f32 %v693, %v694
    %v696 = vlaneseq
    %v697 = vshrl.u32 %v696, 7
    %vm698 = vcmp.eq.s32.totalorder %v697, 0
    %v699 = vsel %vm698, %v695, 0.0
    %700 = vst.msk [vmem:[%s3] sm:$0xff] %vm498, %v699
    %v701 = vmul.f32 %v307, %v307
    %v702 = vmul.f32 %v310, %v310
    %v703 = vmul.f32 %v313, %v313
    %v704 = vmul.f32 %v316, %v316
    %v705 = vmul.f32 %v319, %v319
    %v706 = vmul.f32 %v322, %v322
    %v707 = vmul.f32 %v325, %v325
    %v708 = vmul.f32 %v328, %v328
    %v709 = vmul.f32 %v331, %v331
    %v710 = vmul.f32 %v334, %v334
    %v711 = vmul.f32 %v337, %v337
    %v712 = vmul.f32 %v340, %v340
    %v713 = vmul.f32 %v343, %v343
    %v714 = vmul.f32 %v346, %v346
    %v715 = vmul.f32 %v349, %v349
    %v716 = vmul.f32 %v352, %v352
    %v717 = vmul.f32 %v355, %v355
    %v718 = vmul.f32 %v358, %v358
    %v719 = vmul.f32 %v361, %v361
    %v720 = vmul.f32 %v364, %v364
    %v721 = vmul.f32 %v367, %v367
    %v722 = vmul.f32 %v370, %v370
    %v723 = vmul.f32 %v373, %v373
    %v724 = vmul.f32 %v376, %v376
    %v725 = vmul.f32 %v379, %v379
    %v726 = vmul.f32 %v382, %v382
    %v727 = vmul.f32 %v385, %v385
    %v728 = vmul.f32 %v388, %v388
    %v729 = vmul.f32 %v391, %v391
    %v730 = vmul.f32 %v394, %v394
    %v731 = vmul.f32 %v397, %v397
    %v732 = vmul.f32 %v400, %v400
    %v733 = vmul.f32 %v403, %v403
    %v734 = vmul.f32 %v406, %v406
    %v735 = vmul.f32 %v409, %v409
    %v736 = vmul.f32 %v412, %v412
    %v737 = vmul.f32 %v415, %v415
    %v738 = vmul.f32 %v418, %v418
    %v739 = vmul.f32 %v421, %v421
    %v740 = vmul.f32 %v424, %v424
    %v741 = vmul.f32 %v427, %v427
    %v742 = vmul.f32 %v430, %v430
    %v743 = vmul.f32 %v433, %v433
    %v744 = vmul.f32 %v436, %v436
    %v745 = vmul.f32 %v439, %v439
    %v746 = vmul.f32 %v442, %v442
    %v747 = vmul.f32 %v445, %v445
    %v748 = vmul.f32 %v448, %v448
    %v749 = vmul.f32 %v451, %v451
    %v750 = vmul.f32 %v454, %v454
    %v751 = vmul.f32 %v457, %v457
    %v752 = vmul.f32 %v460, %v460
    %v753 = vmul.f32 %v463, %v463
    %v754 = vmul.f32 %v466, %v466
    %v755 = vmul.f32 %v469, %v469
    %v756 = vmul.f32 %v472, %v472
    %v757 = vmul.f32 %v475, %v475
    %v758 = vmul.f32 %v478, %v478
    %v759 = vmul.f32 %v481, %v481
    %v760 = vmul.f32 %v484, %v484
    %v761 = vmul.f32 %v487, %v487
    %v762 = vmul.f32 %v490, %v490
    %v763 = vmul.f32 %v493, %v493
    %v764 = vmul.f32 %v496, %v496
    %v765 = vsel %vm498, %v701, 0.0
    %v766 = vsel %vm498, %v702, 0.0
    %v767 = vadd.f32 %v765, %v766
    %v768 = vsel %vm498, %v703, 0.0
    %v769 = vadd.f32 %v767, %v768
    %v770 = vsel %vm498, %v704, 0.0
    %v771 = vadd.f32 %v769, %v770
    %v772 = vsel %vm498, %v705, 0.0
    %v773 = vadd.f32 %v771, %v772
    %v774 = vsel %vm498, %v706, 0.0
    %v775 = vadd.f32 %v773, %v774
    %v776 = vsel %vm498, %v707, 0.0
    %v777 = vadd.f32 %v775, %v776
    %v778 = vsel %vm498, %v708, 0.0
    %v779 = vadd.f32 %v777, %v778
    %v780 = vsel %vm498, %v709, 0.0
    %v781 = vadd.f32 %v779, %v780
    %v782 = vsel %vm498, %v710, 0.0
    %v783 = vadd.f32 %v781, %v782
    %v784 = vsel %vm498, %v711, 0.0
    %v785 = vadd.f32 %v783, %v784
    %v786 = vsel %vm498, %v712, 0.0
    %v787 = vadd.f32 %v785, %v786
    %v788 = vsel %vm498, %v713, 0.0
    %v789 = vadd.f32 %v787, %v788
    %v790 = vsel %vm498, %v714, 0.0
    %v791 = vadd.f32 %v789, %v790
    %v792 = vsel %vm498, %v715, 0.0
    %v793 = vadd.f32 %v791, %v792
    %v794 = vsel %vm498, %v716, 0.0
    %v795 = vadd.f32 %v793, %v794
    %v796 = vsel %vm498, %v717, 0.0
    %v797 = vadd.f32 %v795, %v796
    %v798 = vsel %vm498, %v718, 0.0
    %v799 = vadd.f32 %v797, %v798
    %v800 = vsel %vm498, %v719, 0.0
    %v801 = vadd.f32 %v799, %v800
    %v802 = vsel %vm498, %v720, 0.0
    %v803 = vadd.f32 %v801, %v802
    %v804 = vsel %vm498, %v721, 0.0
    %v805 = vadd.f32 %v803, %v804
    %v806 = vsel %vm498, %v722, 0.0
    %v807 = vadd.f32 %v805, %v806
    %v808 = vsel %vm498, %v723, 0.0
    %v809 = vadd.f32 %v807, %v808
    %v810 = vsel %vm498, %v724, 0.0
    %v811 = vadd.f32 %v809, %v810
    %v812 = vsel %vm498, %v725, 0.0
    %v813 = vadd.f32 %v811, %v812
    %v814 = vsel %vm498, %v726, 0.0
    %v815 = vadd.f32 %v813, %v814
    %v816 = vsel %vm498, %v727, 0.0
    %v817 = vadd.f32 %v815, %v816
    %v818 = vsel %vm498, %v728, 0.0
    %v819 = vadd.f32 %v817, %v818
    %v820 = vsel %vm498, %v729, 0.0
    %v821 = vadd.f32 %v819, %v820
    %v822 = vsel %vm498, %v730, 0.0
    %v823 = vadd.f32 %v821, %v822
    %v824 = vsel %vm498, %v731, 0.0
    %v825 = vadd.f32 %v823, %v824
    %v826 = vsel %vm498, %v732, 0.0
    %v827 = vadd.f32 %v825, %v826
    %v828 = vsel %vm498, %v733, 0.0
    %v829 = vadd.f32 %v827, %v828
    %v830 = vsel %vm498, %v734, 0.0
    %v831 = vadd.f32 %v829, %v830
    %v832 = vsel %vm498, %v735, 0.0
    %v833 = vadd.f32 %v831, %v832
    %v834 = vsel %vm498, %v736, 0.0
    %v835 = vadd.f32 %v833, %v834
    %v836 = vsel %vm498, %v737, 0.0
    %v837 = vadd.f32 %v835, %v836
    %v838 = vsel %vm498, %v738, 0.0
    %v839 = vadd.f32 %v837, %v838
    %v840 = vsel %vm498, %v739, 0.0
    %v841 = vadd.f32 %v839, %v840
    %v842 = vsel %vm498, %v740, 0.0
    %v843 = vadd.f32 %v841, %v842
    %v844 = vsel %vm498, %v741, 0.0
    %v845 = vadd.f32 %v843, %v844
    %v846 = vsel %vm498, %v742, 0.0
    %v847 = vadd.f32 %v845, %v846
    %v848 = vsel %vm498, %v743, 0.0
    %v849 = vadd.f32 %v847, %v848
    %v850 = vsel %vm498, %v744, 0.0
    %v851 = vadd.f32 %v849, %v850
    %v852 = vsel %vm498, %v745, 0.0
    %v853 = vadd.f32 %v851, %v852
    %v854 = vsel %vm498, %v746, 0.0
    %v855 = vadd.f32 %v853, %v854
    %v856 = vsel %vm498, %v747, 0.0
    %v857 = vadd.f32 %v855, %v856
    %v858 = vsel %vm498, %v748, 0.0
    %v859 = vadd.f32 %v857, %v858
    %v860 = vsel %vm498, %v749, 0.0
    %v861 = vadd.f32 %v859, %v860
    %v862 = vsel %vm498, %v750, 0.0
    %v863 = vadd.f32 %v861, %v862
    %v864 = vsel %vm498, %v751, 0.0
    %v865 = vadd.f32 %v863, %v864
    %v866 = vsel %vm498, %v752, 0.0
    %v867 = vadd.f32 %v865, %v866
    %v868 = vsel %vm498, %v753, 0.0
    %v869 = vadd.f32 %v867, %v868
    %v870 = vsel %vm498, %v754, 0.0
    %v871 = vadd.f32 %v869, %v870
    %v872 = vsel %vm498, %v755, 0.0
    %v873 = vadd.f32 %v871, %v872
    %v874 = vsel %vm498, %v756, 0.0
    %v875 = vadd.f32 %v873, %v874
    %v876 = vsel %vm498, %v757, 0.0
    %v877 = vadd.f32 %v875, %v876
    %v878 = vsel %vm498, %v758, 0.0
    %v879 = vadd.f32 %v877, %v878
    %v880 = vsel %vm498, %v759, 0.0
    %v881 = vadd.f32 %v879, %v880
    %v882 = vsel %vm498, %v760, 0.0
    %v883 = vadd.f32 %v881, %v882
    %v884 = vsel %vm498, %v761, 0.0
    %v885 = vadd.f32 %v883, %v884
    %v886 = vsel %vm498, %v762, 0.0
    %v887 = vadd.f32 %v885, %v886
    %v888 = vsel %vm498, %v763, 0.0
    %v889 = vadd.f32 %v887, %v888
    %v890 = vsel %vm498, %v764, 0.0
    %v891 = vadd.f32 %v889, %v890
    %v892 = vrot.slane %v891, 4
    %v893 = vadd.f32 %v891, %v892
    %v894 = vrot.slane %v893, 2
    %v895 = vadd.f32 %v893, %v894
    %v896 = vrot.slane %v895, 1
    %v897 = vadd.f32 %v895, %v896
    %v898 = vsel %vm698, %v897, 0.0
    %899 = vst.msk [vmem:[%s4] sm:$0xff] %vm498, %v898
    // Predicated region
    $region14: #{bottleneck_forward.4} parent=1 // pred_check
      _
    $region15: #{bottleneck_forward.4} parent=1 // pred_check_branch
      %901 = sbr.rel (0) target = $region17
    $region16: #{bottleneck_forward.4} parent=1 // pred_region
      _
    $region17: #{bottleneck_forward.4} parent=1 // pred_fallthru
      _
    // Predicated region
    $region18: #{bottleneck_forward.4} parent=1 // pred_check
      _
    $region19: #{bottleneck_forward.4} parent=1 // pred_check_branch
      %903 = sbr.rel (0) target = $region21
    $region20: #{bottleneck_forward.4} parent=1 // pred_region
      _
    $region21: #{bottleneck_forward.4} parent=1 // pred_fallthru
      _
    // Predicated region
    $region22: #{bottleneck_forward.4} parent=1 // pred_check
      _
    $region23: #{bottleneck_forward.4} parent=1 // pred_check_branch
      %905 = sbr.rel (0) target = $region25
    $region24: #{bottleneck_forward.4} parent=1 // pred_region
      _
    $region25: #{bottleneck_forward.4} parent=1 // pred_fallthru
      _
    // Predicated region
    $region26: #{bottleneck_forward.4} parent=1 // pred_check
      _
    $region27: #{bottleneck_forward.4} parent=1 // pred_check_branch
      %907 = sbr.rel (0) target = $region29
    $region28: #{bottleneck_forward.4} parent=1 // pred_region
      _
    $region29: #{bottleneck_forward.4} parent=1 // pred_fallthru
      _
    // Predicated region
    $region30: #{bottleneck_forward.4} parent=1 // pred_check
      _
    $region31: #{bottleneck_forward.4} parent=1 // pred_check_branch
      %909 = sbr.rel (0) target = $region33
    $region32: #{bottleneck_forward.4} parent=1 // pred_region
      _
    $region33: #{bottleneck_forward.4} parent=1 // pred_fallthru
      _
    // Predicated region
    $region34: #{bottleneck_forward.4} parent=1 // pred_check
      _
    $region35: #{bottleneck_forward.4} parent=1 // pred_check_branch
      %911 = sbr.rel (0) target = $region37
    $region36: #{bottleneck_forward.4} parent=1 // pred_region
      _
    $region37: #{bottleneck_forward.4} parent=1 // pred_fallthru
      _
    %912 = vsyncpa [#allocation3], 1

// kernel: bottleneck_forward.6
$region0: #{bottleneck_forward.6}
  #allocation0 [shape = 'u32[]', space=smem, size = 0x4, offset = 0x4, fixed_abs, tag = 'smem constant byte address 0x4 - core index']
  #allocation1 [shape = 'u32[72,128]{1,0:T(1,128)}', space=vmem, size = 0x9000, scoped, tag = 'internal scratch']
  %s0 = inlined_call_operand.vmem [shape: f32[512,4], index: 0, kind: input, shape index: {}]
  %s1 = inlined_call_operand.vmem [shape: f32[1,4], index: 1, kind: input, shape index: {}]
  %s2 = inlined_call_operand.vmem [shape: f32[1,4], index: 2, kind: input, shape index: {}]
  %s3 = inlined_call_operand.hbm [shape: f32[4,16], index: 3, kind: input, shape index: {}]
  %s4 = inlined_call_operand.vmem [shape: f32[512,16], index: 4, kind: output, shape index: {0}]
  %s5 = inlined_call_operand.vmem [shape: f32[8,16], index: 5, kind: output, shape index: {1}]
  %s6 = inlined_call_operand.vmem [shape: f32[8,16], index: 6, kind: output, shape index: {2}]
  %7 = xla_tuple %s4, %s5, %s6
  %s8 = sld [smem:[#allocation0]]
  $region46: #{bottleneck_forward.6} parent=0
    _
  %s10 = ssub.s32 1, %s8
  %s11 = scalar_select 0, %s10, %s8
  $region1: #{bottleneck_forward.6} parent=0
    #allocation2 [shape = 'u8[2048]{0}', space=vmem, size = 0x800, scoped, tag = 'input window, operand 3, single buffered']
    #allocation3 [shape = 's32[1]{0}', space=sflag, size = 0x4, scoped, tag = 'scoped memory for bottleneck_forward.6']
    %12 = vsyncpa [#allocation3], 0
    // Predicated region
    $region2: #{bottleneck_forward.6} parent=1 // pred_check
      _
    $region3: #{bottleneck_forward.6} parent=1 // pred_check_branch
      %14 = sbr.rel (0) target = $region5
    $region4: #{bottleneck_forward.6} parent=1 // pred_region
      _
    $region5: #{bottleneck_forward.6} parent=1 // pred_fallthru
      _
    // Predicated region
    $region6: #{bottleneck_forward.6} parent=1 // pred_check
      _
    $region7: #{bottleneck_forward.6} parent=1 // pred_check_branch
      %16 = sbr.rel (0) target = $region9
    $region8: #{bottleneck_forward.6} parent=1 // pred_region
      _
    $region9: #{bottleneck_forward.6} parent=1 // pred_fallthru
      _
    // Predicated region
    $region10: #{bottleneck_forward.6} parent=1 // pred_check
      _
    $region11: #{bottleneck_forward.6} parent=1 // pred_check_branch
      %18 = sbr.rel (0) target = $region13
    $region12: #{bottleneck_forward.6} parent=1 // pred_region
      _
    $region13: #{bottleneck_forward.6} parent=1 // pred_fallthru
      _
    // Predicated region
    $region14: #{bottleneck_forward.6} parent=1 // pred_check
      _
    $region15: #{bottleneck_forward.6} parent=1 // pred_check_branch
      %20 = sbr.rel (0) target = $region17
    $region16: #{bottleneck_forward.6} parent=1 // pred_region
      %22 = vsyncadd [#allocation3], 0
      %s24 = sshll.u32 %s3, 4
      %s25 = int_to_ptr.hbm [resolvable:$true] %s24
      %s26 = sshll.u32 [#allocation2], 4
      %s27 = int_to_ptr.vmem [resolvable:$true] %s26
      %29 = dma.hbm_to_vmem [thread:$0]  %s25, 64, %s27, [#allocation3]
    $region17: #{bottleneck_forward.6} parent=1 // pred_fallthru
      _
    // Predicated region
    $region18: #{bottleneck_forward.6} parent=1 // pred_check
      _
    $region19: #{bottleneck_forward.6} parent=1 // pred_check_branch
      %31 = sbr.rel (0) target = $region21
    $region20: #{bottleneck_forward.6} parent=1 // pred_region
      %33 = dma.done [#allocation3], 64
    $region21: #{bottleneck_forward.6} parent=1 // pred_fallthru
      _
    %v34 = vld [vmem:[%s0] sm:$0xff]
    %v35 = vld [vmem:[%s0 + $0x8] sm:$0xff]
    %v36 = vld [vmem:[%s0 + $0x10] sm:$0xff]
    %v37 = vld [vmem:[%s0 + $0x18] sm:$0xff]
    %v38 = vld [vmem:[%s0 + $0x20] sm:$0xff]
    %v39 = vld [vmem:[%s0 + $0x28] sm:$0xff]
    %v40 = vld [vmem:[%s0 + $0x30] sm:$0xff]
    %v41 = vld [vmem:[%s0 + $0x38] sm:$0xff]
    %v42 = vld [vmem:[%s0 + $0x40] sm:$0xff]
    %v43 = vld [vmem:[%s0 + $0x48] sm:$0xff]
    %v44 = vld [vmem:[%s0 + $0x50] sm:$0xff]
    %v45 = vld [vmem:[%s0 + $0x58] sm:$0xff]
    %v46 = vld [vmem:[%s0 + $0x60] sm:$0xff]
    %v47 = vld [vmem:[%s0 + $0x68] sm:$0xff]
    %v48 = vld [vmem:[%s0 + $0x70] sm:$0xff]
    %v49 = vld [vmem:[%s0 + $0x78] sm:$0xff]
    %v50 = vld [vmem:[%s0 + $0x80] sm:$0xff]
    %v51 = vld [vmem:[%s0 + $0x88] sm:$0xff]
    %v52 = vld [vmem:[%s0 + $0x90] sm:$0xff]
    %v53 = vld [vmem:[%s0 + $0x98] sm:$0xff]
    %v54 = vld [vmem:[%s0 + $0xa0] sm:$0xff]
    %v55 = vld [vmem:[%s0 + $0xa8] sm:$0xff]
    %v56 = vld [vmem:[%s0 + $0xb0] sm:$0xff]
    %v57 = vld [vmem:[%s0 + $0xb8] sm:$0xff]
    %v58 = vld [vmem:[%s0 + $0xc0] sm:$0xff]
    %v59 = vld [vmem:[%s0 + $0xc8] sm:$0xff]
    %v60 = vld [vmem:[%s0 + $0xd0] sm:$0xff]
    %v61 = vld [vmem:[%s0 + $0xd8] sm:$0xff]
    %v62 = vld [vmem:[%s0 + $0xe0] sm:$0xff]
    %v63 = vld [vmem:[%s0 + $0xe8] sm:$0xff]
    %v64 = vld [vmem:[%s0 + $0xf0] sm:$0xff]
    %v65 = vld [vmem:[%s0 + $0xf8] sm:$0xff]
    %v66 = vld [vmem:[%s0 + $0x100] sm:$0xff]
    %v67 = vld [vmem:[%s0 + $0x108] sm:$0xff]
    %v68 = vld [vmem:[%s0 + $0x110] sm:$0xff]
    %v69 = vld [vmem:[%s0 + $0x118] sm:$0xff]
    %v70 = vld [vmem:[%s0 + $0x120] sm:$0xff]
    %v71 = vld [vmem:[%s0 + $0x128] sm:$0xff]
    %v72 = vld [vmem:[%s0 + $0x130] sm:$0xff]
    %v73 = vld [vmem:[%s0 + $0x138] sm:$0xff]
    %v74 = vld [vmem:[%s0 + $0x140] sm:$0xff]
    %v75 = vld [vmem:[%s0 + $0x148] sm:$0xff]
    %v76 = vld [vmem:[%s0 + $0x150] sm:$0xff]
    %v77 = vld [vmem:[%s0 + $0x158] sm:$0xff]
    %v78 = vld [vmem:[%s0 + $0x160] sm:$0xff]
    %v79 = vld [vmem:[%s0 + $0x168] sm:$0xff]
    %v80 = vld [vmem:[%s0 + $0x170] sm:$0xff]
    %v81 = vld [vmem:[%s0 + $0x178] sm:$0xff]
    %v82 = vld [vmem:[%s0 + $0x180] sm:$0xff]
    %v83 = vld [vmem:[%s0 + $0x188] sm:$0xff]
    %v84 = vld [vmem:[%s0 + $0x190] sm:$0xff]
    %v85 = vld [vmem:[%s0 + $0x198] sm:$0xff]
    %v86 = vld [vmem:[%s0 + $0x1a0] sm:$0xff]
    %v87 = vld [vmem:[%s0 + $0x1a8] sm:$0xff]
    %v88 = vld [vmem:[%s0 + $0x1b0] sm:$0xff]
    %v89 = vld [vmem:[%s0 + $0x1b8] sm:$0xff]
    %v90 = vld [vmem:[%s0 + $0x1c0] sm:$0xff]
    %v91 = vld [vmem:[%s0 + $0x1c8] sm:$0xff]
    %v92 = vld [vmem:[%s0 + $0x1d0] sm:$0xff]
    %v93 = vld [vmem:[%s0 + $0x1d8] sm:$0xff]
    %v94 = vld [vmem:[%s0 + $0x1e0] sm:$0xff]
    %v95 = vld [vmem:[%s0 + $0x1e8] sm:$0xff]
    %v96 = vld [vmem:[%s0 + $0x1f0] sm:$0xff]
    %v97 = vld [vmem:[%s0 + $0x1f8] sm:$0xff]
    %v98 = vld [vmem:[%s1] sm:$0x1]
    %v100 = vperm.slane %v98, 0
    %v102 = vmul.f32 %v34, %v100
    %v103 = vmul.f32 %v35, %v100
    %v104 = vmul.f32 %v36, %v100
    %v105 = vmul.f32 %v37, %v100
    %v106 = vmul.f32 %v38, %v100
    %v107 = vmul.f32 %v39, %v100
    %v108 = vmul.f32 %v40, %v100
    %v109 = vmul.f32 %v41, %v100
    %v110 = vmul.f32 %v42, %v100
    %v111 = vmul.f32 %v43, %v100
    %v112 = vmul.f32 %v44, %v100
    %v113 = vmul.f32 %v45, %v100
    %v114 = vmul.f32 %v46, %v100
    %v115 = vmul.f32 %v47, %v100
    %v116 = vmul.f32 %v48, %v100
    %v117 = vmul.f32 %v49, %v100
    %v118 = vmul.f32 %v50, %v100
    %v119 = vmul.f32 %v51, %v100
    %v120 = vmul.f32 %v52, %v100
    %v121 = vmul.f32 %v53, %v100
    %v122 = vmul.f32 %v54, %v100
    %v123 = vmul.f32 %v55, %v100
    %v124 = vmul.f32 %v56, %v100
    %v125 = vmul.f32 %v57, %v100
    %v126 = vmul.f32 %v58, %v100
    %v127 = vmul.f32 %v59, %v100
    %v128 = vmul.f32 %v60, %v100
    %v129 = vmul.f32 %v61, %v100
    %v130 = vmul.f32 %v62, %v100
    %v131 = vmul.f32 %v63, %v100
    %v132 = vmul.f32 %v64, %v100
    %v133 = vmul.f32 %v65, %v100
    %v134 = vmul.f32 %v66, %v100
    %v135 = vmul.f32 %v67, %v100
    %v136 = vmul.f32 %v68, %v100
    %v137 = vmul.f32 %v69, %v100
    %v138 = vmul.f32 %v70, %v100
    %v139 = vmul.f32 %v71, %v100
    %v140 = vmul.f32 %v72, %v100
    %v141 = vmul.f32 %v73, %v100
    %v142 = vmul.f32 %v74, %v100
    %v143 = vmul.f32 %v75, %v100
    %v144 = vmul.f32 %v76, %v100
    %v145 = vmul.f32 %v77, %v100
    %v146 = vmul.f32 %v78, %v100
    %v147 = vmul.f32 %v79, %v100
    %v148 = vmul.f32 %v80, %v100
    %v149 = vmul.f32 %v81, %v100
    %v150 = vmul.f32 %v82, %v100
    %v151 = vmul.f32 %v83, %v100
    %v152 = vmul.f32 %v84, %v100
    %v153 = vmul.f32 %v85, %v100
    %v154 = vmul.f32 %v86, %v100
    %v155 = vmul.f32 %v87, %v100
    %v156 = vmul.f32 %v88, %v100
    %v157 = vmul.f32 %v89, %v100
    %v158 = vmul.f32 %v90, %v100
    %v159 = vmul.f32 %v91, %v100
    %v160 = vmul.f32 %v92, %v100
    %v161 = vmul.f32 %v93, %v100
    %v162 = vmul.f32 %v94, %v100
    %v163 = vmul.f32 %v95, %v100
    %v164 = vmul.f32 %v96, %v100
    %v165 = vmul.f32 %v97, %v100
    %v166 = vld [vmem:[%s2] sm:$0x1]
    %v168 = vperm.slane %v166, 0
    %v170 = vadd.f32 %v102, %v168
    %v171 = vadd.f32 %v103, %v168
    %v172 = vadd.f32 %v104, %v168
    %v173 = vadd.f32 %v105, %v168
    %v174 = vadd.f32 %v106, %v168
    %v175 = vadd.f32 %v107, %v168
    %v176 = vadd.f32 %v108, %v168
    %v177 = vadd.f32 %v109, %v168
    %v178 = vadd.f32 %v110, %v168
    %v179 = vadd.f32 %v111, %v168
    %v180 = vadd.f32 %v112, %v168
    %v181 = vadd.f32 %v113, %v168
    %v182 = vadd.f32 %v114, %v168
    %v183 = vadd.f32 %v115, %v168
    %v184 = vadd.f32 %v116, %v168
    %v185 = vadd.f32 %v117, %v168
    %v186 = vadd.f32 %v118, %v168
    %v187 = vadd.f32 %v119, %v168
    %v188 = vadd.f32 %v120, %v168
    %v189 = vadd.f32 %v121, %v168
    %v190 = vadd.f32 %v122, %v168
    %v191 = vadd.f32 %v123, %v168
    %v192 = vadd.f32 %v124, %v168
    %v193 = vadd.f32 %v125, %v168
    %v194 = vadd.f32 %v126, %v168
    %v195 = vadd.f32 %v127, %v168
    %v196 = vadd.f32 %v128, %v168
    %v197 = vadd.f32 %v129, %v168
    %v198 = vadd.f32 %v130, %v168
    %v199 = vadd.f32 %v131, %v168
    %v200 = vadd.f32 %v132, %v168
    %v201 = vadd.f32 %v133, %v168
    %v202 = vadd.f32 %v134, %v168
    %v203 = vadd.f32 %v135, %v168
    %v204 = vadd.f32 %v136, %v168
    %v205 = vadd.f32 %v137, %v168
    %v206 = vadd.f32 %v138, %v168
    %v207 = vadd.f32 %v139, %v168
    %v208 = vadd.f32 %v140, %v168
    %v209 = vadd.f32 %v141, %v168
    %v210 = vadd.f32 %v142, %v168
    %v211 = vadd.f32 %v143, %v168
    %v212 = vadd.f32 %v144, %v168
    %v213 = vadd.f32 %v145, %v168
    %v214 = vadd.f32 %v146, %v168
    %v215 = vadd.f32 %v147, %v168
    %v216 = vadd.f32 %v148, %v168
    %v217 = vadd.f32 %v149, %v168
    %v218 = vadd.f32 %v150, %v168
    %v219 = vadd.f32 %v151, %v168
    %v220 = vadd.f32 %v152, %v168
    %v221 = vadd.f32 %v153, %v168
    %v222 = vadd.f32 %v154, %v168
    %v223 = vadd.f32 %v155, %v168
    %v224 = vadd.f32 %v156, %v168
    %v225 = vadd.f32 %v157, %v168
    %v226 = vadd.f32 %v158, %v168
    %v227 = vadd.f32 %v159, %v168
    %v228 = vadd.f32 %v160, %v168
    %v229 = vadd.f32 %v161, %v168
    %v230 = vadd.f32 %v162, %v168
    %v231 = vadd.f32 %v163, %v168
    %v232 = vadd.f32 %v164, %v168
    %v233 = vadd.f32 %v165, %v168
    %v234 = vmax.f32 %v170, 0.0
    %v235 = vmax.f32 %v171, 0.0
    %v236 = vmax.f32 %v172, 0.0
    %v237 = vmax.f32 %v173, 0.0
    %v238 = vmax.f32 %v174, 0.0
    %v239 = vmax.f32 %v175, 0.0
    %v240 = vmax.f32 %v176, 0.0
    %v241 = vmax.f32 %v177, 0.0
    %v242 = vmax.f32 %v178, 0.0
    %v243 = vmax.f32 %v179, 0.0
    %v244 = vmax.f32 %v180, 0.0
    %v245 = vmax.f32 %v181, 0.0
    %v246 = vmax.f32 %v182, 0.0
    %v247 = vmax.f32 %v183, 0.0
    %v248 = vmax.f32 %v184, 0.0
    %v249 = vmax.f32 %v185, 0.0
    %v250 = vmax.f32 %v186, 0.0
    %v251 = vmax.f32 %v187, 0.0
    %v252 = vmax.f32 %v188, 0.0
    %v253 = vmax.f32 %v189, 0.0
    %v254 = vmax.f32 %v190, 0.0
    %v255 = vmax.f32 %v191, 0.0
    %v256 = vmax.f32 %v192, 0.0
    %v257 = vmax.f32 %v193, 0.0
    %v258 = vmax.f32 %v194, 0.0
    %v259 = vmax.f32 %v195, 0.0
    %v260 = vmax.f32 %v196, 0.0
    %v261 = vmax.f32 %v197, 0.0
    %v262 = vmax.f32 %v198, 0.0
    %v263 = vmax.f32 %v199, 0.0
    %v264 = vmax.f32 %v200, 0.0
    %v265 = vmax.f32 %v201, 0.0
    %v266 = vmax.f32 %v202, 0.0
    %v267 = vmax.f32 %v203, 0.0
    %v268 = vmax.f32 %v204, 0.0
    %v269 = vmax.f32 %v205, 0.0
    %v270 = vmax.f32 %v206, 0.0
    %v271 = vmax.f32 %v207, 0.0
    %v272 = vmax.f32 %v208, 0.0
    %v273 = vmax.f32 %v209, 0.0
    %v274 = vmax.f32 %v210, 0.0
    %v275 = vmax.f32 %v211, 0.0
    %v276 = vmax.f32 %v212, 0.0
    %v277 = vmax.f32 %v213, 0.0
    %v278 = vmax.f32 %v214, 0.0
    %v279 = vmax.f32 %v215, 0.0
    %v280 = vmax.f32 %v216, 0.0
    %v281 = vmax.f32 %v217, 0.0
    %v282 = vmax.f32 %v218, 0.0
    %v283 = vmax.f32 %v219, 0.0
    %v284 = vmax.f32 %v220, 0.0
    %v285 = vmax.f32 %v221, 0.0
    %v286 = vmax.f32 %v222, 0.0
    %v287 = vmax.f32 %v223, 0.0
    %v288 = vmax.f32 %v224, 0.0
    %v289 = vmax.f32 %v225, 0.0
    %v290 = vmax.f32 %v226, 0.0
    %v291 = vmax.f32 %v227, 0.0
    %v292 = vmax.f32 %v228, 0.0
    %v293 = vmax.f32 %v229, 0.0
    %v294 = vmax.f32 %v230, 0.0
    %v295 = vmax.f32 %v231, 0.0
    %v296 = vmax.f32 %v232, 0.0
    %v297 = vmax.f32 %v233, 0.0
    %v298 = vld [vmem:[#allocation2] sm:$0xf]
    %vm299 = vcmask 31744
    %v301 = vsel %vm299, %v234, 0
    %v304 = vsel %vm299, %v235, 0
    %v307 = vsel %vm299, %v236, 0
    %v310 = vsel %vm299, %v237, 0
    %v313 = vsel %vm299, %v238, 0
    %v316 = vsel %vm299, %v239, 0
    %v319 = vsel %vm299, %v240, 0
    %v322 = vsel %vm299, %v241, 0
    %v325 = vsel %vm299, %v242, 0
    %v328 = vsel %vm299, %v243, 0
    %v331 = vsel %vm299, %v244, 0
    %v334 = vsel %vm299, %v245, 0
    %v337 = vsel %vm299, %v246, 0
    %v340 = vsel %vm299, %v247, 0
    %v343 = vsel %vm299, %v248, 0
    %v346 = vsel %vm299, %v249, 0
    %v349 = vsel %vm299, %v250, 0
    %v352 = vsel %vm299, %v251, 0
    %v355 = vsel %vm299, %v252, 0
    %v358 = vsel %vm299, %v253, 0
    %v361 = vsel %vm299, %v254, 0
    %v364 = vsel %vm299, %v255, 0
    %v367 = vsel %vm299, %v256, 0
    %v370 = vsel %vm299, %v257, 0
    %v373 = vsel %vm299, %v258, 0
    %v376 = vsel %vm299, %v259, 0
    %v379 = vsel %vm299, %v260, 0
    %v382 = vsel %vm299, %v261, 0
    %v385 = vsel %vm299, %v262, 0
    %v388 = vsel %vm299, %v263, 0
    %v391 = vsel %vm299, %v264, 0
    %v394 = vsel %vm299, %v265, 0
    %v397 = vsel %vm299, %v266, 0
    %v400 = vsel %vm299, %v267, 0
    %v403 = vsel %vm299, %v268, 0
    %v406 = vsel %vm299, %v269, 0
    %v409 = vsel %vm299, %v270, 0
    %v412 = vsel %vm299, %v271, 0
    %v415 = vsel %vm299, %v272, 0
    %v418 = vsel %vm299, %v273, 0
    %v421 = vsel %vm299, %v274, 0
    %v424 = vsel %vm299, %v275, 0
    %v427 = vsel %vm299, %v276, 0
    %v430 = vsel %vm299, %v277, 0
    %v433 = vsel %vm299, %v278, 0
    %v436 = vsel %vm299, %v279, 0
    %v439 = vsel %vm299, %v280, 0
    %v442 = vsel %vm299, %v281, 0
    %v445 = vsel %vm299, %v282, 0
    %v448 = vsel %vm299, %v283, 0
    %v451 = vsel %vm299, %v284, 0
    %v454 = vsel %vm299, %v285, 0
    %v457 = vsel %vm299, %v286, 0
    %v460 = vsel %vm299, %v287, 0
    %v463 = vsel %vm299, %v288, 0
    %v466 = vsel %vm299, %v289, 0
    %v469 = vsel %vm299, %v290, 0
    %v472 = vsel %vm299, %v291, 0
    %v475 = vsel %vm299, %v292, 0
    %v478 = vsel %vm299, %v293, 0
    %v481 = vsel %vm299, %v294, 0
    %v484 = vsel %vm299, %v295, 0
    %v487 = vsel %vm299, %v296, 0
    %v490 = vsel %vm299, %v297, 0
    %vm492 = vcmask 1043456
    %v494 = vsel %vm492, %v298, 0
    %496 = vmatpush.msra.mxu0 0.0
    %497 = vmatpush.msra.mxu0 0.0
    %498 = vmatpush.msra.mxu0 0.0
    %499 = vmatpush.msra.mxu0 0.0
    %500 = vmatpush.msra.mxu0 0.0
    %501 = vmatpush.msra.mxu0 0.0
    %502 = vmatpush.msra.mxu0 0.0
    %503 = vmatpush.msra.mxu0 0.0
    %504 = vmatpush.msra.mxu0 0.0
    %505 = vmatpush.msra.mxu0 0.0
    %506 = vmatpush.msra.mxu0 0.0
    %507 = vmatpush.msra.mxu0 0.0
    %508 = vmatpush.msra.mxu0 0.0
    %509 = vmatpush.msra.mxu0 0.0
    %510 = vmatpush.msra.mxu0 0.0
    %511 = vmatpush.msra.mxu0 %v494
    %512 = vmatmul.f32.gmra.mxu0 %v301
    %v513 = vpop.f32.mrf.mxu0
    %v514 = vadd.f32 0.0, %v513
    %515 = vmatmul.f32.gmra.mxu0 %v304
    %v516 = vpop.f32.mrf.mxu0
    %v517 = vadd.f32 0.0, %v516
    %518 = vmatmul.f32.gmra.mxu0 %v307
    %v519 = vpop.f32.mrf.mxu0
    %v520 = vadd.f32 0.0, %v519
    %521 = vmatmul.f32.gmra.mxu0 %v310
    %v522 = vpop.f32.mrf.mxu0
    %v523 = vadd.f32 0.0, %v522
    %524 = vmatmul.f32.gmra.mxu0 %v313
    %v525 = vpop.f32.mrf.mxu0
    %v526 = vadd.f32 0.0, %v525
    %527 = vmatmul.f32.gmra.mxu0 %v316
    %v528 = vpop.f32.mrf.mxu0
    %v529 = vadd.f32 0.0, %v528
    %530 = vmatmul.f32.gmra.mxu0 %v319
    %v531 = vpop.f32.mrf.mxu0
    %v532 = vadd.f32 0.0, %v531
    %533 = vmatmul.f32.gmra.mxu0 %v322
    %v534 = vpop.f32.mrf.mxu0
    %v535 = vadd.f32 0.0, %v534
    %536 = vmatmul.f32.gmra.mxu0 %v325
    %v537 = vpop.f32.mrf.mxu0
    %v538 = vadd.f32 0.0, %v537
    %539 = vmatmul.f32.gmra.mxu0 %v328
    %v540 = vpop.f32.mrf.mxu0
    %v541 = vadd.f32 0.0, %v540
    %542 = vmatmul.f32.gmra.mxu0 %v331
    %v543 = vpop.f32.mrf.mxu0
    %v544 = vadd.f32 0.0, %v543
    %545 = vmatmul.f32.gmra.mxu0 %v334
    %v546 = vpop.f32.mrf.mxu0
    %v547 = vadd.f32 0.0, %v546
    %548 = vmatmul.f32.gmra.mxu0 %v337
    %v549 = vpop.f32.mrf.mxu0
    %v550 = vadd.f32 0.0, %v549
    %551 = vmatmul.f32.gmra.mxu0 %v340
    %v552 = vpop.f32.mrf.mxu0
    %v553 = vadd.f32 0.0, %v552
    %554 = vmatmul.f32.gmra.mxu0 %v343
    %v555 = vpop.f32.mrf.mxu0
    %v556 = vadd.f32 0.0, %v555
    %557 = vmatmul.f32.gmra.mxu0 %v346
    %v558 = vpop.f32.mrf.mxu0
    %v559 = vadd.f32 0.0, %v558
    %560 = vmatmul.f32.gmra.mxu0 %v349
    %v561 = vpop.f32.mrf.mxu0
    %v562 = vadd.f32 0.0, %v561
    %563 = vmatmul.f32.gmra.mxu0 %v352
    %v564 = vpop.f32.mrf.mxu0
    %v565 = vadd.f32 0.0, %v564
    %566 = vmatmul.f32.gmra.mxu0 %v355
    %v567 = vpop.f32.mrf.mxu0
    %v568 = vadd.f32 0.0, %v567
    %569 = vmatmul.f32.gmra.mxu0 %v358
    %v570 = vpop.f32.mrf.mxu0
    %v571 = vadd.f32 0.0, %v570
    %572 = vmatmul.f32.gmra.mxu0 %v361
    %v573 = vpop.f32.mrf.mxu0
    %v574 = vadd.f32 0.0, %v573
    %575 = vmatmul.f32.gmra.mxu0 %v364
    %v576 = vpop.f32.mrf.mxu0
    %v577 = vadd.f32 0.0, %v576
    %578 = vmatmul.f32.gmra.mxu0 %v367
    %v579 = vpop.f32.mrf.mxu0
    %v580 = vadd.f32 0.0, %v579
    %581 = vmatmul.f32.gmra.mxu0 %v370
    %v582 = vpop.f32.mrf.mxu0
    %v583 = vadd.f32 0.0, %v582
    %584 = vmatmul.f32.gmra.mxu0 %v373
    %v585 = vpop.f32.mrf.mxu0
    %v586 = vadd.f32 0.0, %v585
    %587 = vmatmul.f32.gmra.mxu0 %v376
    %v588 = vpop.f32.mrf.mxu0
    %v589 = vadd.f32 0.0, %v588
    %590 = vmatmul.f32.gmra.mxu0 %v379
    %v591 = vpop.f32.mrf.mxu0
    %v592 = vadd.f32 0.0, %v591
    %593 = vmatmul.f32.gmra.mxu0 %v382
    %v594 = vpop.f32.mrf.mxu0
    %v595 = vadd.f32 0.0, %v594
    %596 = vmatmul.f32.gmra.mxu0 %v385
    %v597 = vpop.f32.mrf.mxu0
    %v598 = vadd.f32 0.0, %v597
    %599 = vmatmul.f32.gmra.mxu0 %v388
    %v600 = vpop.f32.mrf.mxu0
    %v601 = vadd.f32 0.0, %v600
    %602 = vmatmul.f32.gmra.mxu0 %v391
    %v603 = vpop.f32.mrf.mxu0
    %v604 = vadd.f32 0.0, %v603
    %605 = vmatmul.f32.gmra.mxu0 %v394
    %v606 = vpop.f32.mrf.mxu0
    %v607 = vadd.f32 0.0, %v606
    %608 = vmatmul.f32.gmra.mxu0 %v397
    %v609 = vpop.f32.mrf.mxu0
    %v610 = vadd.f32 0.0, %v609
    %611 = vmatmul.f32.gmra.mxu0 %v400
    %v612 = vpop.f32.mrf.mxu0
    %v613 = vadd.f32 0.0, %v612
    %614 = vmatmul.f32.gmra.mxu0 %v403
    %v615 = vpop.f32.mrf.mxu0
    %v616 = vadd.f32 0.0, %v615
    %617 = vmatmul.f32.gmra.mxu0 %v406
    %v618 = vpop.f32.mrf.mxu0
    %v619 = vadd.f32 0.0, %v618
    %620 = vmatmul.f32.gmra.mxu0 %v409
    %v621 = vpop.f32.mrf.mxu0
    %v622 = vadd.f32 0.0, %v621
    %623 = vmatmul.f32.gmra.mxu0 %v412
    %v624 = vpop.f32.mrf.mxu0
    %v625 = vadd.f32 0.0, %v624
    %626 = vmatmul.f32.gmra.mxu0 %v415
    %v627 = vpop.f32.mrf.mxu0
    %v628 = vadd.f32 0.0, %v627
    %629 = vmatmul.f32.gmra.mxu0 %v418
    %v630 = vpop.f32.mrf.mxu0
    %v631 = vadd.f32 0.0, %v630
    %632 = vmatmul.f32.gmra.mxu0 %v421
    %v633 = vpop.f32.mrf.mxu0
    %v634 = vadd.f32 0.0, %v633
    %635 = vmatmul.f32.gmra.mxu0 %v424
    %v636 = vpop.f32.mrf.mxu0
    %v637 = vadd.f32 0.0, %v636
    %638 = vmatmul.f32.gmra.mxu0 %v427
    %v639 = vpop.f32.mrf.mxu0
    %v640 = vadd.f32 0.0, %v639
    %641 = vmatmul.f32.gmra.mxu0 %v430
    %v642 = vpop.f32.mrf.mxu0
    %v643 = vadd.f32 0.0, %v642
    %644 = vmatmul.f32.gmra.mxu0 %v433
    %v645 = vpop.f32.mrf.mxu0
    %v646 = vadd.f32 0.0, %v645
    %647 = vmatmul.f32.gmra.mxu0 %v436
    %v648 = vpop.f32.mrf.mxu0
    %v649 = vadd.f32 0.0, %v648
    %650 = vmatmul.f32.gmra.mxu0 %v439
    %v651 = vpop.f32.mrf.mxu0
    %v652 = vadd.f32 0.0, %v651
    %653 = vmatmul.f32.gmra.mxu0 %v442
    %v654 = vpop.f32.mrf.mxu0
    %v655 = vadd.f32 0.0, %v654
    %656 = vmatmul.f32.gmra.mxu0 %v445
    %v657 = vpop.f32.mrf.mxu0
    %v658 = vadd.f32 0.0, %v657
    %659 = vmatmul.f32.gmra.mxu0 %v448
    %v660 = vpop.f32.mrf.mxu0
    %v661 = vadd.f32 0.0, %v660
    %662 = vmatmul.f32.gmra.mxu0 %v451
    %v663 = vpop.f32.mrf.mxu0
    %v664 = vadd.f32 0.0, %v663
    %665 = vmatmul.f32.gmra.mxu0 %v454
    %v666 = vpop.f32.mrf.mxu0
    %v667 = vadd.f32 0.0, %v666
    %668 = vmatmul.f32.gmra.mxu0 %v457
    %v669 = vpop.f32.mrf.mxu0
    %v670 = vadd.f32 0.0, %v669
    %671 = vmatmul.f32.gmra.mxu0 %v460
    %v672 = vpop.f32.mrf.mxu0
    %v673 = vadd.f32 0.0, %v672
    %674 = vmatmul.f32.gmra.mxu0 %v463
    %v675 = vpop.f32.mrf.mxu0
    %v676 = vadd.f32 0.0, %v675
    %677 = vmatmul.f32.gmra.mxu0 %v466
    %v678 = vpop.f32.mrf.mxu0
    %v679 = vadd.f32 0.0, %v678
    %680 = vmatmul.f32.gmra.mxu0 %v469
    %v681 = vpop.f32.mrf.mxu0
    %v682 = vadd.f32 0.0, %v681
    %683 = vmatmul.f32.gmra.mxu0 %v472
    %v684 = vpop.f32.mrf.mxu0
    %v685 = vadd.f32 0.0, %v684
    %686 = vmatmul.f32.gmra.mxu0 %v475
    %v687 = vpop.f32.mrf.mxu0
    %v688 = vadd.f32 0.0, %v687
    %689 = vmatmul.f32.gmra.mxu0 %v478
    %v690 = vpop.f32.mrf.mxu0
    %v691 = vadd.f32 0.0, %v690
    %692 = vmatmul.f32.gmra.mxu0 %v481
    %v693 = vpop.f32.mrf.mxu0
    %v694 = vadd.f32 0.0, %v693
    %695 = vmatmul.f32.gmra.mxu0 %v484
    %v696 = vpop.f32.mrf.mxu0
    %v697 = vadd.f32 0.0, %v696
    %698 = vmatmul.f32.gmra.mxu0 %v487
    %v699 = vpop.f32.mrf.mxu0
    %v700 = vadd.f32 0.0, %v699
    %701 = vmatmul.f32.gmra.mxu0 %v490
    %v702 = vpop.f32.mrf.mxu0
    %v703 = vadd.f32 0.0, %v702
    %704 = vdwg.mxu0
    %vm705 = vcmask 130048
    %706 = vst.msk [vmem:[%s4] sm:$0xff] %vm705, %v514
    %707 = vst.msk [vmem:[%s4 + $0x8] sm:$0xff] %vm705, %v517
    %708 = vst.msk [vmem:[%s4 + $0x10] sm:$0xff] %vm705, %v520
    %709 = vst.msk [vmem:[%s4 + $0x18] sm:$0xff] %vm705, %v523
    %710 = vst.msk [vmem:[%s4 + $0x20] sm:$0xff] %vm705, %v526
    %711 = vst.msk [vmem:[%s4 + $0x28] sm:$0xff] %vm705, %v529
    %712 = vst.msk [vmem:[%s4 + $0x30] sm:$0xff] %vm705, %v532
    %713 = vst.msk [vmem:[%s4 + $0x38] sm:$0xff] %vm705, %v535
    %714 = vst.msk [vmem:[%s4 + $0x40] sm:$0xff] %vm705, %v538
    %715 = vst.msk [vmem:[%s4 + $0x48] sm:$0xff] %vm705, %v541
    %716 = vst.msk [vmem:[%s4 + $0x50] sm:$0xff] %vm705, %v544
    %717 = vst.msk [vmem:[%s4 + $0x58] sm:$0xff] %vm705, %v547
    %718 = vst.msk [vmem:[%s4 + $0x60] sm:$0xff] %vm705, %v550
    %719 = vst.msk [vmem:[%s4 + $0x68] sm:$0xff] %vm705, %v553
    %720 = vst.msk [vmem:[%s4 + $0x70] sm:$0xff] %vm705, %v556
    %721 = vst.msk [vmem:[%s4 + $0x78] sm:$0xff] %vm705, %v559
    %722 = vst.msk [vmem:[%s4 + $0x80] sm:$0xff] %vm705, %v562
    %723 = vst.msk [vmem:[%s4 + $0x88] sm:$0xff] %vm705, %v565
    %724 = vst.msk [vmem:[%s4 + $0x90] sm:$0xff] %vm705, %v568
    %725 = vst.msk [vmem:[%s4 + $0x98] sm:$0xff] %vm705, %v571
    %726 = vst.msk [vmem:[%s4 + $0xa0] sm:$0xff] %vm705, %v574
    %727 = vst.msk [vmem:[%s4 + $0xa8] sm:$0xff] %vm705, %v577
    %728 = vst.msk [vmem:[%s4 + $0xb0] sm:$0xff] %vm705, %v580
    %729 = vst.msk [vmem:[%s4 + $0xb8] sm:$0xff] %vm705, %v583
    %730 = vst.msk [vmem:[%s4 + $0xc0] sm:$0xff] %vm705, %v586
    %731 = vst.msk [vmem:[%s4 + $0xc8] sm:$0xff] %vm705, %v589
    %732 = vst.msk [vmem:[%s4 + $0xd0] sm:$0xff] %vm705, %v592
    %733 = vst.msk [vmem:[%s4 + $0xd8] sm:$0xff] %vm705, %v595
    %734 = vst.msk [vmem:[%s4 + $0xe0] sm:$0xff] %vm705, %v598
    %735 = vst.msk [vmem:[%s4 + $0xe8] sm:$0xff] %vm705, %v601
    %736 = vst.msk [vmem:[%s4 + $0xf0] sm:$0xff] %vm705, %v604
    %737 = vst.msk [vmem:[%s4 + $0xf8] sm:$0xff] %vm705, %v607
    %738 = vst.msk [vmem:[%s4 + $0x100] sm:$0xff] %vm705, %v610
    %739 = vst.msk [vmem:[%s4 + $0x108] sm:$0xff] %vm705, %v613
    %740 = vst.msk [vmem:[%s4 + $0x110] sm:$0xff] %vm705, %v616
    %741 = vst.msk [vmem:[%s4 + $0x118] sm:$0xff] %vm705, %v619
    %742 = vst.msk [vmem:[%s4 + $0x120] sm:$0xff] %vm705, %v622
    %743 = vst.msk [vmem:[%s4 + $0x128] sm:$0xff] %vm705, %v625
    %744 = vst.msk [vmem:[%s4 + $0x130] sm:$0xff] %vm705, %v628
    %745 = vst.msk [vmem:[%s4 + $0x138] sm:$0xff] %vm705, %v631
    %746 = vst.msk [vmem:[%s4 + $0x140] sm:$0xff] %vm705, %v634
    %747 = vst.msk [vmem:[%s4 + $0x148] sm:$0xff] %vm705, %v637
    %748 = vst.msk [vmem:[%s4 + $0x150] sm:$0xff] %vm705, %v640
    %749 = vst.msk [vmem:[%s4 + $0x158] sm:$0xff] %vm705, %v643
    %750 = vst.msk [vmem:[%s4 + $0x160] sm:$0xff] %vm705, %v646
    %751 = vst.msk [vmem:[%s4 + $0x168] sm:$0xff] %vm705, %v649
    %752 = vst.msk [vmem:[%s4 + $0x170] sm:$0xff] %vm705, %v652
    %753 = vst.msk [vmem:[%s4 + $0x178] sm:$0xff] %vm705, %v655
    %754 = vst.msk [vmem:[%s4 + $0x180] sm:$0xff] %vm705, %v658
    %755 = vst.msk [vmem:[%s4 + $0x188] sm:$0xff] %vm705, %v661
    %756 = vst.msk [vmem:[%s4 + $0x190] sm:$0xff] %vm705, %v664
    %757 = vst.msk [vmem:[%s4 + $0x198] sm:$0xff] %vm705, %v667
    %758 = vst.msk [vmem:[%s4 + $0x1a0] sm:$0xff] %vm705, %v670
    %759 = vst.msk [vmem:[%s4 + $0x1a8] sm:$0xff] %vm705, %v673
    %760 = vst.msk [vmem:[%s4 + $0x1b0] sm:$0xff] %vm705, %v676
    %761 = vst.msk [vmem:[%s4 + $0x1b8] sm:$0xff] %vm705, %v679
    %762 = vst.msk [vmem:[%s4 + $0x1c0] sm:$0xff] %vm705, %v682
    %763 = vst.msk [vmem:[%s4 + $0x1c8] sm:$0xff] %vm705, %v685
    %764 = vst.msk [vmem:[%s4 + $0x1d0] sm:$0xff] %vm705, %v688
    %765 = vst.msk [vmem:[%s4 + $0x1d8] sm:$0xff] %vm705, %v691
    %766 = vst.msk [vmem:[%s4 + $0x1e0] sm:$0xff] %vm705, %v694
    %767 = vst.msk [vmem:[%s4 + $0x1e8] sm:$0xff] %vm705, %v697
    %768 = vst.msk [vmem:[%s4 + $0x1f0] sm:$0xff] %vm705, %v700
    %769 = vst.msk [vmem:[%s4 + $0x1f8] sm:$0xff] %vm705, %v703
    %v770 = vsel %vm705, %v514, 0.0
    %v771 = vsel %vm705, %v517, 0.0
    %v772 = vadd.f32 %v770, %v771
    %v773 = vsel %vm705, %v520, 0.0
    %v774 = vadd.f32 %v772, %v773
    %v775 = vsel %vm705, %v523, 0.0
    %v776 = vadd.f32 %v774, %v775
    %v777 = vsel %vm705, %v526, 0.0
    %v778 = vadd.f32 %v776, %v777
    %v779 = vsel %vm705, %v529, 0.0
    %v780 = vadd.f32 %v778, %v779
    %v781 = vsel %vm705, %v532, 0.0
    %v782 = vadd.f32 %v780, %v781
    %v783 = vsel %vm705, %v535, 0.0
    %v784 = vadd.f32 %v782, %v783
    %v785 = vsel %vm705, %v538, 0.0
    %v786 = vadd.f32 %v784, %v785
    %v787 = vsel %vm705, %v541, 0.0
    %v788 = vadd.f32 %v786, %v787
    %v789 = vsel %vm705, %v544, 0.0
    %v790 = vadd.f32 %v788, %v789
    %v791 = vsel %vm705, %v547, 0.0
    %v792 = vadd.f32 %v790, %v791
    %v793 = vsel %vm705, %v550, 0.0
    %v794 = vadd.f32 %v792, %v793
    %v795 = vsel %vm705, %v553, 0.0
    %v796 = vadd.f32 %v794, %v795
    %v797 = vsel %vm705, %v556, 0.0
    %v798 = vadd.f32 %v796, %v797
    %v799 = vsel %vm705, %v559, 0.0
    %v800 = vadd.f32 %v798, %v799
    %v801 = vsel %vm705, %v562, 0.0
    %v802 = vadd.f32 %v800, %v801
    %v803 = vsel %vm705, %v565, 0.0
    %v804 = vadd.f32 %v802, %v803
    %v805 = vsel %vm705, %v568, 0.0
    %v806 = vadd.f32 %v804, %v805
    %v807 = vsel %vm705, %v571, 0.0
    %v808 = vadd.f32 %v806, %v807
    %v809 = vsel %vm705, %v574, 0.0
    %v810 = vadd.f32 %v808, %v809
    %v811 = vsel %vm705, %v577, 0.0
    %v812 = vadd.f32 %v810, %v811
    %v813 = vsel %vm705, %v580, 0.0
    %v814 = vadd.f32 %v812, %v813
    %v815 = vsel %vm705, %v583, 0.0
    %v816 = vadd.f32 %v814, %v815
    %v817 = vsel %vm705, %v586, 0.0
    %v818 = vadd.f32 %v816, %v817
    %v819 = vsel %vm705, %v589, 0.0
    %v820 = vadd.f32 %v818, %v819
    %v821 = vsel %vm705, %v592, 0.0
    %v822 = vadd.f32 %v820, %v821
    %v823 = vsel %vm705, %v595, 0.0
    %v824 = vadd.f32 %v822, %v823
    %v825 = vsel %vm705, %v598, 0.0
    %v826 = vadd.f32 %v824, %v825
    %v827 = vsel %vm705, %v601, 0.0
    %v828 = vadd.f32 %v826, %v827
    %v829 = vsel %vm705, %v604, 0.0
    %v830 = vadd.f32 %v828, %v829
    %v831 = vsel %vm705, %v607, 0.0
    %v832 = vadd.f32 %v830, %v831
    %v833 = vsel %vm705, %v610, 0.0
    %v834 = vadd.f32 %v832, %v833
    %v835 = vsel %vm705, %v613, 0.0
    %v836 = vadd.f32 %v834, %v835
    %v837 = vsel %vm705, %v616, 0.0
    %v838 = vadd.f32 %v836, %v837
    %v839 = vsel %vm705, %v619, 0.0
    %v840 = vadd.f32 %v838, %v839
    %v841 = vsel %vm705, %v622, 0.0
    %v842 = vadd.f32 %v840, %v841
    %v843 = vsel %vm705, %v625, 0.0
    %v844 = vadd.f32 %v842, %v843
    %v845 = vsel %vm705, %v628, 0.0
    %v846 = vadd.f32 %v844, %v845
    %v847 = vsel %vm705, %v631, 0.0
    %v848 = vadd.f32 %v846, %v847
    %v849 = vsel %vm705, %v634, 0.0
    %v850 = vadd.f32 %v848, %v849
    %v851 = vsel %vm705, %v637, 0.0
    %v852 = vadd.f32 %v850, %v851
    %v853 = vsel %vm705, %v640, 0.0
    %v854 = vadd.f32 %v852, %v853
    %v855 = vsel %vm705, %v643, 0.0
    %v856 = vadd.f32 %v854, %v855
    %v857 = vsel %vm705, %v646, 0.0
    %v858 = vadd.f32 %v856, %v857
    %v859 = vsel %vm705, %v649, 0.0
    %v860 = vadd.f32 %v858, %v859
    %v861 = vsel %vm705, %v652, 0.0
    %v862 = vadd.f32 %v860, %v861
    %v863 = vsel %vm705, %v655, 0.0
    %v864 = vadd.f32 %v862, %v863
    %v865 = vsel %vm705, %v658, 0.0
    %v866 = vadd.f32 %v864, %v865
    %v867 = vsel %vm705, %v661, 0.0
    %v868 = vadd.f32 %v866, %v867
    %v869 = vsel %vm705, %v664, 0.0
    %v870 = vadd.f32 %v868, %v869
    %v871 = vsel %vm705, %v667, 0.0
    %v872 = vadd.f32 %v870, %v871
    %v873 = vsel %vm705, %v670, 0.0
    %v874 = vadd.f32 %v872, %v873
    %v875 = vsel %vm705, %v673, 0.0
    %v876 = vadd.f32 %v874, %v875
    %v877 = vsel %vm705, %v676, 0.0
    %v878 = vadd.f32 %v876, %v877
    %v879 = vsel %vm705, %v679, 0.0
    %v880 = vadd.f32 %v878, %v879
    %v881 = vsel %vm705, %v682, 0.0
    %v882 = vadd.f32 %v880, %v881
    %v883 = vsel %vm705, %v685, 0.0
    %v884 = vadd.f32 %v882, %v883
    %v885 = vsel %vm705, %v688, 0.0
    %v886 = vadd.f32 %v884, %v885
    %v887 = vsel %vm705, %v691, 0.0
    %v888 = vadd.f32 %v886, %v887
    %v889 = vsel %vm705, %v694, 0.0
    %v890 = vadd.f32 %v888, %v889
    %v891 = vsel %vm705, %v697, 0.0
    %v892 = vadd.f32 %v890, %v891
    %v893 = vsel %vm705, %v700, 0.0
    %v894 = vadd.f32 %v892, %v893
    %v895 = vsel %vm705, %v703, 0.0
    %v896 = vadd.f32 %v894, %v895
    %v897 = vrot.slane %v896, 4
    %v898 = vadd.f32 %v896, %v897
    %v899 = vrot.slane %v898, 2
    %v900 = vadd.f32 %v898, %v899
    %v901 = vrot.slane %v900, 1
    %v902 = vadd.f32 %v900, %v901
    %v903 = vlaneseq
    %v904 = vshrl.u32 %v903, 7
    %vm905 = vcmp.eq.s32.totalorder %v904, 0
    %v906 = vsel %vm905, %v902, 0.0
    %907 = vst.msk [vmem:[%s5] sm:$0xff] %vm705, %v906
    %v908 = vmul.f32 %v514, %v514
    %v909 = vmul.f32 %v517, %v517
    %v910 = vmul.f32 %v520, %v520
    %v911 = vmul.f32 %v523, %v523
    %v912 = vmul.f32 %v526, %v526
    %v913 = vmul.f32 %v529, %v529
    %v914 = vmul.f32 %v532, %v532
    %v915 = vmul.f32 %v535, %v535
    %v916 = vmul.f32 %v538, %v538
    %v917 = vmul.f32 %v541, %v541
    %v918 = vmul.f32 %v544, %v544
    %v919 = vmul.f32 %v547, %v547
    %v920 = vmul.f32 %v550, %v550
    %v921 = vmul.f32 %v553, %v553
    %v922 = vmul.f32 %v556, %v556
    %v923 = vmul.f32 %v559, %v559
    %v924 = vmul.f32 %v562, %v562
    %v925 = vmul.f32 %v565, %v565
    %v926 = vmul.f32 %v568, %v568
    %v927 = vmul.f32 %v571, %v571
    %v928 = vmul.f32 %v574, %v574
    %v929 = vmul.f32 %v577, %v577
    %v930 = vmul.f32 %v580, %v580
    %v931 = vmul.f32 %v583, %v583
    %v932 = vmul.f32 %v586, %v586
    %v933 = vmul.f32 %v589, %v589
    %v934 = vmul.f32 %v592, %v592
    %v935 = vmul.f32 %v595, %v595
    %v936 = vmul.f32 %v598, %v598
    %v937 = vmul.f32 %v601, %v601
    %v938 = vmul.f32 %v604, %v604
    %v939 = vmul.f32 %v607, %v607
    %v940 = vmul.f32 %v610, %v610
    %v941 = vmul.f32 %v613, %v613
    %v942 = vmul.f32 %v616, %v616
    %v943 = vmul.f32 %v619, %v619
    %v944 = vmul.f32 %v622, %v622
    %v945 = vmul.f32 %v625, %v625
    %v946 = vmul.f32 %v628, %v628
    %v947 = vmul.f32 %v631, %v631
    %v948 = vmul.f32 %v634, %v634
    %v949 = vmul.f32 %v637, %v637
    %v950 = vmul.f32 %v640, %v640
    %v951 = vmul.f32 %v643, %v643
    %v952 = vmul.f32 %v646, %v646
    %v953 = vmul.f32 %v649, %v649
    %v954 = vmul.f32 %v652, %v652
    %v955 = vmul.f32 %v655, %v655
    %v956 = vmul.f32 %v658, %v658
    %v957 = vmul.f32 %v661, %v661
    %v958 = vmul.f32 %v664, %v664
    %v959 = vmul.f32 %v667, %v667
    %v960 = vmul.f32 %v670, %v670
    %v961 = vmul.f32 %v673, %v673
    %v962 = vmul.f32 %v676, %v676
    %v963 = vmul.f32 %v679, %v679
    %v964 = vmul.f32 %v682, %v682
    %v965 = vmul.f32 %v685, %v685
    %v966 = vmul.f32 %v688, %v688
    %v967 = vmul.f32 %v691, %v691
    %v968 = vmul.f32 %v694, %v694
    %v969 = vmul.f32 %v697, %v697
    %v970 = vmul.f32 %v700, %v700
    %v971 = vmul.f32 %v703, %v703
    %v972 = vsel %vm705, %v908, 0.0
    %v973 = vsel %vm705, %v909, 0.0
    %v974 = vadd.f32 %v972, %v973
    %v975 = vsel %vm705, %v910, 0.0
    %v976 = vadd.f32 %v974, %v975
    %v977 = vsel %vm705, %v911, 0.0
    %v978 = vadd.f32 %v976, %v977
    %v979 = vsel %vm705, %v912, 0.0
    %v980 = vadd.f32 %v978, %v979
    %v981 = vsel %vm705, %v913, 0.0
    %v982 = vadd.f32 %v980, %v981
    %v983 = vsel %vm705, %v914, 0.0
    %v984 = vadd.f32 %v982, %v983
    %v985 = vsel %vm705, %v915, 0.0
    %v986 = vadd.f32 %v984, %v985
    %v987 = vsel %vm705, %v916, 0.0
    %v988 = vadd.f32 %v986, %v987
    %v989 = vsel %vm705, %v917, 0.0
    %v990 = vadd.f32 %v988, %v989
    %v991 = vsel %vm705, %v918, 0.0
    %v992 = vadd.f32 %v990, %v991
    %v993 = vsel %vm705, %v919, 0.0
    %v994 = vadd.f32 %v992, %v993
    %v995 = vsel %vm705, %v920, 0.0
    %v996 = vadd.f32 %v994, %v995
    %v997 = vsel %vm705, %v921, 0.0
    %v998 = vadd.f32 %v996, %v997
    %v999 = vsel %vm705, %v922, 0.0
    %v1000 = vadd.f32 %v998, %v999
    %v1001 = vsel %vm705, %v923, 0.0
    %v1002 = vadd.f32 %v1000, %v1001
    %v1003 = vsel %vm705, %v924, 0.0
    %v1004 = vadd.f32 %v1002, %v1003
    %v1005 = vsel %vm705, %v925, 0.0
    %v1006 = vadd.f32 %v1004, %v1005
    %v1007 = vsel %vm705, %v926, 0.0
    %v1008 = vadd.f32 %v1006, %v1007
    %v1009 = vsel %vm705, %v927, 0.0
    %v1010 = vadd.f32 %v1008, %v1009
    %v1011 = vsel %vm705, %v928, 0.0
    %v1012 = vadd.f32 %v1010, %v1011
    %v1013 = vsel %vm705, %v929, 0.0
    %v1014 = vadd.f32 %v1012, %v1013
    %v1015 = vsel %vm705, %v930, 0.0
    %v1016 = vadd.f32 %v1014, %v1015
    %v1017 = vsel %vm705, %v931, 0.0
    %v1018 = vadd.f32 %v1016, %v1017
    %v1019 = vsel %vm705, %v932, 0.0
    %v1020 = vadd.f32 %v1018, %v1019
    %v1021 = vsel %vm705, %v933, 0.0
    %v1022 = vadd.f32 %v1020, %v1021
    %v1023 = vsel %vm705, %v934, 0.0
    %v1024 = vadd.f32 %v1022, %v1023
    %v1025 = vsel %vm705, %v935, 0.0
    %v1026 = vadd.f32 %v1024, %v1025
    %v1027 = vsel %vm705, %v936, 0.0
    %v1028 = vadd.f32 %v1026, %v1027
    %v1029 = vsel %vm705, %v937, 0.0
    %v1030 = vadd.f32 %v1028, %v1029
    %v1031 = vsel %vm705, %v938, 0.0
    %v1032 = vadd.f32 %v1030, %v1031
    %v1033 = vsel %vm705, %v939, 0.0
    %v1034 = vadd.f32 %v1032, %v1033
    %v1035 = vsel %vm705, %v940, 0.0
    %v1036 = vadd.f32 %v1034, %v1035
    %v1037 = vsel %vm705, %v941, 0.0
    %v1038 = vadd.f32 %v1036, %v1037
    %v1039 = vsel %vm705, %v942, 0.0
    %v1040 = vadd.f32 %v1038, %v1039
    %v1041 = vsel %vm705, %v943, 0.0
    %v1042 = vadd.f32 %v1040, %v1041
    %v1043 = vsel %vm705, %v944, 0.0
    %v1044 = vadd.f32 %v1042, %v1043
    %v1045 = vsel %vm705, %v945, 0.0
    %v1046 = vadd.f32 %v1044, %v1045
    %v1047 = vsel %vm705, %v946, 0.0
    %v1048 = vadd.f32 %v1046, %v1047
    %v1049 = vsel %vm705, %v947, 0.0
    %v1050 = vadd.f32 %v1048, %v1049
    %v1051 = vsel %vm705, %v948, 0.0
    %v1052 = vadd.f32 %v1050, %v1051
    %v1053 = vsel %vm705, %v949, 0.0
    %v1054 = vadd.f32 %v1052, %v1053
    %v1055 = vsel %vm705, %v950, 0.0
    %v1056 = vadd.f32 %v1054, %v1055
    %v1057 = vsel %vm705, %v951, 0.0
    %v1058 = vadd.f32 %v1056, %v1057
    %v1059 = vsel %vm705, %v952, 0.0
    %v1060 = vadd.f32 %v1058, %v1059
    %v1061 = vsel %vm705, %v953, 0.0
    %v1062 = vadd.f32 %v1060, %v1061
    %v1063 = vsel %vm705, %v954, 0.0
    %v1064 = vadd.f32 %v1062, %v1063
    %v1065 = vsel %vm705, %v955, 0.0
    %v1066 = vadd.f32 %v1064, %v1065
    %v1067 = vsel %vm705, %v956, 0.0
    %v1068 = vadd.f32 %v1066, %v1067
    %v1069 = vsel %vm705, %v957, 0.0
    %v1070 = vadd.f32 %v1068, %v1069
    %v1071 = vsel %vm705, %v958, 0.0
    %v1072 = vadd.f32 %v1070, %v1071
    %v1073 = vsel %vm705, %v959, 0.0
    %v1074 = vadd.f32 %v1072, %v1073
    %v1075 = vsel %vm705, %v960, 0.0
    %v1076 = vadd.f32 %v1074, %v1075
    %v1077 = vsel %vm705, %v961, 0.0
    %v1078 = vadd.f32 %v1076, %v1077
    %v1079 = vsel %vm705, %v962, 0.0
    %v1080 = vadd.f32 %v1078, %v1079
    %v1081 = vsel %vm705, %v963, 0.0
    %v1082 = vadd.f32 %v1080, %v1081
    %v1083 = vsel %vm705, %v964, 0.0
    %v1084 = vadd.f32 %v1082, %v1083
    %v1085 = vsel %vm705, %v965, 0.0
    %v1086 = vadd.f32 %v1084, %v1085
    %v1087 = vsel %vm705, %v966, 0.0
    %v1088 = vadd.f32 %v1086, %v1087
    %v1089 = vsel %vm705, %v967, 0.0
    %v1090 = vadd.f32 %v1088, %v1089
    %v1091 = vsel %vm705, %v968, 0.0
    %v1092 = vadd.f32 %v1090, %v1091
    %v1093 = vsel %vm705, %v969, 0.0
    %v1094 = vadd.f32 %v1092, %v1093
    %v1095 = vsel %vm705, %v970, 0.0
    %v1096 = vadd.f32 %v1094, %v1095
    %v1097 = vsel %vm705, %v971, 0.0
    %v1098 = vadd.f32 %v1096, %v1097
    %v1099 = vrot.slane %v1098, 4
    %v1100 = vadd.f32 %v1098, %v1099
    %v1101 = vrot.slane %v1100, 2
    %v1102 = vadd.f32 %v1100, %v1101
    %v1103 = vrot.slane %v1102, 1
    %v1104 = vadd.f32 %v1102, %v1103
    %v1105 = vsel %vm905, %v1104, 0.0
    %1106 = vst.msk [vmem:[%s6] sm:$0xff] %vm705, %v1105
    // Predicated region
    $region22: #{bottleneck_forward.6} parent=1 // pred_check
      _
    $region23: #{bottleneck_forward.6} parent=1 // pred_check_branch
      %1108 = sbr.rel (0) target = $region25
    $region24: #{bottleneck_forward.6} parent=1 // pred_region
      _
    $region25: #{bottleneck_forward.6} parent=1 // pred_fallthru
      _
    // Predicated region
    $region26: #{bottleneck_forward.6} parent=1 // pred_check
      _
    $region27: #{bottleneck_forward.6} parent=1 // pred_check_branch
      %1110 = sbr.rel (0) target = $region29
    $region28: #{bottleneck_forward.6} parent=1 // pred_region
      _
    $region29: #{bottleneck_forward.6} parent=1 // pred_fallthru
      _
    // Predicated region
    $region30: #{bottleneck_forward.6} parent=1 // pred_check
      _
    $region31: #{bottleneck_forward.6} parent=1 // pred_check_branch
      %1112 = sbr.rel (0) target = $region33
    $region32: #{bottleneck_forward.6} parent=1 // pred_region
      _
    $region33: #{bottleneck_forward.6} parent=1 // pred_fallthru
      _
    // Predicated region
    $region34: #{bottleneck_forward.6} parent=1 // pred_check
      _
    $region35: #{bottleneck_forward.6} parent=1 // pred_check_branch
      %1114 = sbr.rel (0) target = $region37
    $region36: #{bottleneck_forward.6} parent=1 // pred_region
      _
    $region37: #{bottleneck_forward.6} parent=1 // pred_fallthru
      _
    // Predicated region
    $region38: #{bottleneck_forward.6} parent=1 // pred_check
      _
    $region39: #{bottleneck_forward.6} parent=1 // pred_check_branch
      %1116 = sbr.rel (0) target = $region41
    $region40: #{bottleneck_forward.6} parent=1 // pred_region
      _
    $region41: #{bottleneck_forward.6} parent=1 // pred_fallthru
      _
    // Predicated region
    $region42: #{bottleneck_forward.6} parent=1 // pred_check
      _
    $region43: #{bottleneck_forward.6} parent=1 // pred_check_branch
      %1118 = sbr.rel (0) target = $region45
    $region44: #{bottleneck_forward.6} parent=1 // pred_region
      _
    $region45: #{bottleneck_forward.6} parent=1 // pred_fallthru
      _
    %1119 = vsyncpa [#allocation3], 1

// kernel: bottleneck_forward.5
$region0: #{bottleneck_forward.5}
  #allocation0 [shape = 'u32[]', space=smem, size = 0x4, offset = 0x4, fixed_abs, tag = 'smem constant byte address 0x4 - core index']
  #allocation1 [shape = 'u32[72,128]{1,0:T(1,128)}', space=vmem, size = 0x9000, scoped, tag = 'internal scratch']
  #allocation2 [shape = 'f32[304,4]{1,0:T(8,128)}', space=vmem, size = 0x26000, scoped, tag = 'scratch operand']
  %s0 = inlined_call_operand.vmem [shape: f32[512,4], index: 0, kind: input, shape index: {}]
  %s1 = inlined_call_operand.vmem [shape: f32[1,4], index: 1, kind: input, shape index: {}]
  %s2 = inlined_call_operand.vmem [shape: f32[1,4], index: 2, kind: input, shape index: {}]
  %s3 = inlined_call_operand.vmem [shape: f32[9,4,4], index: 3, kind: input, shape index: {}]
  %s4 = inlined_call_operand.vmem [shape: f32[512,4], index: 4, kind: output, shape index: {0}]
  %s5 = inlined_call_operand.vmem [shape: f32[16,4], index: 5, kind: output, shape index: {1}]
  %s6 = inlined_call_operand.vmem [shape: f32[16,4], index: 6, kind: output, shape index: {2}]
  %7 = xla_tuple %s4, %s5, %s6
  %s8 = sld [smem:[#allocation0]]
  $region65: #{bottleneck_forward.5} parent=0
    _
  %s10 = ssub.s32 1, %s8
  %s11 = scalar_select 0, %s10, %s8
  loop: start=0, step=1, limit=4
  $region2: #{bottleneck_forward.5} parent=0 // loop_pre_header
    _
  $region3: #{bottleneck_forward.5} parent=0 // loop_header
    %s13 = sphi 0, %s17
    %p14 = scmp.ge.s32.totalorder %s13, 4
    %s23 = sphi 0, %s25
    %s26 = sphi 0, %s23
    %s27 = sphi 0, %s26
    %s43 = sphi 0, %s27
    %s47 = sphi 0, %s47
    %s49 = sphi 0, %s47
    %s50 = sphi 0, %s49
    %s64 = sphi 0, %s50
    %s68 = sphi 0, %s68
    %s70 = sphi 0, %s68
    %s71 = sphi 0, %s70
    %s85 = sphi 0, %s71
    %s89 = sphi 0, %s89
    %s91 = sphi 0, %s89
    %s92 = sphi 0, %s91
    %s106 = sphi 0, %s92
    %s112 = sphi 0, %s114
    %s115 = sphi 0, %s112
    %s116 = sphi 0, %s115
    %s132 = sphi 0, %s116
    %s138 = sphi 0, %s140
    %s141 = sphi 0, %s138
    %s142 = sphi 0, %s141
    %s158 = sphi 0, %s142
    %s164 = sphi 0, %s166
    %s167 = sphi 0, %s164
    %s168 = sphi 0, %s167
    %s184 = sphi 0, %s168
  $region4: #{bottleneck_forward.5} parent=0 // loop_header_branch
    %16 = sbr.rel (%p14) target = $region8
  $region5: #{bottleneck_forward.5} parent=0 // loop_body
    %s18 = ssub.s32 %s13, 1
    %s19 = ssub.s32 %s13, 2
    %s20 = sadd.s32 %s13, 1
    %s21 = ssub.s32 %s13, %s20
    %p22 = scmp.eq.s32.totalorder %s21, 0
    %s24 = sadd.s32 %s23, 1
    %s25 = scalar_select %p22, %s23, %s24
    %p28 = pneg %p22
    %p29 = scmp.eq.s32.totalorder %s13, 1
    %p30 = por %p28, %p29
    %p31 = scmp.ne.s32.totalorder %s23, %s26
    %p32 = scmp.eq.s32.totalorder %s13, 0
    %p33 = por %p31, %p32
    %p34 = scmp.ne.s32.totalorder %s23, %s26
    %p35 = scmp.eq.s32.totalorder %s18, 1
    %p36 = por %p34, %p35
    %p37 = scmp.ne.s32.totalorder %s26, %s27
    %p38 = scmp.eq.s32.totalorder %s18, 0
    %p39 = por %p37, %p38
    %p40 = scmp.ne.s32.totalorder %s26, %s27
    %p41 = scmp.eq.s32.totalorder %s19, 1
    %p42 = por %p40, %p41
    %p44 = scmp.ne.s32.totalorder %s27, %s43
    %p45 = scmp.eq.s32.totalorder %s19, 0
    %p46 = por %p44, %p45
    %s48 = sadd.s32 %s47, 1
    %p51 = scmp.eq.s32.totalorder %s13, 1
    %p52 = scmp.ne.s32.totalorder %s47, %s49
    %p53 = scmp.eq.s32.totalorder %s13, 0
    %p54 = por %p52, %p53
    %p55 = scmp.ne.s32.totalorder %s47, %s49
    %p56 = scmp.eq.s32.totalorder %s18, 1
    %p57 = por %p55, %p56
    %p58 = scmp.ne.s32.totalorder %s49, %s50
    %p59 = scmp.eq.s32.totalorder %s18, 0
    %p60 = por %p58, %p59
    %p61 = scmp.ne.s32.totalorder %s49, %s50
    %p62 = scmp.eq.s32.totalorder %s19, 1
    %p63 = por %p61, %p62
    %p65 = scmp.ne.s32.totalorder %s50, %s64
    %p66 = scmp.eq.s32.totalorder %s19, 0
    %p67 = por %p65, %p66
    %s69 = sadd.s32 %s68, 1
    %p72 = scmp.eq.s32.totalorder %s13, 1
    %p73 = scmp.ne.s32.totalorder %s68, %s70
    %p74 = scmp.eq.s32.totalorder %s13, 0
    %p75 = por %p73, %p74
    %p76 = scmp.ne.s32.totalorder %s68, %s70
    %p77 = scmp.eq.s32.totalorder %s18, 1
    %p78 = por %p76, %p77
    %p79 = scmp.ne.s32.totalorder %s70, %s71
    %p80 = scmp.eq.s32.totalorder %s18, 0
    %p81 = por %p79, %p80
    %p82 = scmp.ne.s32.totalorder %s70, %s71
    %p83 = scmp.eq.s32.totalorder %s19, 1
    %p84 = por %p82, %p83
    %p86 = scmp.ne.s32.totalorder %s71, %s85
    %p87 = scmp.eq.s32.totalorder %s19, 0
    %p88 = por %p86, %p87
    %s90 = sadd.s32 %s89, 1
    %p93 = scmp.eq.s32.totalorder %s13, 1
    %p94 = scmp.ne.s32.totalorder %s89, %s91
    %p95 = scmp.eq.s32.totalorder %s13, 0
    %p96 = por %p94, %p95
    %p97 = scmp.ne.s32.totalorder %s89, %s91
    %p98 = scmp.eq.s32.totalorder %s18, 1
    %p99 = por %p97, %p98
    %p100 = scmp.ne.s32.totalorder %s91, %s92
    %p101 = scmp.eq.s32.totalorder %s18, 0
    %p102 = por %p100, %p101
    %p103 = scmp.ne.s32.totalorder %s91, %s92
    %p104 = scmp.eq.s32.totalorder %s19, 1
    %p105 = por %p103, %p104
    %p107 = scmp.ne.s32.totalorder %s92, %s106
    %p108 = scmp.eq.s32.totalorder %s19, 0
    %p109 = por %p107, %p108
    %s110 = ssub.s32 %s13, %s20
    %p111 = scmp.eq.s32.totalorder %s110, 0
    %s113 = sadd.s32 %s112, 1
    %s114 = scalar_select %p111, %s112, %s113
    %p117 = pneg %p111
    %p118 = scmp.eq.s32.totalorder %s13, 1
    %p119 = por %p117, %p118
    %p120 = scmp.ne.s32.totalorder %s112, %s115
    %p121 = scmp.eq.s32.totalorder %s13, 0
    %p122 = por %p120, %p121
    %p123 = scmp.ne.s32.totalorder %s112, %s115
    %p124 = scmp.eq.s32.totalorder %s18, 1
    %p125 = por %p123, %p124
    %p126 = scmp.ne.s32.totalorder %s115, %s116
    %p127 = scmp.eq.s32.totalorder %s18, 0
    %p128 = por %p126, %p127
    %p129 = scmp.ne.s32.totalorder %s115, %s116
    %p130 = scmp.eq.s32.totalorder %s19, 1
    %p131 = por %p129, %p130
    %p133 = scmp.ne.s32.totalorder %s116, %s132
    %p134 = scmp.eq.s32.totalorder %s19, 0
    %p135 = por %p133, %p134
    %s136 = ssub.s32 %s13, %s20
    %p137 = scmp.eq.s32.totalorder %s136, 0
    %s139 = sadd.s32 %s138, 1
    %s140 = scalar_select %p137, %s138, %s139
    %p143 = pneg %p137
    %p144 = scmp.eq.s32.totalorder %s13, 1
    %p145 = por %p143, %p144
    %p146 = scmp.ne.s32.totalorder %s138, %s141
    %p147 = scmp.eq.s32.totalorder %s13, 0
    %p148 = por %p146, %p147
    %p149 = scmp.ne.s32.totalorder %s138, %s141
    %p150 = scmp.eq.s32.totalorder %s18, 1
    %p151 = por %p149, %p150
    %p152 = scmp.ne.s32.totalorder %s141, %s142
    %p153 = scmp.eq.s32.totalorder %s18, 0
    %p154 = por %p152, %p153
    %p155 = scmp.ne.s32.totalorder %s141, %s142
    %p156 = scmp.eq.s32.totalorder %s19, 1
    %p157 = por %p155, %p156
    %p159 = scmp.ne.s32.totalorder %s142, %s158
    %p160 = scmp.eq.s32.totalorder %s19, 0
    %p161 = por %p159, %p160
    %s162 = ssub.s32 %s13, %s20
    %p163 = scmp.eq.s32.totalorder %s162, 0
    %s165 = sadd.s32 %s164, 1
    %s166 = scalar_select %p163, %s164, %s165
    %p169 = pneg %p163
    %p170 = scmp.eq.s32.totalorder %s13, 1
    %p171 = por %p169, %p170
    %p172 = scmp.ne.s32.totalorder %s164, %s167
    %p173 = scmp.eq.s32.totalorder %s13, 0
    %p174 = por %p172, %p173
    %p175 = scmp.ne.s32.totalorder %s164, %s167
    %p176 = scmp.eq.s32.totalorder %s18, 1
    %p177 = por %p175, %p176
    %p178 = scmp.ne.s32.totalorder %s167, %s168
    %p179 = scmp.eq.s32.totalorder %s18, 0
    %p180 = por %p178, %p179
    %p181 = scmp.ne.s32.totalorder %s167, %s168
    %p182 = scmp.eq.s32.totalorder %s19, 1
    %p183 = por %p181, %p182
    %p185 = scmp.ne.s32.totalorder %s168, %s184
    %p186 = scmp.eq.s32.totalorder %s19, 0
    %p187 = por %p185, %p186
    %p188 = scmp.le.s32.totalorder 1, %s13
    %p189 = scmp.lt.s32.totalorder %s13, 3
    %p190 = pnand %p188, %p189
    %p191 = pneg %p190
    // Predicated region
    $region9: #{bottleneck_forward.5} parent=5 // pred_check
      _
    $region10: #{bottleneck_forward.5} parent=5 // pred_check_branch
      %193 = sbr.rel (%p190) target = $region12
    $region11: #{bottleneck_forward.5} parent=5 // pred_region
      %s194 = ssub.s32 %s13, 1
      // Predicated region
      $region13: #{bottleneck_forward.5} parent=11 // pred_check
        %p195 = pneg %p60
      $region14: #{bottleneck_forward.5} parent=11 // pred_check_branch
        %197 = sbr.rel (%p195) target = $region16
      $region15: #{bottleneck_forward.5} parent=11 // pred_region
        _
      $region16: #{bottleneck_forward.5} parent=11 // pred_fallthru
        _
      // Predicated region
      $region17: #{bottleneck_forward.5} parent=11 // pred_check
        %p198 = pneg %p81
      $region18: #{bottleneck_forward.5} parent=11 // pred_check_branch
        %200 = sbr.rel (%p198) target = $region20
      $region19: #{bottleneck_forward.5} parent=11 // pred_region
        _
      $region20: #{bottleneck_forward.5} parent=11 // pred_fallthru
        _
      // Predicated region
      $region21: #{bottleneck_forward.5} parent=11 // pred_check
        %p201 = pneg %p102
      $region22: #{bottleneck_forward.5} parent=11 // pred_check_branch
        %203 = sbr.rel (%p201) target = $region24
      $region23: #{bottleneck_forward.5} parent=11 // pred_region
        _
      $region24: #{bottleneck_forward.5} parent=11 // pred_fallthru
        _
    $region12: #{bottleneck_forward.5} parent=5 // pred_fallthru
      _
    %p204 = scmp.lt.s32.totalorder %s13, 2
    // Predicated region
    $region25: #{bottleneck_forward.5} parent=5 // pred_check
      %p205 = pneg %p204
    $region26: #{bottleneck_forward.5} parent=5 // pred_check_branch
      %207 = sbr.rel (%p205) target = $region28
    $region27: #{bottleneck_forward.5} parent=5 // pred_region
      // Predicated region
      $region29: #{bottleneck_forward.5} parent=27 // pred_check
        %p208 = pneg %p33
      $region30: #{bottleneck_forward.5} parent=27 // pred_check_branch
        %210 = sbr.rel (%p208) target = $region32
      $region31: #{bottleneck_forward.5} parent=27 // pred_region
        %s211 = smul.u32 32, %s13
        %p212 = scmp.lt.s32.totalorder %s211, 63
        %s213 = scalar_select %p212, %s211, 63
        %s214 = smul.addr %s213, 8
        %s215 = scalar_lea.vmem %s0, %s214
        %s216 = smul.u32 32, %s13
      $region32: #{bottleneck_forward.5} parent=27 // pred_fallthru
        _
    $region28: #{bottleneck_forward.5} parent=5 // pred_fallthru
      _
    %p217 = scmp.le.s32.totalorder 1, %s13
    %p218 = scmp.lt.s32.totalorder %s13, 3
    %p219 = pnand %p217, %p218
    %p220 = pneg %p219
    // Predicated region
    $region33: #{bottleneck_forward.5} parent=5 // pred_check
      _
    $region34: #{bottleneck_forward.5} parent=5 // pred_check_branch
      %222 = sbr.rel (%p219) target = $region36
    $region35: #{bottleneck_forward.5} parent=5 // pred_region
      %s223 = ssub.s32 %s13, 1
      %s224 = smul.u32 32, %s18
      %p225 = scmp.lt.s32.totalorder %s224, 63
      %s226 = scalar_select %p225, %s224, 63
      %s227 = smul.addr %s226, 8
      %s228 = scalar_lea.vmem %s0, %s227
      %p229 = pneg %p39
      %p230 = pneg %p36
      %p231 = pneg %p60
      %p232 = pneg %p57
      %p233 = pneg %p81
      %p234 = pneg %p78
      %p235 = pneg %p102
      %p236 = pneg %p99
      %p237 = pneg %p128
      %p238 = pneg %p125
      %s239 = smul.u32 32, %s18
      %p240 = scmp.lt.s32.totalorder %s239, 63
      %s241 = scalar_select %p240, %s239, 63
      %s242 = smul.addr %s241, 8
      %s243 = scalar_lea.vmem %s4, %s242
      %p244 = pneg %p154
      %p245 = pneg %p151
      %p246 = scmp.lt.s32.totalorder %s18, 1
      %s247 = scalar_select %p246, %s18, 1
      %s248 = smul.addr %s247, 8
      %s249 = scalar_lea.vmem %s5, %s248
      %p250 = pneg %p180
      %p251 = pneg %p177
      %p252 = scmp.lt.s32.totalorder %s18, 1
      %s253 = scalar_select %p252, %s18, 1
      %s254 = smul.addr %s253, 8
      %s255 = scalar_lea.vmem %s6, %s254
      %s256 = smul.u32 32, %s18
      %p257 = scmp.lt.s32.totalorder %s256, 63
      %s258 = scalar_select %p257, %s256, 63
      %s259 = smul.addr %s258, 8
      %s260 = scalar_lea.vmem %s0, %s259
      %s261 = smul.u32 32, %s18
      %s262 = smul.u32 32, %s18
      %p263 = scmp.lt.s32.totalorder %s262, 63
      %s264 = scalar_select %p263, %s262, 63
      %s265 = smul.addr %s264, 8
      %s266 = scalar_lea.vmem %s4, %s265
      %s267 = smul.u32 32, %s18
      %p268 = scmp.lt.s32.totalorder %s18, 1
      %s269 = scalar_select %p268, %s18, 1
      %s270 = smul.addr %s269, 8
      %s271 = scalar_lea.vmem %s5, %s270
      %p272 = scmp.lt.s32.totalorder %s18, 1
      %s273 = scalar_select %p272, %s18, 1
      %s274 = smul.addr %s273, 8
      %s275 = scalar_lea.vmem %s6, %s274
      %vm276 = vcmask 31744
      %277 = vst.msk [vmem:[#allocation2] sm:$0xff] %vm276, 0.0
      %278 = vst.msk [vmem:[#allocation2 + $0x8] sm:$0xff] %vm276, 0.0
      %279 = vst.msk [vmem:[#allocation2 + $0x10] sm:$0xff] %vm276, 0.0
      %280 = vst.msk [vmem:[#allocation2 + $0x118] sm:$0xff] %vm276, 0.0
      %281 = vst.msk [vmem:[#allocation2 + $0x120] sm:$0xff] %vm276, 0.0
      %282 = vst.msk [vmem:[#allocation2 + $0x128] sm:$0xff] %vm276, 0.0
      %v283 = vld [vmem:[%s260] sm:$0xff]
      %v284 = vld [vmem:[%s260 + $0x8] sm:$0xff]
      %v285 = vld [vmem:[%s260 + $0x10] sm:$0xff]
      %v286 = vld [vmem:[%s260 + $0x18] sm:$0xff]
      %v287 = vld [vmem:[%s260 + $0x20] sm:$0xff]
      %v288 = vld [vmem:[%s260 + $0x28] sm:$0xff]
      %v289 = vld [vmem:[%s260 + $0x30] sm:$0xff]
      %v290 = vld [vmem:[%s260 + $0x38] sm:$0xff]
      %v291 = vld [vmem:[%s260 + $0x40] sm:$0xff]
      %v292 = vld [vmem:[%s260 + $0x48] sm:$0xff]
      %v293 = vld [vmem:[%s260 + $0x50] sm:$0xff]
      %v294 = vld [vmem:[%s260 + $0x58] sm:$0xff]
      %v295 = vld [vmem:[%s260 + $0x60] sm:$0xff]
      %v296 = vld [vmem:[%s260 + $0x68] sm:$0xff]
      %v297 = vld [vmem:[%s260 + $0x70] sm:$0xff]
      %v298 = vld [vmem:[%s260 + $0x78] sm:$0xff]
      %v299 = vld [vmem:[%s260 + $0x80] sm:$0xff]
      %v300 = vld [vmem:[%s260 + $0x88] sm:$0xff]
      %v301 = vld [vmem:[%s260 + $0x90] sm:$0xff]
      %v302 = vld [vmem:[%s260 + $0x98] sm:$0xff]
      %v303 = vld [vmem:[%s260 + $0xa0] sm:$0xff]
      %v304 = vld [vmem:[%s260 + $0xa8] sm:$0xff]
      %v305 = vld [vmem:[%s260 + $0xb0] sm:$0xff]
      %v306 = vld [vmem:[%s260 + $0xb8] sm:$0xff]
      %v307 = vld [vmem:[%s260 + $0xc0] sm:$0xff]
      %v308 = vld [vmem:[%s260 + $0xc8] sm:$0xff]
      %v309 = vld [vmem:[%s260 + $0xd0] sm:$0xff]
      %v310 = vld [vmem:[%s260 + $0xd8] sm:$0xff]
      %v311 = vld [vmem:[%s260 + $0xe0] sm:$0xff]
      %v312 = vld [vmem:[%s260 + $0xe8] sm:$0xff]
      %v313 = vld [vmem:[%s260 + $0xf0] sm:$0xff]
      %v314 = vld [vmem:[%s260 + $0xf8] sm:$0xff]
      %v315 = vld [vmem:[%s1] sm:$0x1]
      %v317 = vperm.slane %v315, 0
      %v319 = vmul.f32 %v283, %v317
      %v320 = vmul.f32 %v284, %v317
      %v321 = vmul.f32 %v285, %v317
      %v322 = vmul.f32 %v286, %v317
      %v323 = vmul.f32 %v287, %v317
      %v324 = vmul.f32 %v288, %v317
      %v325 = vmul.f32 %v289, %v317
      %v326 = vmul.f32 %v290, %v317
      %v327 = vmul.f32 %v291, %v317
      %v328 = vmul.f32 %v292, %v317
      %v329 = vmul.f32 %v293, %v317
      %v330 = vmul.f32 %v294, %v317
      %v331 = vmul.f32 %v295, %v317
      %v332 = vmul.f32 %v296, %v317
      %v333 = vmul.f32 %v297, %v317
      %v334 = vmul.f32 %v298, %v317
      %v335 = vmul.f32 %v299, %v317
      %v336 = vmul.f32 %v300, %v317
      %v337 = vmul.f32 %v301, %v317
      %v338 = vmul.f32 %v302, %v317
      %v339 = vmul.f32 %v303, %v317
      %v340 = vmul.f32 %v304, %v317
      %v341 = vmul.f32 %v305, %v317
      %v342 = vmul.f32 %v306, %v317
      %v343 = vmul.f32 %v307, %v317
      %v344 = vmul.f32 %v308, %v317
      %v345 = vmul.f32 %v309, %v317
      %v346 = vmul.f32 %v310, %v317
      %v347 = vmul.f32 %v311, %v317
      %v348 = vmul.f32 %v312, %v317
      %v349 = vmul.f32 %v313, %v317
      %v350 = vmul.f32 %v314, %v317
      %v351 = vld [vmem:[%s2] sm:$0x1]
      %v353 = vperm.slane %v351, 0
      %v355 = vadd.f32 %v319, %v353
      %v356 = vadd.f32 %v320, %v353
      %v357 = vadd.f32 %v321, %v353
      %v358 = vadd.f32 %v322, %v353
      %v359 = vadd.f32 %v323, %v353
      %v360 = vadd.f32 %v324, %v353
      %v361 = vadd.f32 %v325, %v353
      %v362 = vadd.f32 %v326, %v353
      %v363 = vadd.f32 %v327, %v353
      %v364 = vadd.f32 %v328, %v353
      %v365 = vadd.f32 %v329, %v353
      %v366 = vadd.f32 %v330, %v353
      %v367 = vadd.f32 %v331, %v353
      %v368 = vadd.f32 %v332, %v353
      %v369 = vadd.f32 %v333, %v353
      %v370 = vadd.f32 %v334, %v353
      %v371 = vadd.f32 %v335, %v353
      %v372 = vadd.f32 %v336, %v353
      %v373 = vadd.f32 %v337, %v353
      %v374 = vadd.f32 %v338, %v353
      %v375 = vadd.f32 %v339, %v353
      %v376 = vadd.f32 %v340, %v353
      %v377 = vadd.f32 %v341, %v353
      %v378 = vadd.f32 %v342, %v353
      %v379 = vadd.f32 %v343, %v353
      %v380 = vadd.f32 %v344, %v353
      %v381 = vadd.f32 %v345, %v353
      %v382 = vadd.f32 %v346, %v353
      %v383 = vadd.f32 %v347, %v353
      %v384 = vadd.f32 %v348, %v353
      %v385 = vadd.f32 %v349, %v353
      %v386 = vadd.f32 %v350, %v353
      %v387 = vmax.f32 %v355, 0.0
      %v388 = vmax.f32 %v356, 0.0
      %v389 = vmax.f32 %v357, 0.0
      %v390 = vmax.f32 %v358, 0.0
      %v391 = vmax.f32 %v359, 0.0
      %v392 = vmax.f32 %v360, 0.0
      %v393 = vmax.f32 %v361, 0.0
      %v394 = vmax.f32 %v362, 0.0
      %v395 = vmax.f32 %v363, 0.0
      %v396 = vmax.f32 %v364, 0.0
      %v397 = vmax.f32 %v365, 0.0
      %v398 = vmax.f32 %v366, 0.0
      %v399 = vmax.f32 %v367, 0.0
      %v400 = vmax.f32 %v368, 0.0
      %v401 = vmax.f32 %v369, 0.0
      %v402 = vmax.f32 %v370, 0.0
      %v403 = vmax.f32 %v371, 0.0
      %v404 = vmax.f32 %v372, 0.0
      %v405 = vmax.f32 %v373, 0.0
      %v406 = vmax.f32 %v374, 0.0
      %v407 = vmax.f32 %v375, 0.0
      %v408 = vmax.f32 %v376, 0.0
      %v409 = vmax.f32 %v377, 0.0
      %v410 = vmax.f32 %v378, 0.0
      %v411 = vmax.f32 %v379, 0.0
      %v412 = vmax.f32 %v380, 0.0
      %v413 = vmax.f32 %v381, 0.0
      %v414 = vmax.f32 %v382, 0.0
      %v415 = vmax.f32 %v383, 0.0
      %v416 = vmax.f32 %v384, 0.0
      %v417 = vmax.f32 %v385, 0.0
      %v418 = vmax.f32 %v386, 0.0
      %419 = vst.msk [vmem:[#allocation2 + $0x18] sm:$0xff] %vm276, %v387
      %420 = vst.msk [vmem:[#allocation2 + $0x20] sm:$0xff] %vm276, %v388
      %421 = vst.msk [vmem:[#allocation2 + $0x28] sm:$0xff] %vm276, %v389
      %422 = vst.msk [vmem:[#allocation2 + $0x30] sm:$0xff] %vm276, %v390
      %423 = vst.msk [vmem:[#allocation2 + $0x38] sm:$0xff] %vm276, %v391
      %424 = vst.msk [vmem:[#allocation2 + $0x40] sm:$0xff] %vm276, %v392
      %425 = vst.msk [vmem:[#allocation2 + $0x48] sm:$0xff] %vm276, %v393
      %426 = vst.msk [vmem:[#allocation2 + $0x50] sm:$0xff] %vm276, %v394
      %427 = vst.msk [vmem:[#allocation2 + $0x58] sm:$0xff] %vm276, %v395
      %428 = vst.msk [vmem:[#allocation2 + $0x60] sm:$0xff] %vm276, %v396
      %429 = vst.msk [vmem:[#allocation2 + $0x68] sm:$0xff] %vm276, %v397
      %430 = vst.msk [vmem:[#allocation2 + $0x70] sm:$0xff] %vm276, %v398
      %431 = vst.msk [vmem:[#allocation2 + $0x78] sm:$0xff] %vm276, %v399
      %432 = vst.msk [vmem:[#allocation2 + $0x80] sm:$0xff] %vm276, %v400
      %433 = vst.msk [vmem:[#allocation2 + $0x88] sm:$0xff] %vm276, %v401
      %434 = vst.msk [vmem:[#allocation2 + $0x90] sm:$0xff] %vm276, %v402
      %435 = vst.msk [vmem:[#allocation2 + $0x98] sm:$0xff] %vm276, %v403
      %436 = vst.msk [vmem:[#allocation2 + $0xa0] sm:$0xff] %vm276, %v404
      %437 = vst.msk [vmem:[#allocation2 + $0xa8] sm:$0xff] %vm276, %v405
      %438 = vst.msk [vmem:[#allocation2 + $0xb0] sm:$0xff] %vm276, %v406
      %439 = vst.msk [vmem:[#allocation2 + $0xb8] sm:$0xff] %vm276, %v407
      %440 = vst.msk [vmem:[#allocation2 + $0xc0] sm:$0xff] %vm276, %v408
      %441 = vst.msk [vmem:[#allocation2 + $0xc8] sm:$0xff] %vm276, %v409
      %442 = vst.msk [vmem:[#allocation2 + $0xd0] sm:$0xff] %vm276, %v410
      %443 = vst.msk [vmem:[#allocation2 + $0xd8] sm:$0xff] %vm276, %v411
      %444 = vst.msk [vmem:[#allocation2 + $0xe0] sm:$0xff] %vm276, %v412
      %445 = vst.msk [vmem:[#allocation2 + $0xe8] sm:$0xff] %vm276, %v413
      %446 = vst.msk [vmem:[#allocation2 + $0xf0] sm:$0xff] %vm276, %v414
      %447 = vst.msk [vmem:[#allocation2 + $0xf8] sm:$0xff] %vm276, %v415
      %448 = vst.msk [vmem:[#allocation2 + $0x100] sm:$0xff] %vm276, %v416
      %449 = vst.msk [vmem:[#allocation2 + $0x108] sm:$0xff] %vm276, %v417
      %450 = vst.msk [vmem:[#allocation2 + $0x110] sm:$0xff] %vm276, %v418
      %v451 = vlaneseq
      %v452 = vshrl.u32 %v451, 7
      %v453 = vadd.s32 %v452, 8
      %v454 = vadd.s32 %v452, 16
      %v455 = vadd.s32 %v452, 24
      %v456 = vadd.s32 %v452, 32
      %v457 = vadd.s32 %v452, 40
      %v458 = vadd.s32 %v452, 48
      %v459 = vadd.s32 %v452, 56
      %v460 = vadd.s32 %v452, 64
      %v461 = vadd.s32 %v452, 72
      %v462 = vadd.s32 %v452, 80
      %v463 = vadd.s32 %v452, 88
      %v464 = vadd.s32 %v452, 96
      %v465 = vadd.s32 %v452, 104
      %v466 = vadd.s32 %v452, 112
      %v467 = vadd.s32 %v452, 120
      %v468 = vadd.s32 %v452, 128
      %v469 = vadd.s32 %v452, 136
      %v470 = vadd.s32 %v452, 144
      %v471 = vadd.s32 %v452, 152
      %v472 = vadd.s32 %v452, 160
      %v473 = vadd.s32 %v452, 168
      %v474 = vadd.s32 %v452, 176
      %v475 = vadd.s32 %v452, 184
      %v476 = vadd.s32 %v452, 192
      %v477 = vadd.s32 %v452, 200
      %v478 = vadd.s32 %v452, 208
      %v479 = vadd.s32 %v452, 216
      %v480 = vadd.s32 %v452, 224
      %v481 = vadd.s32 %v452, 232
      %v482 = vadd.s32 %v452, 240
      %v483 = vadd.s32 %v452, 248
      %vm484 = vcmp.lt.s32.totalorder %v452, 0
      %v485 = vsub.s32 0, %v452
      %v486 = vsel %vm484, %v485, %v452
      %v487 = vshrl.u32 %v486, 4
      %v488 = vand.u32 %v486, 15
      %v489 = vsub.s32 0, %v488
      %v490 = vsel %vm484, %v489, %v488
      %vm491 = vcmp.lt.s32.totalorder %v453, 0
      %v492 = vsub.s32 0, %v453
      %v493 = vsel %vm491, %v492, %v453
      %v494 = vshrl.u32 %v493, 4
      %v495 = vand.u32 %v493, 15
      %v496 = vsub.s32 0, %v495
      %v497 = vsel %vm491, %v496, %v495
      %vm498 = vcmp.lt.s32.totalorder %v454, 0
      %v499 = vsub.s32 0, %v454
      %v500 = vsel %vm498, %v499, %v454
      %v501 = vshrl.u32 %v500, 4
      %v502 = vand.u32 %v500, 15
      %v503 = vsub.s32 0, %v502
      %v504 = vsel %vm498, %v503, %v502
      %vm505 = vcmp.lt.s32.totalorder %v455, 0
      %v506 = vsub.s32 0, %v455
      %v507 = vsel %vm505, %v506, %v455
      %v508 = vshrl.u32 %v507, 4
      %v509 = vand.u32 %v507, 15
      %v510 = vsub.s32 0, %v509
      %v511 = vsel %vm505, %v510, %v509
      %vm512 = vcmp.lt.s32.totalorder %v456, 0
      %v513 = vsub.s32 0, %v456
      %v514 = vsel %vm512, %v513, %v456
      %v515 = vshrl.u32 %v514, 4
      %v516 = vand.u32 %v514, 15
      %v517 = vsub.s32 0, %v516
      %v518 = vsel %vm512, %v517, %v516
      %vm519 = vcmp.lt.s32.totalorder %v457, 0
      %v520 = vsub.s32 0, %v457
      %v521 = vsel %vm519, %v520, %v457
      %v522 = vshrl.u32 %v521, 4
      %v523 = vand.u32 %v521, 15
      %v524 = vsub.s32 0, %v523
      %v525 = vsel %vm519, %v524, %v523
      %vm526 = vcmp.lt.s32.totalorder %v458, 0
      %v527 = vsub.s32 0, %v458
      %v528 = vsel %vm526, %v527, %v458
      %v529 = vshrl.u32 %v528, 4
      %v530 = vand.u32 %v528, 15
      %v531 = vsub.s32 0, %v530
      %v532 = vsel %vm526, %v531, %v530
      %vm533 = vcmp.lt.s32.totalorder %v459, 0
      %v534 = vsub.s32 0, %v459
      %v535 = vsel %vm533, %v534, %v459
      %v536 = vshrl.u32 %v535, 4
      %v537 = vand.u32 %v535, 15
      %v538 = vsub.s32 0, %v537
      %v539 = vsel %vm533, %v538, %v537
      %vm540 = vcmp.lt.s32.totalorder %v460, 0
      %v541 = vsub.s32 0, %v460
      %v542 = vsel %vm540, %v541, %v460
      %v543 = vshrl.u32 %v542, 4
      %v544 = vand.u32 %v542, 15
      %v545 = vsub.s32 0, %v544
      %v546 = vsel %vm540, %v545, %v544
      %vm547 = vcmp.lt.s32.totalorder %v461, 0
      %v548 = vsub.s32 0, %v461
      %v549 = vsel %vm547, %v548, %v461
      %v550 = vshrl.u32 %v549, 4
      %v551 = vand.u32 %v549, 15
      %v552 = vsub.s32 0, %v551
      %v553 = vsel %vm547, %v552, %v551
      %vm554 = vcmp.lt.s32.totalorder %v462, 0
      %v555 = vsub.s32 0, %v462
      %v556 = vsel %vm554, %v555, %v462
      %v557 = vshrl.u32 %v556, 4
      %v558 = vand.u32 %v556, 15
      %v559 = vsub.s32 0, %v558
      %v560 = vsel %vm554, %v559, %v558
      %vm561 = vcmp.lt.s32.totalorder %v463, 0
      %v562 = vsub.s32 0, %v463
      %v563 = vsel %vm561, %v562, %v463
      %v564 = vshrl.u32 %v563, 4
      %v565 = vand.u32 %v563, 15
      %v566 = vsub.s32 0, %v565
      %v567 = vsel %vm561, %v566, %v565
      %vm568 = vcmp.lt.s32.totalorder %v464, 0
      %v569 = vsub.s32 0, %v464
      %v570 = vsel %vm568, %v569, %v464
      %v571 = vshrl.u32 %v570, 4
      %v572 = vand.u32 %v570, 15
      %v573 = vsub.s32 0, %v572
      %v574 = vsel %vm568, %v573, %v572
      %vm575 = vcmp.lt.s32.totalorder %v465, 0
      %v576 = vsub.s32 0, %v465
      %v577 = vsel %vm575, %v576, %v465
      %v578 = vshrl.u32 %v577, 4
      %v579 = vand.u32 %v577, 15
      %v580 = vsub.s32 0, %v579
      %v581 = vsel %vm575, %v580, %v579
      %vm582 = vcmp.lt.s32.totalorder %v466, 0
      %v583 = vsub.s32 0, %v466
      %v584 = vsel %vm582, %v583, %v466
      %v585 = vshrl.u32 %v584, 4
      %v586 = vand.u32 %v584, 15
      %v587 = vsub.s32 0, %v586
      %v588 = vsel %vm582, %v587, %v586
      %vm589 = vcmp.lt.s32.totalorder %v467, 0
      %v590 = vsub.s32 0, %v467
      %v591 = vsel %vm589, %v590, %v467
      %v592 = vshrl.u32 %v591, 4
      %v593 = vand.u32 %v591, 15
      %v594 = vsub.s32 0, %v593
      %v595 = vsel %vm589, %v594, %v593
      %vm596 = vcmp.lt.s32.totalorder %v468, 0
      %v597 = vsub.s32 0, %v468
      %v598 = vsel %vm596, %v597, %v468
      %v599 = vshrl.u32 %v598, 4
      %v600 = vand.u32 %v598, 15
      %v601 = vsub.s32 0, %v600
      %v602 = vsel %vm596, %v601, %v600
      %vm603 = vcmp.lt.s32.totalorder %v469, 0
      %v604 = vsub.s32 0, %v469
      %v605 = vsel %vm603, %v604, %v469
      %v606 = vshrl.u32 %v605, 4
      %v607 = vand.u32 %v605, 15
      %v608 = vsub.s32 0, %v607
      %v609 = vsel %vm603, %v608, %v607
      %vm610 = vcmp.lt.s32.totalorder %v470, 0
      %v611 = vsub.s32 0, %v470
      %v612 = vsel %vm610, %v611, %v470
      %v613 = vshrl.u32 %v612, 4
      %v614 = vand.u32 %v612, 15
      %v615 = vsub.s32 0, %v614
      %v616 = vsel %vm610, %v615, %v614
      %vm617 = vcmp.lt.s32.totalorder %v471, 0
      %v618 = vsub.s32 0, %v471
      %v619 = vsel %vm617, %v618, %v471
      %v620 = vshrl.u32 %v619, 4
      %v621 = vand.u32 %v619, 15
      %v622 = vsub.s32 0, %v621
      %v623 = vsel %vm617, %v622, %v621
      %vm624 = vcmp.lt.s32.totalorder %v472, 0
      %v625 = vsub.s32 0, %v472
      %v626 = vsel %vm624, %v625, %v472
      %v627 = vshrl.u32 %v626, 4
      %v628 = vand.u32 %v626, 15
      %v629 = vsub.s32 0, %v628
      %v630 = vsel %vm624, %v629, %v628
      %vm631 = vcmp.lt.s32.totalorder %v473, 0
      %v632 = vsub.s32 0, %v473
      %v633 = vsel %vm631, %v632, %v473
      %v634 = vshrl.u32 %v633, 4
      %v635 = vand.u32 %v633, 15
      %v636 = vsub.s32 0, %v635
      %v637 = vsel %vm631, %v636, %v635
      %vm638 = vcmp.lt.s32.totalorder %v474, 0
      %v639 = vsub.s32 0, %v474
      %v640 = vsel %vm638, %v639, %v474
      %v641 = vshrl.u32 %v640, 4
      %v642 = vand.u32 %v640, 15
      %v643 = vsub.s32 0, %v642
      %v644 = vsel %vm638, %v643, %v642
      %vm645 = vcmp.lt.s32.totalorder %v475, 0
      %v646 = vsub.s32 0, %v475
      %v647 = vsel %vm645, %v646, %v475
      %v648 = vshrl.u32 %v647, 4
      %v649 = vand.u32 %v647, 15
      %v650 = vsub.s32 0, %v649
      %v651 = vsel %vm645, %v650, %v649
      %vm652 = vcmp.lt.s32.totalorder %v476, 0
      %v653 = vsub.s32 0, %v476
      %v654 = vsel %vm652, %v653, %v476
      %v655 = vshrl.u32 %v654, 4
      %v656 = vand.u32 %v654, 15
      %v657 = vsub.s32 0, %v656
      %v658 = vsel %vm652, %v657, %v656
      %vm659 = vcmp.lt.s32.totalorder %v477, 0
      %v660 = vsub.s32 0, %v477
      %v661 = vsel %vm659, %v660, %v477
      %v662 = vshrl.u32 %v661, 4
      %v663 = vand.u32 %v661, 15
      %v664 = vsub.s32 0, %v663
      %v665 = vsel %vm659, %v664, %v663
      %vm666 = vcmp.lt.s32.totalorder %v478, 0
      %v667 = vsub.s32 0, %v478
      %v668 = vsel %vm666, %v667, %v478
      %v669 = vshrl.u32 %v668, 4
      %v670 = vand.u32 %v668, 15
      %v671 = vsub.s32 0, %v670
      %v672 = vsel %vm666, %v671, %v670
      %vm673 = vcmp.lt.s32.totalorder %v479, 0
      %v674 = vsub.s32 0, %v479
      %v675 = vsel %vm673, %v674, %v479
      %v676 = vshrl.u32 %v675, 4
      %v677 = vand.u32 %v675, 15
      %v678 = vsub.s32 0, %v677
      %v679 = vsel %vm673, %v678, %v677
      %vm680 = vcmp.lt.s32.totalorder %v480, 0
      %v681 = vsub.s32 0, %v480
      %v682 = vsel %vm680, %v681, %v480
      %v683 = vshrl.u32 %v682, 4
      %v684 = vand.u32 %v682, 15
      %v685 = vsub.s32 0, %v684
      %v686 = vsel %vm680, %v685, %v684
      %vm687 = vcmp.lt.s32.totalorder %v481, 0
      %v688 = vsub.s32 0, %v481
      %v689 = vsel %vm687, %v688, %v481
      %v690 = vshrl.u32 %v689, 4
      %v691 = vand.u32 %v689, 15
      %v692 = vsub.s32 0, %v691
      %v693 = vsel %vm687, %v692, %v691
      %vm694 = vcmp.lt.s32.totalorder %v482, 0
      %v695 = vsub.s32 0, %v482
      %v696 = vsel %vm694, %v695, %v482
      %v697 = vshrl.u32 %v696, 4
      %v698 = vand.u32 %v696, 15
      %v699 = vsub.s32 0, %v698
      %v700 = vsel %vm694, %v699, %v698
      %vm701 = vcmp.lt.s32.totalorder %v483, 0
      %v702 = vsub.s32 0, %v483
      %v703 = vsel %vm701, %v702, %v483
      %v704 = vshrl.u32 %v703, 4
      %v705 = vand.u32 %v703, 15
      %v706 = vsub.s32 0, %v705
      %v707 = vsel %vm701, %v706, %v705
      %vm708 = vcmp.ne.s32.totalorder %v490, 0
      %vm709 = vcmp.ne.s32.totalorder %v497, 0
      %vm710 = vcmp.ne.s32.totalorder %v504, 0
      %vm711 = vcmp.ne.s32.totalorder %v511, 0
      %vm712 = vcmp.ne.s32.totalorder %v518, 0
      %vm713 = vcmp.ne.s32.totalorder %v525, 0
      %vm714 = vcmp.ne.s32.totalorder %v532, 0
      %vm715 = vcmp.ne.s32.totalorder %v539, 0
      %vm716 = vcmp.ne.s32.totalorder %v546, 0
      %vm717 = vcmp.ne.s32.totalorder %v553, 0
      %vm718 = vcmp.ne.s32.totalorder %v560, 0
      %vm719 = vcmp.ne.s32.totalorder %v567, 0
      %vm720 = vcmp.ne.s32.totalorder %v574, 0
      %vm721 = vcmp.ne.s32.totalorder %v581, 0
      %vm722 = vcmp.ne.s32.totalorder %v588, 0
      %vm723 = vcmp.ne.s32.totalorder %v595, 0
      %vm724 = vcmp.ne.s32.totalorder %v602, 0
      %vm725 = vcmp.ne.s32.totalorder %v609, 0
      %vm726 = vcmp.ne.s32.totalorder %v616, 0
      %vm727 = vcmp.ne.s32.totalorder %v623, 0
      %vm728 = vcmp.ne.s32.totalorder %v630, 0
      %vm729 = vcmp.ne.s32.totalorder %v637, 0
      %vm730 = vcmp.ne.s32.totalorder %v644, 0
      %vm731 = vcmp.ne.s32.totalorder %v651, 0
      %vm732 = vcmp.ne.s32.totalorder %v658, 0
      %vm733 = vcmp.ne.s32.totalorder %v665, 0
      %vm734 = vcmp.ne.s32.totalorder %v672, 0
      %vm735 = vcmp.ne.s32.totalorder %v679, 0
      %vm736 = vcmp.ne.s32.totalorder %v686, 0
      %vm737 = vcmp.ne.s32.totalorder %v693, 0
      %vm738 = vcmp.ne.s32.totalorder %v700, 0
      %vm739 = vcmp.ne.s32.totalorder %v707, 0
      %vm740 = vcmp.lt.s32.totalorder %v490, 0
      %vm741 = vcmp.lt.s32.totalorder %v497, 0
      %vm742 = vcmp.lt.s32.totalorder %v504, 0
      %vm743 = vcmp.lt.s32.totalorder %v511, 0
      %vm744 = vcmp.lt.s32.totalorder %v518, 0
      %vm745 = vcmp.lt.s32.totalorder %v525, 0
      %vm746 = vcmp.lt.s32.totalorder %v532, 0
      %vm747 = vcmp.lt.s32.totalorder %v539, 0
      %vm748 = vcmp.lt.s32.totalorder %v546, 0
      %vm749 = vcmp.lt.s32.totalorder %v553, 0
      %vm750 = vcmp.lt.s32.totalorder %v560, 0
      %vm751 = vcmp.lt.s32.totalorder %v567, 0
      %vm752 = vcmp.lt.s32.totalorder %v574, 0
      %vm753 = vcmp.lt.s32.totalorder %v581, 0
      %vm754 = vcmp.lt.s32.totalorder %v588, 0
      %vm755 = vcmp.lt.s32.totalorder %v595, 0
      %vm756 = vcmp.lt.s32.totalorder %v602, 0
      %vm757 = vcmp.lt.s32.totalorder %v609, 0
      %vm758 = vcmp.lt.s32.totalorder %v616, 0
      %vm759 = vcmp.lt.s32.totalorder %v623, 0
      %vm760 = vcmp.lt.s32.totalorder %v630, 0
      %vm761 = vcmp.lt.s32.totalorder %v637, 0
      %vm762 = vcmp.lt.s32.totalorder %v644, 0
      %vm763 = vcmp.lt.s32.totalorder %v651, 0
      %vm764 = vcmp.lt.s32.totalorder %v658, 0
      %vm765 = vcmp.lt.s32.totalorder %v665, 0
      %vm766 = vcmp.lt.s32.totalorder %v672, 0
      %vm767 = vcmp.lt.s32.totalorder %v679, 0
      %vm768 = vcmp.lt.s32.totalorder %v686, 0
      %vm769 = vcmp.lt.s32.totalorder %v693, 0
      %vm770 = vcmp.lt.s32.totalorder %v700, 0
      %vm771 = vcmp.lt.s32.totalorder %v707, 0
      %vm772 = vmand %vm740, %vm708
      %vm773 = vmand %vm741, %vm709
      %vm774 = vmand %vm742, %vm710
      %vm775 = vmand %vm743, %vm711
      %vm776 = vmand %vm744, %vm712
      %vm777 = vmand %vm745, %vm713
      %vm778 = vmand %vm746, %vm714
      %vm779 = vmand %vm747, %vm715
      %vm780 = vmand %vm748, %vm716
      %vm781 = vmand %vm749, %vm717
      %vm782 = vmand %vm750, %vm718
      %vm783 = vmand %vm751, %vm719
      %vm784 = vmand %vm752, %vm720
      %vm785 = vmand %vm753, %vm721
      %vm786 = vmand %vm754, %vm722
      %vm787 = vmand %vm755, %vm723
      %vm788 = vmand %vm756, %vm724
      %vm789 = vmand %vm757, %vm725
      %vm790 = vmand %vm758, %vm726
      %vm791 = vmand %vm759, %vm727
      %vm792 = vmand %vm760, %vm728
      %vm793 = vmand %vm761, %vm729
      %vm794 = vmand %vm762, %vm730
      %vm795 = vmand %vm763, %vm731
      %vm796 = vmand %vm764, %vm732
      %vm797 = vmand %vm765, %vm733
      %vm798 = vmand %vm766, %vm734
      %vm799 = vmand %vm767, %vm735
      %vm800 = vmand %vm768, %vm736
      %vm801 = vmand %vm769, %vm737
      %vm802 = vmand %vm770, %vm738
      %vm803 = vmand %vm771, %vm739
      %v804 = vadd.s32 %v490, 16
      %v805 = vadd.s32 %v497, 16
      %v806 = vadd.s32 %v504, 16
      %v807 = vadd.s32 %v511, 16
      %v808 = vadd.s32 %v518, 16
      %v809 = vadd.s32 %v525, 16
      %v810 = vadd.s32 %v532, 16
      %v811 = vadd.s32 %v539, 16
      %v812 = vadd.s32 %v546, 16
      %v813 = vadd.s32 %v553, 16
      %v814 = vadd.s32 %v560, 16
      %v815 = vadd.s32 %v567, 16
      %v816 = vadd.s32 %v574, 16
      %v817 = vadd.s32 %v581, 16
      %v818 = vadd.s32 %v588, 16
      %v819 = vadd.s32 %v595, 16
      %v820 = vadd.s32 %v602, 16
      %v821 = vadd.s32 %v609, 16
      %v822 = vadd.s32 %v616, 16
      %v823 = vadd.s32 %v623, 16
      %v824 = vadd.s32 %v630, 16
      %v825 = vadd.s32 %v637, 16
      %v826 = vadd.s32 %v644, 16
      %v827 = vadd.s32 %v651, 16
      %v828 = vadd.s32 %v658, 16
      %v829 = vadd.s32 %v665, 16
      %v830 = vadd.s32 %v672, 16
      %v831 = vadd.s32 %v679, 16
      %v832 = vadd.s32 %v686, 16
      %v833 = vadd.s32 %v693, 16
      %v834 = vadd.s32 %v700, 16
      %v835 = vadd.s32 %v707, 16
      %v836 = vsel %vm772, %v804, %v490
      %v837 = vsel %vm773, %v805, %v497
      %v838 = vsel %vm774, %v806, %v504
      %v839 = vsel %vm775, %v807, %v511
      %v840 = vsel %vm776, %v808, %v518
      %v841 = vsel %vm777, %v809, %v525
      %v842 = vsel %vm778, %v810, %v532
      %v843 = vsel %vm779, %v811, %v539
      %v844 = vsel %vm780, %v812, %v546
      %v845 = vsel %vm781, %v813, %v553
      %v846 = vsel %vm782, %v814, %v560
      %v847 = vsel %vm783, %v815, %v567
      %v848 = vsel %vm784, %v816, %v574
      %v849 = vsel %vm785, %v817, %v581
      %v850 = vsel %vm786, %v818, %v588
      %v851 = vsel %vm787, %v819, %v595
      %v852 = vsel %vm788, %v820, %v602
      %v853 = vsel %vm789, %v821, %v609
      %v854 = vsel %vm790, %v822, %v616
      %v855 = vsel %vm791, %v823, %v623
      %v856 = vsel %vm792, %v824, %v630
      %v857 = vsel %vm793, %v825, %v637
      %v858 = vsel %vm794, %v826, %v644
      %v859 = vsel %vm795, %v827, %v651
      %v860 = vsel %vm796, %v828, %v658
      %v861 = vsel %vm797, %v829, %v665
      %v862 = vsel %vm798, %v830, %v672
      %v863 = vsel %vm799, %v831, %v679
      %v864 = vsel %vm800, %v832, %v686
      %v865 = vsel %vm801, %v833, %v693
      %v866 = vsel %vm802, %v834, %v700
      %v867 = vsel %vm803, %v835, %v707
      %vm868 = vcmp.ge.s32.totalorder %v836, 1
      %vm869 = vcmp.ge.s32.totalorder %v837, 1
      %vm870 = vcmp.ge.s32.totalorder %v838, 1
      %vm871 = vcmp.ge.s32.totalorder %v839, 1
      %vm872 = vcmp.ge.s32.totalorder %v840, 1
      %vm873 = vcmp.ge.s32.totalorder %v841, 1
      %vm874 = vcmp.ge.s32.totalorder %v842, 1
      %vm875 = vcmp.ge.s32.totalorder %v843, 1
      %vm876 = vcmp.ge.s32.totalorder %v844, 1
      %vm877 = vcmp.ge.s32.totalorder %v845, 1
      %vm878 = vcmp.ge.s32.totalorder %v846, 1
      %vm879 = vcmp.ge.s32.totalorder %v847, 1
      %vm880 = vcmp.ge.s32.totalorder %v848, 1
      %vm881 = vcmp.ge.s32.totalorder %v849, 1
      %vm882 = vcmp.ge.s32.totalorder %v850, 1
      %vm883 = vcmp.ge.s32.totalorder %v851, 1
      %vm884 = vcmp.ge.s32.totalorder %v852, 1
      %vm885 = vcmp.ge.s32.totalorder %v853, 1
      %vm886 = vcmp.ge.s32.totalorder %v854, 1
      %vm887 = vcmp.ge.s32.totalorder %v855, 1
      %vm888 = vcmp.ge.s32.totalorder %v856, 1
      %vm889 = vcmp.ge.s32.totalorder %v857, 1
      %vm890 = vcmp.ge.s32.totalorder %v858, 1
      %vm891 = vcmp.ge.s32.totalorder %v859, 1
      %vm892 = vcmp.ge.s32.totalorder %v860, 1
      %vm893 = vcmp.ge.s32.totalorder %v861, 1
      %vm894 = vcmp.ge.s32.totalorder %v862, 1
      %vm895 = vcmp.ge.s32.totalorder %v863, 1
      %vm896 = vcmp.ge.s32.totalorder %v864, 1
      %vm897 = vcmp.ge.s32.totalorder %v865, 1
      %vm898 = vcmp.ge.s32.totalorder %v866, 1
      %vm899 = vcmp.ge.s32.totalorder %v867, 1
      %v900 = vsel %vm868, 1, 0
      %v901 = vsel %vm869, 1, 0
      %v902 = vsel %vm870, 1, 0
      %v903 = vsel %vm871, 1, 0
      %v904 = vsel %vm872, 1, 0
      %v905 = vsel %vm873, 1, 0
      %v906 = vsel %vm874, 1, 0
      %v907 = vsel %vm875, 1, 0
      %v908 = vsel %vm876, 1, 0
      %v909 = vsel %vm877, 1, 0
      %v910 = vsel %vm878, 1, 0
      %v911 = vsel %vm879, 1, 0
      %v912 = vsel %vm880, 1, 0
      %v913 = vsel %vm881, 1, 0
      %v914 = vsel %vm882, 1, 0
      %v915 = vsel %vm883, 1, 0
      %v916 = vsel %vm884, 1, 0
      %v917 = vsel %vm885, 1, 0
      %v918 = vsel %vm886, 1, 0
      %v919 = vsel %vm887, 1, 0
      %v920 = vsel %vm888, 1, 0
      %v921 = vsel %vm889, 1, 0
      %v922 = vsel %vm890, 1, 0
      %v923 = vsel %vm891, 1, 0
      %v924 = vsel %vm892, 1, 0
      %v925 = vsel %vm893, 1, 0
      %v926 = vsel %vm894, 1, 0
      %v927 = vsel %vm895, 1, 0
      %v928 = vsel %vm896, 1, 0
      %v929 = vsel %vm897, 1, 0
      %v930 = vsel %vm898, 1, 0
      %v931 = vsel %vm899, 1, 0
      %v932 = vcvt.s32.f32 %v900
      %v933 = vcvt.s32.f32 %v901
      %v934 = vcvt.s32.f32 %v902
      %v935 = vcvt.s32.f32 %v903
      %v936 = vcvt.s32.f32 %v904
      %v937 = vcvt.s32.f32 %v905
      %v938 = vcvt.s32.f32 %v906
      %v939 = vcvt.s32.f32 %v907
      %v940 = vcvt.s32.f32 %v908
      %v941 = vcvt.s32.f32 %v909
      %v942 = vcvt.s32.f32 %v910
      %v943 = vcvt.s32.f32 %v911
      %v944 = vcvt.s32.f32 %v912
      %v945 = vcvt.s32.f32 %v913
      %v946 = vcvt.s32.f32 %v914
      %v947 = vcvt.s32.f32 %v915
      %v948 = vcvt.s32.f32 %v916
      %v949 = vcvt.s32.f32 %v917
      %v950 = vcvt.s32.f32 %v918
      %v951 = vcvt.s32.f32 %v919
      %v952 = vcvt.s32.f32 %v920
      %v953 = vcvt.s32.f32 %v921
      %v954 = vcvt.s32.f32 %v922
      %v955 = vcvt.s32.f32 %v923
      %v956 = vcvt.s32.f32 %v924
      %v957 = vcvt.s32.f32 %v925
      %v958 = vcvt.s32.f32 %v926
      %v959 = vcvt.s32.f32 %v927
      %v960 = vcvt.s32.f32 %v928
      %v961 = vcvt.s32.f32 %v929
      %v962 = vcvt.s32.f32 %v930
      %v963 = vcvt.s32.f32 %v931
      %vm964 = vcmp.le.s32.totalorder %v836, 14
      %vm965 = vcmp.le.s32.totalorder %v837, 14
      %vm966 = vcmp.le.s32.totalorder %v838, 14
      %vm967 = vcmp.le.s32.totalorder %v839, 14
      %vm968 = vcmp.le.s32.totalorder %v840, 14
      %vm969 = vcmp.le.s32.totalorder %v841, 14
      %vm970 = vcmp.le.s32.totalorder %v842, 14
      %vm971 = vcmp.le.s32.totalorder %v843, 14
      %vm972 = vcmp.le.s32.totalorder %v844, 14
      %vm973 = vcmp.le.s32.totalorder %v845, 14
      %vm974 = vcmp.le.s32.totalorder %v846, 14
      %vm975 = vcmp.le.s32.totalorder %v847, 14
      %vm976 = vcmp.le.s32.totalorder %v848, 14
      %vm977 = vcmp.le.s32.totalorder %v849, 14
      %vm978 = vcmp.le.s32.totalorder %v850, 14
      %vm979 = vcmp.le.s32.totalorder %v851, 14
      %vm980 = vcmp.le.s32.totalorder %v852, 14
      %vm981 = vcmp.le.s32.totalorder %v853, 14
      %vm982 = vcmp.le.s32.totalorder %v854, 14
      %vm983 = vcmp.le.s32.totalorder %v855, 14
      %vm984 = vcmp.le.s32.totalorder %v856, 14
      %vm985 = vcmp.le.s32.totalorder %v857, 14
      %vm986 = vcmp.le.s32.totalorder %v858, 14
      %vm987 = vcmp.le.s32.totalorder %v859, 14
      %vm988 = vcmp.le.s32.totalorder %v860, 14
      %vm989 = vcmp.le.s32.totalorder %v861, 14
      %vm990 = vcmp.le.s32.totalorder %v862, 14
      %vm991 = vcmp.le.s32.totalorder %v863, 14
      %vm992 = vcmp.le.s32.totalorder %v864, 14
      %vm993 = vcmp.le.s32.totalorder %v865, 14
      %vm994 = vcmp.le.s32.totalorder %v866, 14
      %vm995 = vcmp.le.s32.totalorder %v867, 14
      %v996 = vsel %vm964, 1, 0
      %v997 = vsel %vm965, 1, 0
      %v998 = vsel %vm966, 1, 0
      %v999 = vsel %vm967, 1, 0
      %v1000 = vsel %vm968, 1, 0
      %v1001 = vsel %vm969, 1, 0
      %v1002 = vsel %vm970, 1, 0
      %v1003 = vsel %vm971, 1, 0
      %v1004 = vsel %vm972, 1, 0
      %v1005 = vsel %vm973, 1, 0
      %v1006 = vsel %vm974, 1, 0
      %v1007 = vsel %vm975, 1, 0
      %v1008 = vsel %vm976, 1, 0
      %v1009 = vsel %vm977, 1, 0
      %v1010 = vsel %vm978, 1, 0
      %v1011 = vsel %vm979, 1, 0
      %v1012 = vsel %vm980, 1, 0
      %v1013 = vsel %vm981, 1, 0
      %v1014 = vsel %vm982, 1, 0
      %v1015 = vsel %vm983, 1, 0
      %v1016 = vsel %vm984, 1, 0
      %v1017 = vsel %vm985, 1, 0
      %v1018 = vsel %vm986, 1, 0
      %v1019 = vsel %vm987, 1, 0
      %v1020 = vsel %vm988, 1, 0
      %v1021 = vsel %vm989, 1, 0
      %v1022 = vsel %vm990, 1, 0
      %v1023 = vsel %vm991, 1, 0
      %v1024 = vsel %vm992, 1, 0
      %v1025 = vsel %vm993, 1, 0
      %v1026 = vsel %vm994, 1, 0
      %v1027 = vsel %vm995, 1, 0
      %v1028 = vcvt.s32.f32 %v996
      %v1029 = vcvt.s32.f32 %v997
      %v1030 = vcvt.s32.f32 %v998
      %v1031 = vcvt.s32.f32 %v999
      %v1032 = vcvt.s32.f32 %v1000
      %v1033 = vcvt.s32.f32 %v1001
      %v1034 = vcvt.s32.f32 %v1002
      %v1035 = vcvt.s32.f32 %v1003
      %v1036 = vcvt.s32.f32 %v1004
      %v1037 = vcvt.s32.f32 %v1005
      %v1038 = vcvt.s32.f32 %v1006
      %v1039 = vcvt.s32.f32 %v1007
      %v1040 = vcvt.s32.f32 %v1008
      %v1041 = vcvt.s32.f32 %v1009
      %v1042 = vcvt.s32.f32 %v1010
      %v1043 = vcvt.s32.f32 %v1011
      %v1044 = vcvt.s32.f32 %v1012
      %v1045 = vcvt.s32.f32 %v1013
      %v1046 = vcvt.s32.f32 %v1014
      %v1047 = vcvt.s32.f32 %v1015
      %v1048 = vcvt.s32.f32 %v1016
      %v1049 = vcvt.s32.f32 %v1017
      %v1050 = vcvt.s32.f32 %v1018
      %v1051 = vcvt.s32.f32 %v1019
      %v1052 = vcvt.s32.f32 %v1020
      %v1053 = vcvt.s32.f32 %v1021
      %v1054 = vcvt.s32.f32 %v1022
      %v1055 = vcvt.s32.f32 %v1023
      %v1056 = vcvt.s32.f32 %v1024
      %v1057 = vcvt.s32.f32 %v1025
      %v1058 = vcvt.s32.f32 %v1026
      %v1059 = vcvt.s32.f32 %v1027
      %v1060 = vld [vmem:[#allocation2 + $0x7] sm:$0xff]
      %v1061 = vld [vmem:[#allocation2 + $0xf] sm:$0xff]
      %v1062 = vld [vmem:[#allocation2 + $0x17] sm:$0xff]
      %v1063 = vld [vmem:[#allocation2 + $0x1f] sm:$0xff]
      %v1064 = vld [vmem:[#allocation2 + $0x27] sm:$0xff]
      %v1065 = vld [vmem:[#allocation2 + $0x2f] sm:$0xff]
      %v1066 = vld [vmem:[#allocation2 + $0x37] sm:$0xff]
      %v1067 = vld [vmem:[#allocation2 + $0x3f] sm:$0xff]
      %v1068 = vld [vmem:[#allocation2 + $0x47] sm:$0xff]
      %v1069 = vld [vmem:[#allocation2 + $0x4f] sm:$0xff]
      %v1070 = vld [vmem:[#allocation2 + $0x57] sm:$0xff]
      %v1071 = vld [vmem:[#allocation2 + $0x5f] sm:$0xff]
      %v1072 = vld [vmem:[#allocation2 + $0x67] sm:$0xff]
      %v1073 = vld [vmem:[#allocation2 + $0x6f] sm:$0xff]
      %v1074 = vld [vmem:[#allocation2 + $0x77] sm:$0xff]
      %v1075 = vld [vmem:[#allocation2 + $0x7f] sm:$0xff]
      %v1076 = vld [vmem:[#allocation2 + $0x87] sm:$0xff]
      %v1077 = vld [vmem:[#allocation2 + $0x8f] sm:$0xff]
      %v1078 = vld [vmem:[#allocation2 + $0x97] sm:$0xff]
      %v1079 = vld [vmem:[#allocation2 + $0x9f] sm:$0xff]
      %v1080 = vld [vmem:[#allocation2 + $0xa7] sm:$0xff]
      %v1081 = vld [vmem:[#allocation2 + $0xaf] sm:$0xff]
      %v1082 = vld [vmem:[#allocation2 + $0xb7] sm:$0xff]
      %v1083 = vld [vmem:[#allocation2 + $0xbf] sm:$0xff]
      %v1084 = vld [vmem:[#allocation2 + $0xc7] sm:$0xff]
      %v1085 = vld [vmem:[#allocation2 + $0xcf] sm:$0xff]
      %v1086 = vld [vmem:[#allocation2 + $0xd7] sm:$0xff]
      %v1087 = vld [vmem:[#allocation2 + $0xdf] sm:$0xff]
      %v1088 = vld [vmem:[#allocation2 + $0xe7] sm:$0xff]
      %v1089 = vld [vmem:[#allocation2 + $0xef] sm:$0xff]
      %v1090 = vld [vmem:[#allocation2 + $0xf7] sm:$0xff]
      %v1091 = vld [vmem:[#allocation2 + $0xff] sm:$0xff]
      %v1092 = vmul.f32 %v1060, %v932
      %v1093 = vmul.f32 %v1061, %v933
      %v1094 = vmul.f32 %v1062, %v934
      %v1095 = vmul.f32 %v1063, %v935
      %v1096 = vmul.f32 %v1064, %v936
      %v1097 = vmul.f32 %v1065, %v937
      %v1098 = vmul.f32 %v1066, %v938
      %v1099 = vmul.f32 %v1067, %v939
      %v1100 = vmul.f32 %v1068, %v940
      %v1101 = vmul.f32 %v1069, %v941
      %v1102 = vmul.f32 %v1070, %v942
      %v1103 = vmul.f32 %v1071, %v943
      %v1104 = vmul.f32 %v1072, %v944
      %v1105 = vmul.f32 %v1073, %v945
      %v1106 = vmul.f32 %v1074, %v946
      %v1107 = vmul.f32 %v1075, %v947
      %v1108 = vmul.f32 %v1076, %v948
      %v1109 = vmul.f32 %v1077, %v949
      %v1110 = vmul.f32 %v1078, %v950
      %v1111 = vmul.f32 %v1079, %v951
      %v1112 = vmul.f32 %v1080, %v952
      %v1113 = vmul.f32 %v1081, %v953
      %v1114 = vmul.f32 %v1082, %v954
      %v1115 = vmul.f32 %v1083, %v955
      %v1116 = vmul.f32 %v1084, %v956
      %v1117 = vmul.f32 %v1085, %v957
      %v1118 = vmul.f32 %v1086, %v958
      %v1119 = vmul.f32 %v1087, %v959
      %v1120 = vmul.f32 %v1088, %v960
      %v1121 = vmul.f32 %v1089, %v961
      %v1122 = vmul.f32 %v1090, %v962
      %v1123 = vmul.f32 %v1091, %v963
      %v1124 = vld [vmem:[%s3] sm:$0xf]
      %v1125 = vld [vmem:[#allocation2 + $0x8] sm:$0xff]
      %v1126 = vld [vmem:[#allocation2 + $0x10] sm:$0xff]
      %v1127 = vld [vmem:[#allocation2 + $0x18] sm:$0xff]
      %v1128 = vld [vmem:[#allocation2 + $0x20] sm:$0xff]
      %v1129 = vld [vmem:[#allocation2 + $0x28] sm:$0xff]
      %v1130 = vld [vmem:[#allocation2 + $0x30] sm:$0xff]
      %v1131 = vld [vmem:[#allocation2 + $0x38] sm:$0xff]
      %v1132 = vld [vmem:[#allocation2 + $0x40] sm:$0xff]
      %v1133 = vld [vmem:[#allocation2 + $0x48] sm:$0xff]
      %v1134 = vld [vmem:[#allocation2 + $0x50] sm:$0xff]
      %v1135 = vld [vmem:[#allocation2 + $0x58] sm:$0xff]
      %v1136 = vld [vmem:[#allocation2 + $0x60] sm:$0xff]
      %v1137 = vld [vmem:[#allocation2 + $0x68] sm:$0xff]
      %v1138 = vld [vmem:[#allocation2 + $0x70] sm:$0xff]
      %v1139 = vld [vmem:[#allocation2 + $0x78] sm:$0xff]
      %v1140 = vld [vmem:[#allocation2 + $0x80] sm:$0xff]
      %v1141 = vld [vmem:[#allocation2 + $0x88] sm:$0xff]
      %v1142 = vld [vmem:[#allocation2 + $0x90] sm:$0xff]
      %v1143 = vld [vmem:[#allocation2 + $0x98] sm:$0xff]
      %v1144 = vld [vmem:[#allocation2 + $0xa0] sm:$0xff]
      %v1145 = vld [vmem:[#allocation2 + $0xa8] sm:$0xff]
      %v1146 = vld [vmem:[#allocation2 + $0xb0] sm:$0xff]
      %v1147 = vld [vmem:[#allocation2 + $0xb8] sm:$0xff]
      %v1148 = vld [vmem:[#allocation2 + $0xc0] sm:$0xff]
      %v1149 = vld [vmem:[#allocation2 + $0xc8] sm:$0xff]
      %v1150 = vld [vmem:[#allocation2 + $0xd0] sm:$0xff]
      %v1151 = vld [vmem:[#allocation2 + $0xd8] sm:$0xff]
      %v1152 = vld [vmem:[#allocation2 + $0xe0] sm:$0xff]
      %v1153 = vld [vmem:[#allocation2 + $0xe8] sm:$0xff]
      %v1154 = vld [vmem:[#allocation2 + $0xf0] sm:$0xff]
      %v1155 = vld [vmem:[#allocation2 + $0xf8] sm:$0xff]
      %v1156 = vld [vmem:[#allocation2 + $0x100] sm:$0xff]
      %s1157 = scalar_lea.vmem %s3, 4
      %v1158 = vld [vmem:[%s1157] sm:$0xf]
      %v1160 = vsel %vm276, %v1125, 0
      %v1163 = vsel %vm276, %v1126, 0
      %v1166 = vsel %vm276, %v1127, 0
      %v1169 = vsel %vm276, %v1128, 0
      %v1172 = vsel %vm276, %v1129, 0
      %v1175 = vsel %vm276, %v1130, 0
      %v1178 = vsel %vm276, %v1131, 0
      %v1181 = vsel %vm276, %v1132, 0
      %v1184 = vsel %vm276, %v1133, 0
      %v1187 = vsel %vm276, %v1134, 0
      %v1190 = vsel %vm276, %v1135, 0
      %v1193 = vsel %vm276, %v1136, 0
      %v1196 = vsel %vm276, %v1137, 0
      %v1199 = vsel %vm276, %v1138, 0
      %v1202 = vsel %vm276, %v1139, 0
      %v1205 = vsel %vm276, %v1140, 0
      %v1208 = vsel %vm276, %v1141, 0
      %v1211 = vsel %vm276, %v1142, 0
      %v1214 = vsel %vm276, %v1143, 0
      %v1217 = vsel %vm276, %v1144, 0
      %v1220 = vsel %vm276, %v1145, 0
      %v1223 = vsel %vm276, %v1146, 0
      %v1226 = vsel %vm276, %v1147, 0
      %v1229 = vsel %vm276, %v1148, 0
      %v1232 = vsel %vm276, %v1149, 0
      %v1235 = vsel %vm276, %v1150, 0
      %v1238 = vsel %vm276, %v1151, 0
      %v1241 = vsel %vm276, %v1152, 0
      %v1244 = vsel %vm276, %v1153, 0
      %v1247 = vsel %vm276, %v1154, 0
      %v1250 = vsel %vm276, %v1155, 0
      %v1253 = vsel %vm276, %v1156, 0
      %vm1255 = vcmask 1043456
      %v1257 = vsel %vm1255, %v1158, 0
      %1259 = vmatpush.msra.mxu0 0.0
      %1260 = vmatpush.msra.mxu0 0.0
      %1261 = vmatpush.msra.mxu0 0.0
      %1262 = vmatpush.msra.mxu0 0.0
      %1263 = vmatpush.msra.mxu0 0.0
      %1264 = vmatpush.msra.mxu0 0.0
      %1265 = vmatpush.msra.mxu0 0.0
      %1266 = vmatpush.msra.mxu0 0.0
      %1267 = vmatpush.msra.mxu0 0.0
      %1268 = vmatpush.msra.mxu0 0.0
      %1269 = vmatpush.msra.mxu0 0.0
      %1270 = vmatpush.msra.mxu0 0.0
      %1271 = vmatpush.msra.mxu0 0.0
      %1272 = vmatpush.msra.mxu0 0.0
      %1273 = vmatpush.msra.mxu0 0.0
      %1274 = vmatpush.msra.mxu0 %v1257
      %1275 = vmatmul.f32.gmra.mxu0 %v1160
      %v1276 = vpop.f32.mrf.mxu0
      %v1277 = vadd.f32 0.0, %v1276
      %1278 = vmatmul.f32.gmra.mxu0 %v1163
      %v1279 = vpop.f32.mrf.mxu0
      %v1280 = vadd.f32 0.0, %v1279
      %1281 = vmatmul.f32.gmra.mxu0 %v1166
      %v1282 = vpop.f32.mrf.mxu0
      %v1283 = vadd.f32 0.0, %v1282
      %1284 = vmatmul.f32.gmra.mxu0 %v1169
      %v1285 = vpop.f32.mrf.mxu0
      %v1286 = vadd.f32 0.0, %v1285
      %1287 = vmatmul.f32.gmra.mxu0 %v1172
      %v1288 = vpop.f32.mrf.mxu0
      %v1289 = vadd.f32 0.0, %v1288
      %1290 = vmatmul.f32.gmra.mxu0 %v1175
      %v1291 = vpop.f32.mrf.mxu0
      %v1292 = vadd.f32 0.0, %v1291
      %1293 = vmatmul.f32.gmra.mxu0 %v1178
      %v1294 = vpop.f32.mrf.mxu0
      %v1295 = vadd.f32 0.0, %v1294
      %1296 = vmatmul.f32.gmra.mxu0 %v1181
      %v1297 = vpop.f32.mrf.mxu0
      %v1298 = vadd.f32 0.0, %v1297
      %1299 = vmatmul.f32.gmra.mxu0 %v1184
      %v1300 = vpop.f32.mrf.mxu0
      %v1301 = vadd.f32 0.0, %v1300
      %1302 = vmatmul.f32.gmra.mxu0 %v1187
      %v1303 = vpop.f32.mrf.mxu0
      %v1304 = vadd.f32 0.0, %v1303
      %1305 = vmatmul.f32.gmra.mxu0 %v1190
      %v1306 = vpop.f32.mrf.mxu0
      %v1307 = vadd.f32 0.0, %v1306
      %1308 = vmatmul.f32.gmra.mxu0 %v1193
      %v1309 = vpop.f32.mrf.mxu0
      %v1310 = vadd.f32 0.0, %v1309
      %1311 = vmatmul.f32.gmra.mxu0 %v1196
      %v1312 = vpop.f32.mrf.mxu0
      %v1313 = vadd.f32 0.0, %v1312
      %1314 = vmatmul.f32.gmra.mxu0 %v1199
      %v1315 = vpop.f32.mrf.mxu0
      %v1316 = vadd.f32 0.0, %v1315
      %1317 = vmatmul.f32.gmra.mxu0 %v1202
      %v1318 = vpop.f32.mrf.mxu0
      %v1319 = vadd.f32 0.0, %v1318
      %1320 = vmatmul.f32.gmra.mxu0 %v1205
      %v1321 = vpop.f32.mrf.mxu0
      %v1322 = vadd.f32 0.0, %v1321
      %1323 = vmatmul.f32.gmra.mxu0 %v1208
      %v1324 = vpop.f32.mrf.mxu0
      %v1325 = vadd.f32 0.0, %v1324
      %1326 = vmatmul.f32.gmra.mxu0 %v1211
      %v1327 = vpop.f32.mrf.mxu0
      %v1328 = vadd.f32 0.0, %v1327
      %1329 = vmatmul.f32.gmra.mxu0 %v1214
      %v1330 = vpop.f32.mrf.mxu0
      %v1331 = vadd.f32 0.0, %v1330
      %1332 = vmatmul.f32.gmra.mxu0 %v1217
      %v1333 = vpop.f32.mrf.mxu0
      %v1334 = vadd.f32 0.0, %v1333
      %1335 = vmatmul.f32.gmra.mxu0 %v1220
      %v1336 = vpop.f32.mrf.mxu0
      %v1337 = vadd.f32 0.0, %v1336
      %1338 = vmatmul.f32.gmra.mxu0 %v1223
      %v1339 = vpop.f32.mrf.mxu0
      %v1340 = vadd.f32 0.0, %v1339
      %1341 = vmatmul.f32.gmra.mxu0 %v1226
      %v1342 = vpop.f32.mrf.mxu0
      %v1343 = vadd.f32 0.0, %v1342
      %1344 = vmatmul.f32.gmra.mxu0 %v1229
      %v1345 = vpop.f32.mrf.mxu0
      %v1346 = vadd.f32 0.0, %v1345
      %1347 = vmatmul.f32.gmra.mxu0 %v1232
      %v1348 = vpop.f32.mrf.mxu0
      %v1349 = vadd.f32 0.0, %v1348
      %1350 = vmatmul.f32.gmra.mxu0 %v1235
      %v1351 = vpop.f32.mrf.mxu0
      %v1352 = vadd.f32 0.0, %v1351
      %1353 = vmatmul.f32.gmra.mxu0 %v1238
      %v1354 = vpop.f32.mrf.mxu0
      %v1355 = vadd.f32 0.0, %v1354
      %1356 = vmatmul.f32.gmra.mxu0 %v1241
      %v1357 = vpop.f32.mrf.mxu0
      %v1358 = vadd.f32 0.0, %v1357
      %1359 = vmatmul.f32.gmra.mxu0 %v1244
      %v1360 = vpop.f32.mrf.mxu0
      %v1361 = vadd.f32 0.0, %v1360
      %1362 = vmatmul.f32.gmra.mxu0 %v1247
      %v1363 = vpop.f32.mrf.mxu0
      %v1364 = vadd.f32 0.0, %v1363
      %1365 = vmatmul.f32.gmra.mxu0 %v1250
      %v1366 = vpop.f32.mrf.mxu0
      %v1367 = vadd.f32 0.0, %v1366
      %1368 = vmatmul.f32.gmra.mxu0 %v1253
      %v1369 = vpop.f32.mrf.mxu0
      %v1370 = vadd.f32 0.0, %v1369
      %1371 = vdwg.mxu0
      %v1373 = vsel %vm276, %v1092, 0
      %v1376 = vsel %vm276, %v1093, 0
      %v1379 = vsel %vm276, %v1094, 0
      %v1382 = vsel %vm276, %v1095, 0
      %v1385 = vsel %vm276, %v1096, 0
      %v1388 = vsel %vm276, %v1097, 0
      %v1391 = vsel %vm276, %v1098, 0
      %v1394 = vsel %vm276, %v1099, 0
      %v1397 = vsel %vm276, %v1100, 0
      %v1400 = vsel %vm276, %v1101, 0
      %v1403 = vsel %vm276, %v1102, 0
      %v1406 = vsel %vm276, %v1103, 0
      %v1409 = vsel %vm276, %v1104, 0
      %v1412 = vsel %vm276, %v1105, 0
      %v1415 = vsel %vm276, %v1106, 0
      %v1418 = vsel %vm276, %v1107, 0
      %v1421 = vsel %vm276, %v1108, 0
      %v1424 = vsel %vm276, %v1109, 0
      %v1427 = vsel %vm276, %v1110, 0
      %v1430 = vsel %vm276, %v1111, 0
      %v1433 = vsel %vm276, %v1112, 0
      %v1436 = vsel %vm276, %v1113, 0
      %v1439 = vsel %vm276, %v1114, 0
      %v1442 = vsel %vm276, %v1115, 0
      %v1445 = vsel %vm276, %v1116, 0
      %v1448 = vsel %vm276, %v1117, 0
      %v1451 = vsel %vm276, %v1118, 0
      %v1454 = vsel %vm276, %v1119, 0
      %v1457 = vsel %vm276, %v1120, 0
      %v1460 = vsel %vm276, %v1121, 0
      %v1463 = vsel %vm276, %v1122, 0
      %v1466 = vsel %vm276, %v1123, 0
      %v1469 = vsel %vm1255, %v1124, 0
      %1471 = vmatpush.msra.mxu0 0.0
      %1472 = vmatpush.msra.mxu0 0.0
      %1473 = vmatpush.msra.mxu0 0.0
      %1474 = vmatpush.msra.mxu0 0.0
      %1475 = vmatpush.msra.mxu0 0.0
      %1476 = vmatpush.msra.mxu0 0.0
      %1477 = vmatpush.msra.mxu0 0.0
      %1478 = vmatpush.msra.mxu0 0.0
      %1479 = vmatpush.msra.mxu0 0.0
      %1480 = vmatpush.msra.mxu0 0.0
      %1481 = vmatpush.msra.mxu0 0.0
      %1482 = vmatpush.msra.mxu0 0.0
      %1483 = vmatpush.msra.mxu0 0.0
      %1484 = vmatpush.msra.mxu0 0.0
      %1485 = vmatpush.msra.mxu0 0.0
      %1486 = vmatpush.msra.mxu0 %v1469
      %1487 = vmatmul.f32.gmra.mxu0 %v1373
      %v1488 = vpop.f32.mrf.mxu0
      %v1489 = vadd.f32 %v1277, %v1488
      %1490 = vmatmul.f32.gmra.mxu0 %v1376
      %v1491 = vpop.f32.mrf.mxu0
      %v1492 = vadd.f32 %v1280, %v1491
      %1493 = vmatmul.f32.gmra.mxu0 %v1379
      %v1494 = vpop.f32.mrf.mxu0
      %v1495 = vadd.f32 %v1283, %v1494
      %1496 = vmatmul.f32.gmra.mxu0 %v1382
      %v1497 = vpop.f32.mrf.mxu0
      %v1498 = vadd.f32 %v1286, %v1497
      %1499 = vmatmul.f32.gmra.mxu0 %v1385
      %v1500 = vpop.f32.mrf.mxu0
      %v1501 = vadd.f32 %v1289, %v1500
      %1502 = vmatmul.f32.gmra.mxu0 %v1388
      %v1503 = vpop.f32.mrf.mxu0
      %v1504 = vadd.f32 %v1292, %v1503
      %1505 = vmatmul.f32.gmra.mxu0 %v1391
      %v1506 = vpop.f32.mrf.mxu0
      %v1507 = vadd.f32 %v1295, %v1506
      %1508 = vmatmul.f32.gmra.mxu0 %v1394
      %v1509 = vpop.f32.mrf.mxu0
      %v1510 = vadd.f32 %v1298, %v1509
      %1511 = vmatmul.f32.gmra.mxu0 %v1397
      %v1512 = vpop.f32.mrf.mxu0
      %v1513 = vadd.f32 %v1301, %v1512
      %1514 = vmatmul.f32.gmra.mxu0 %v1400
      %v1515 = vpop.f32.mrf.mxu0
      %v1516 = vadd.f32 %v1304, %v1515
      %1517 = vmatmul.f32.gmra.mxu0 %v1403
      %v1518 = vpop.f32.mrf.mxu0
      %v1519 = vadd.f32 %v1307, %v1518
      %1520 = vmatmul.f32.gmra.mxu0 %v1406
      %v1521 = vpop.f32.mrf.mxu0
      %v1522 = vadd.f32 %v1310, %v1521
      %1523 = vmatmul.f32.gmra.mxu0 %v1409
      %v1524 = vpop.f32.mrf.mxu0
      %v1525 = vadd.f32 %v1313, %v1524
      %1526 = vmatmul.f32.gmra.mxu0 %v1412
      %v1527 = vpop.f32.mrf.mxu0
      %v1528 = vadd.f32 %v1316, %v1527
      %1529 = vmatmul.f32.gmra.mxu0 %v1415
      %v1530 = vpop.f32.mrf.mxu0
      %v1531 = vadd.f32 %v1319, %v1530
      %1532 = vmatmul.f32.gmra.mxu0 %v1418
      %v1533 = vpop.f32.mrf.mxu0
      %v1534 = vadd.f32 %v1322, %v1533
      %1535 = vmatmul.f32.gmra.mxu0 %v1421
      %v1536 = vpop.f32.mrf.mxu0
      %v1537 = vadd.f32 %v1325, %v1536
      %1538 = vmatmul.f32.gmra.mxu0 %v1424
      %v1539 = vpop.f32.mrf.mxu0
      %v1540 = vadd.f32 %v1328, %v1539
      %1541 = vmatmul.f32.gmra.mxu0 %v1427
      %v1542 = vpop.f32.mrf.mxu0
      %v1543 = vadd.f32 %v1331, %v1542
      %1544 = vmatmul.f32.gmra.mxu0 %v1430
      %v1545 = vpop.f32.mrf.mxu0
      %v1546 = vadd.f32 %v1334, %v1545
      %1547 = vmatmul.f32.gmra.mxu0 %v1433
      %v1548 = vpop.f32.mrf.mxu0
      %v1549 = vadd.f32 %v1337, %v1548
      %1550 = vmatmul.f32.gmra.mxu0 %v1436
      %v1551 = vpop.f32.mrf.mxu0
      %v1552 = vadd.f32 %v1340, %v1551
      %1553 = vmatmul.f32.gmra.mxu0 %v1439
      %v1554 = vpop.f32.mrf.mxu0
      %v1555 = vadd.f32 %v1343, %v1554
      %1556 = vmatmul.f32.gmra.mxu0 %v1442
      %v1557 = vpop.f32.mrf.mxu0
      %v1558 = vadd.f32 %v1346, %v1557
      %1559 = vmatmul.f32.gmra.mxu0 %v1445
      %v1560 = vpop.f32.mrf.mxu0
      %v1561 = vadd.f32 %v1349, %v1560
      %1562 = vmatmul.f32.gmra.mxu0 %v1448
      %v1563 = vpop.f32.mrf.mxu0
      %v1564 = vadd.f32 %v1352, %v1563
      %1565 = vmatmul.f32.gmra.mxu0 %v1451
      %v1566 = vpop.f32.mrf.mxu0
      %v1567 = vadd.f32 %v1355, %v1566
      %1568 = vmatmul.f32.gmra.mxu0 %v1454
      %v1569 = vpop.f32.mrf.mxu0
      %v1570 = vadd.f32 %v1358, %v1569
      %1571 = vmatmul.f32.gmra.mxu0 %v1457
      %v1572 = vpop.f32.mrf.mxu0
      %v1573 = vadd.f32 %v1361, %v1572
      %1574 = vmatmul.f32.gmra.mxu0 %v1460
      %v1575 = vpop.f32.mrf.mxu0
      %v1576 = vadd.f32 %v1364, %v1575
      %1577 = vmatmul.f32.gmra.mxu0 %v1463
      %v1578 = vpop.f32.mrf.mxu0
      %v1579 = vadd.f32 %v1367, %v1578
      %1580 = vmatmul.f32.gmra.mxu0 %v1466
      %v1581 = vpop.f32.mrf.mxu0
      %v1582 = vadd.f32 %v1370, %v1581
      %1583 = vdwg.mxu0
      %v1584 = vld [vmem:[#allocation2 + $0x9] sm:$0xff]
      %v1585 = vld [vmem:[#allocation2 + $0x11] sm:$0xff]
      %v1586 = vld [vmem:[#allocation2 + $0x19] sm:$0xff]
      %v1587 = vld [vmem:[#allocation2 + $0x21] sm:$0xff]
      %v1588 = vld [vmem:[#allocation2 + $0x29] sm:$0xff]
      %v1589 = vld [vmem:[#allocation2 + $0x31] sm:$0xff]
      %v1590 = vld [vmem:[#allocation2 + $0x39] sm:$0xff]
      %v1591 = vld [vmem:[#allocation2 + $0x41] sm:$0xff]
      %v1592 = vld [vmem:[#allocation2 + $0x49] sm:$0xff]
      %v1593 = vld [vmem:[#allocation2 + $0x51] sm:$0xff]
      %v1594 = vld [vmem:[#allocation2 + $0x59] sm:$0xff]
      %v1595 = vld [vmem:[#allocation2 + $0x61] sm:$0xff]
      %v1596 = vld [vmem:[#allocation2 + $0x69] sm:$0xff]
      %v1597 = vld [vmem:[#allocation2 + $0x71] sm:$0xff]
      %v1598 = vld [vmem:[#allocation2 + $0x79] sm:$0xff]
      %v1599 = vld [vmem:[#allocation2 + $0x81] sm:$0xff]
      %v1600 = vld [vmem:[#allocation2 + $0x89] sm:$0xff]
      %v1601 = vld [vmem:[#allocation2 + $0x91] sm:$0xff]
      %v1602 = vld [vmem:[#allocation2 + $0x99] sm:$0xff]
      %v1603 = vld [vmem:[#allocation2 + $0xa1] sm:$0xff]
      %v1604 = vld [vmem:[#allocation2 + $0xa9] sm:$0xff]
      %v1605 = vld [vmem:[#allocation2 + $0xb1] sm:$0xff]
      %v1606 = vld [vmem:[#allocation2 + $0xb9] sm:$0xff]
      %v1607 = vld [vmem:[#allocation2 + $0xc1] sm:$0xff]
      %v1608 = vld [vmem:[#allocation2 + $0xc9] sm:$0xff]
      %v1609 = vld [vmem:[#allocation2 + $0xd1] sm:$0xff]
      %v1610 = vld [vmem:[#allocation2 + $0xd9] sm:$0xff]
      %v1611 = vld [vmem:[#allocation2 + $0xe1] sm:$0xff]
      %v1612 = vld [vmem:[#allocation2 + $0xe9] sm:$0xff]
      %v1613 = vld [vmem:[#allocation2 + $0xf1] sm:$0xff]
      %v1614 = vld [vmem:[#allocation2 + $0xf9] sm:$0xff]
      %v1615 = vld [vmem:[#allocation2 + $0x101] sm:$0xff]
      %v1616 = vmul.f32 %v1584, %v1028
      %v1617 = vmul.f32 %v1585, %v1029
      %v1618 = vmul.f32 %v1586, %v1030
      %v1619 = vmul.f32 %v1587, %v1031
      %v1620 = vmul.f32 %v1588, %v1032
      %v1621 = vmul.f32 %v1589, %v1033
      %v1622 = vmul.f32 %v1590, %v1034
      %v1623 = vmul.f32 %v1591, %v1035
      %v1624 = vmul.f32 %v1592, %v1036
      %v1625 = vmul.f32 %v1593, %v1037
      %v1626 = vmul.f32 %v1594, %v1038
      %v1627 = vmul.f32 %v1595, %v1039
      %v1628 = vmul.f32 %v1596, %v1040
      %v1629 = vmul.f32 %v1597, %v1041
      %v1630 = vmul.f32 %v1598, %v1042
      %v1631 = vmul.f32 %v1599, %v1043
      %v1632 = vmul.f32 %v1600, %v1044
      %v1633 = vmul.f32 %v1601, %v1045
      %v1634 = vmul.f32 %v1602, %v1046
      %v1635 = vmul.f32 %v1603, %v1047
      %v1636 = vmul.f32 %v1604, %v1048
      %v1637 = vmul.f32 %v1605, %v1049
      %v1638 = vmul.f32 %v1606, %v1050
      %v1639 = vmul.f32 %v1607, %v1051
      %v1640 = vmul.f32 %v1608, %v1052
      %v1641 = vmul.f32 %v1609, %v1053
      %v1642 = vmul.f32 %v1610, %v1054
      %v1643 = vmul.f32 %v1611, %v1055
      %v1644 = vmul.f32 %v1612, %v1056
      %v1645 = vmul.f32 %v1613, %v1057
      %v1646 = vmul.f32 %v1614, %v1058
      %v1647 = vmul.f32 %v1615, %v1059
      %s1648 = scalar_lea.vmem %s3, 8
      %v1649 = vld [vmem:[%s1648] sm:$0xf]
      %v1651 = vsel %vm276, %v1616, 0
      %v1654 = vsel %vm276, %v1617, 0
      %v1657 = vsel %vm276, %v1618, 0
      %v1660 = vsel %vm276, %v1619, 0
      %v1663 = vsel %vm276, %v1620, 0
      %v1666 = vsel %vm276, %v1621, 0
      %v1669 = vsel %vm276, %v1622, 0
      %v1672 = vsel %vm276, %v1623, 0
      %v1675 = vsel %vm276, %v1624, 0
      %v1678 = vsel %vm276, %v1625, 0
      %v1681 = vsel %vm276, %v1626, 0
      %v1684 = vsel %vm276, %v1627, 0
      %v1687 = vsel %vm276, %v1628, 0
      %v1690 = vsel %vm276, %v1629, 0
      %v1693 = vsel %vm276, %v1630, 0
      %v1696 = vsel %vm276, %v1631, 0
      %v1699 = vsel %vm276, %v1632, 0
      %v1702 = vsel %vm276, %v1633, 0
      %v1705 = vsel %vm276, %v1634, 0
      %v1708 = vsel %vm276, %v1635, 0
      %v1711 = vsel %vm276, %v1636, 0
      %v1714 = vsel %vm276, %v1637, 0
      %v1717 = vsel %vm276, %v1638, 0
      %v1720 = vsel %vm276, %v1639, 0
      %v1723 = vsel %vm276, %v1640, 0
      %v1726 = vsel %vm276, %v1641, 0
      %v1729 = vsel %vm276, %v1642, 0
      %v1732 = vsel %vm276, %v1643, 0
      %v1735 = vsel %vm276, %v1644, 0
      %v1738 = vsel %vm276, %v1645, 0
      %v1741 = vsel %vm276, %v1646, 0
      %v1744 = vsel %vm276, %v1647, 0
      %v1747 = vsel %vm1255, %v1649, 0
      %1749 = vmatpush.msra.mxu0 0.0
      %1750 = vmatpush.msra.mxu0 0.0
      %1751 = vmatpush.msra.mxu0 0.0
      %1752 = vmatpush.msra.mxu0 0.0
      %1753 = vmatpush.msra.mxu0 0.0
      %1754 = vmatpush.msra.mxu0 0.0
      %1755 = vmatpush.msra.mxu0 0.0
      %1756 = vmatpush.msra.mxu0 0.0
      %1757 = vmatpush.msra.mxu0 0.0
      %1758 = vmatpush.msra.mxu0 0.0
      %1759 = vmatpush.msra.mxu0 0.0
      %1760 = vmatpush.msra.mxu0 0.0
      %1761 = vmatpush.msra.mxu0 0.0
      %1762 = vmatpush.msra.mxu0 0.0
      %1763 = vmatpush.msra.mxu0 0.0
      %1764 = vmatpush.msra.mxu0 %v1747
      %1765 = vmatmul.f32.gmra.mxu0 %v1651
      %v1766 = vpop.f32.mrf.mxu0
      %v1767 = vadd.f32 0.0, %v1766
      %1768 = vmatmul.f32.gmra.mxu0 %v1654
      %v1769 = vpop.f32.mrf.mxu0
      %v1770 = vadd.f32 0.0, %v1769
      %1771 = vmatmul.f32.gmra.mxu0 %v1657
      %v1772 = vpop.f32.mrf.mxu0
      %v1773 = vadd.f32 0.0, %v1772
      %1774 = vmatmul.f32.gmra.mxu0 %v1660
      %v1775 = vpop.f32.mrf.mxu0
      %v1776 = vadd.f32 0.0, %v1775
      %1777 = vmatmul.f32.gmra.mxu0 %v1663
      %v1778 = vpop.f32.mrf.mxu0
      %v1779 = vadd.f32 0.0, %v1778
      %1780 = vmatmul.f32.gmra.mxu0 %v1666
      %v1781 = vpop.f32.mrf.mxu0
      %v1782 = vadd.f32 0.0, %v1781
      %1783 = vmatmul.f32.gmra.mxu0 %v1669
      %v1784 = vpop.f32.mrf.mxu0
      %v1785 = vadd.f32 0.0, %v1784
      %1786 = vmatmul.f32.gmra.mxu0 %v1672
      %v1787 = vpop.f32.mrf.mxu0
      %v1788 = vadd.f32 0.0, %v1787
      %1789 = vmatmul.f32.gmra.mxu0 %v1675
      %v1790 = vpop.f32.mrf.mxu0
      %v1791 = vadd.f32 0.0, %v1790
      %1792 = vmatmul.f32.gmra.mxu0 %v1678
      %v1793 = vpop.f32.mrf.mxu0
      %v1794 = vadd.f32 0.0, %v1793
      %1795 = vmatmul.f32.gmra.mxu0 %v1681
      %v1796 = vpop.f32.mrf.mxu0
      %v1797 = vadd.f32 0.0, %v1796
      %1798 = vmatmul.f32.gmra.mxu0 %v1684
      %v1799 = vpop.f32.mrf.mxu0
      %v1800 = vadd.f32 0.0, %v1799
      %1801 = vmatmul.f32.gmra.mxu0 %v1687
      %v1802 = vpop.f32.mrf.mxu0
      %v1803 = vadd.f32 0.0, %v1802
      %1804 = vmatmul.f32.gmra.mxu0 %v1690
      %v1805 = vpop.f32.mrf.mxu0
      %v1806 = vadd.f32 0.0, %v1805
      %1807 = vmatmul.f32.gmra.mxu0 %v1693
      %v1808 = vpop.f32.mrf.mxu0
      %v1809 = vadd.f32 0.0, %v1808
      %1810 = vmatmul.f32.gmra.mxu0 %v1696
      %v1811 = vpop.f32.mrf.mxu0
      %v1812 = vadd.f32 0.0, %v1811
      %1813 = vmatmul.f32.gmra.mxu0 %v1699
      %v1814 = vpop.f32.mrf.mxu0
      %v1815 = vadd.f32 0.0, %v1814
      %1816 = vmatmul.f32.gmra.mxu0 %v1702
      %v1817 = vpop.f32.mrf.mxu0
      %v1818 = vadd.f32 0.0, %v1817
      %1819 = vmatmul.f32.gmra.mxu0 %v1705
      %v1820 = vpop.f32.mrf.mxu0
      %v1821 = vadd.f32 0.0, %v1820
      %1822 = vmatmul.f32.gmra.mxu0 %v1708
      %v1823 = vpop.f32.mrf.mxu0
      %v1824 = vadd.f32 0.0, %v1823
      %1825 = vmatmul.f32.gmra.mxu0 %v1711
      %v1826 = vpop.f32.mrf.mxu0
      %v1827 = vadd.f32 0.0, %v1826
      %1828 = vmatmul.f32.gmra.mxu0 %v1714
      %v1829 = vpop.f32.mrf.mxu0
      %v1830 = vadd.f32 0.0, %v1829
      %1831 = vmatmul.f32.gmra.mxu0 %v1717
      %v1832 = vpop.f32.mrf.mxu0
      %v1833 = vadd.f32 0.0, %v1832
      %1834 = vmatmul.f32.gmra.mxu0 %v1720
      %v1835 = vpop.f32.mrf.mxu0
      %v1836 = vadd.f32 0.0, %v1835
      %1837 = vmatmul.f32.gmra.mxu0 %v1723
      %v1838 = vpop.f32.mrf.mxu0
      %v1839 = vadd.f32 0.0, %v1838
      %1840 = vmatmul.f32.gmra.mxu0 %v1726
      %v1841 = vpop.f32.mrf.mxu0
      %v1842 = vadd.f32 0.0, %v1841
      %1843 = vmatmul.f32.gmra.mxu0 %v1729
      %v1844 = vpop.f32.mrf.mxu0
      %v1845 = vadd.f32 0.0, %v1844
      %1846 = vmatmul.f32.gmra.mxu0 %v1732
      %v1847 = vpop.f32.mrf.mxu0
      %v1848 = vadd.f32 0.0, %v1847
      %1849 = vmatmul.f32.gmra.mxu0 %v1735
      %v1850 = vpop.f32.mrf.mxu0
      %v1851 = vadd.f32 0.0, %v1850
      %1852 = vmatmul.f32.gmra.mxu0 %v1738
      %v1853 = vpop.f32.mrf.mxu0
      %v1854 = vadd.f32 0.0, %v1853
      %1855 = vmatmul.f32.gmra.mxu0 %v1741
      %v1856 = vpop.f32.mrf.mxu0
      %v1857 = vadd.f32 0.0, %v1856
      %1858 = vmatmul.f32.gmra.mxu0 %v1744
      %v1859 = vpop.f32.mrf.mxu0
      %v1860 = vadd.f32 0.0, %v1859
      %1861 = vdwg.mxu0
      %v1862 = vadd.f32 %v1489, %v1767
      %v1863 = vadd.f32 %v1492, %v1770
      %v1864 = vadd.f32 %v1495, %v1773
      %v1865 = vadd.f32 %v1498, %v1776
      %v1866 = vadd.f32 %v1501, %v1779
      %v1867 = vadd.f32 %v1504, %v1782
      %v1868 = vadd.f32 %v1507, %v1785
      %v1869 = vadd.f32 %v1510, %v1788
      %v1870 = vadd.f32 %v1513, %v1791
      %v1871 = vadd.f32 %v1516, %v1794
      %v1872 = vadd.f32 %v1519, %v1797
      %v1873 = vadd.f32 %v1522, %v1800
      %v1874 = vadd.f32 %v1525, %v1803
      %v1875 = vadd.f32 %v1528, %v1806
      %v1876 = vadd.f32 %v1531, %v1809
      %v1877 = vadd.f32 %v1534, %v1812
      %v1878 = vadd.f32 %v1537, %v1815
      %v1879 = vadd.f32 %v1540, %v1818
      %v1880 = vadd.f32 %v1543, %v1821
      %v1881 = vadd.f32 %v1546, %v1824
      %v1882 = vadd.f32 %v1549, %v1827
      %v1883 = vadd.f32 %v1552, %v1830
      %v1884 = vadd.f32 %v1555, %v1833
      %v1885 = vadd.f32 %v1558, %v1836
      %v1886 = vadd.f32 %v1561, %v1839
      %v1887 = vadd.f32 %v1564, %v1842
      %v1888 = vadd.f32 %v1567, %v1845
      %v1889 = vadd.f32 %v1570, %v1848
      %v1890 = vadd.f32 %v1573, %v1851
      %v1891 = vadd.f32 %v1576, %v1854
      %v1892 = vadd.f32 %v1579, %v1857
      %v1893 = vadd.f32 %v1582, %v1860
      %v1894 = vld [vmem:[#allocation2 + $0x17] sm:$0xff]
      %v1895 = vld [vmem:[#allocation2 + $0x1f] sm:$0xff]
      %v1896 = vld [vmem:[#allocation2 + $0x27] sm:$0xff]
      %v1897 = vld [vmem:[#allocation2 + $0x2f] sm:$0xff]
      %v1898 = vld [vmem:[#allocation2 + $0x37] sm:$0xff]
      %v1899 = vld [vmem:[#allocation2 + $0x3f] sm:$0xff]
      %v1900 = vld [vmem:[#allocation2 + $0x47] sm:$0xff]
      %v1901 = vld [vmem:[#allocation2 + $0x4f] sm:$0xff]
      %v1902 = vld [vmem:[#allocation2 + $0x57] sm:$0xff]
      %v1903 = vld [vmem:[#allocation2 + $0x5f] sm:$0xff]
      %v1904 = vld [vmem:[#allocation2 + $0x67] sm:$0xff]
      %v1905 = vld [vmem:[#allocation2 + $0x6f] sm:$0xff]
      %v1906 = vld [vmem:[#allocation2 + $0x77] sm:$0xff]
      %v1907 = vld [vmem:[#allocation2 + $0x7f] sm:$0xff]
      %v1908 = vld [vmem:[#allocation2 + $0x87] sm:$0xff]
      %v1909 = vld [vmem:[#allocation2 + $0x8f] sm:$0xff]
      %v1910 = vld [vmem:[#allocation2 + $0x97] sm:$0xff]
      %v1911 = vld [vmem:[#allocation2 + $0x9f] sm:$0xff]
      %v1912 = vld [vmem:[#allocation2 + $0xa7] sm:$0xff]
      %v1913 = vld [vmem:[#allocation2 + $0xaf] sm:$0xff]
      %v1914 = vld [vmem:[#allocation2 + $0xb7] sm:$0xff]
      %v1915 = vld [vmem:[#allocation2 + $0xbf] sm:$0xff]
      %v1916 = vld [vmem:[#allocation2 + $0xc7] sm:$0xff]
      %v1917 = vld [vmem:[#allocation2 + $0xcf] sm:$0xff]
      %v1918 = vld [vmem:[#allocation2 + $0xd7] sm:$0xff]
      %v1919 = vld [vmem:[#allocation2 + $0xdf] sm:$0xff]
      %v1920 = vld [vmem:[#allocation2 + $0xe7] sm:$0xff]
      %v1921 = vld [vmem:[#allocation2 + $0xef] sm:$0xff]
      %v1922 = vld [vmem:[#allocation2 + $0xf7] sm:$0xff]
      %v1923 = vld [vmem:[#allocation2 + $0xff] sm:$0xff]
      %v1924 = vld [vmem:[#allocation2 + $0x107] sm:$0xff]
      %v1925 = vld [vmem:[#allocation2 + $0x10f] sm:$0xff]
      %v1926 = vmul.f32 %v1894, %v932
      %v1927 = vmul.f32 %v1895, %v933
      %v1928 = vmul.f32 %v1896, %v934
      %v1929 = vmul.f32 %v1897, %v935
      %v1930 = vmul.f32 %v1898, %v936
      %v1931 = vmul.f32 %v1899, %v937
      %v1932 = vmul.f32 %v1900, %v938
      %v1933 = vmul.f32 %v1901, %v939
      %v1934 = vmul.f32 %v1902, %v940
      %v1935 = vmul.f32 %v1903, %v941
      %v1936 = vmul.f32 %v1904, %v942
      %v1937 = vmul.f32 %v1905, %v943
      %v1938 = vmul.f32 %v1906, %v944
      %v1939 = vmul.f32 %v1907, %v945
      %v1940 = vmul.f32 %v1908, %v946
      %v1941 = vmul.f32 %v1909, %v947
      %v1942 = vmul.f32 %v1910, %v948
      %v1943 = vmul.f32 %v1911, %v949
      %v1944 = vmul.f32 %v1912, %v950
      %v1945 = vmul.f32 %v1913, %v951
      %v1946 = vmul.f32 %v1914, %v952
      %v1947 = vmul.f32 %v1915, %v953
      %v1948 = vmul.f32 %v1916, %v954
      %v1949 = vmul.f32 %v1917, %v955
      %v1950 = vmul.f32 %v1918, %v956
      %v1951 = vmul.f32 %v1919, %v957
      %v1952 = vmul.f32 %v1920, %v958
      %v1953 = vmul.f32 %v1921, %v959
      %v1954 = vmul.f32 %v1922, %v960
      %v1955 = vmul.f32 %v1923, %v961
      %v1956 = vmul.f32 %v1924, %v962
      %v1957 = vmul.f32 %v1925, %v963
      %s1958 = scalar_lea.vmem %s3, 12
      %v1959 = vld [vmem:[%s1958] sm:$0xf]
      %v1961 = vsel %vm276, %v1926, 0
      %v1964 = vsel %vm276, %v1927, 0
      %v1967 = vsel %vm276, %v1928, 0
      %v1970 = vsel %vm276, %v1929, 0
      %v1973 = vsel %vm276, %v1930, 0
      %v1976 = vsel %vm276, %v1931, 0
      %v1979 = vsel %vm276, %v1932, 0
      %v1982 = vsel %vm276, %v1933, 0
      %v1985 = vsel %vm276, %v1934, 0
      %v1988 = vsel %vm276, %v1935, 0
      %v1991 = vsel %vm276, %v1936, 0
      %v1994 = vsel %vm276, %v1937, 0
      %v1997 = vsel %vm276, %v1938, 0
      %v2000 = vsel %vm276, %v1939, 0
      %v2003 = vsel %vm276, %v1940, 0
      %v2006 = vsel %vm276, %v1941, 0
      %v2009 = vsel %vm276, %v1942, 0
      %v2012 = vsel %vm276, %v1943, 0
      %v2015 = vsel %vm276, %v1944, 0
      %v2018 = vsel %vm276, %v1945, 0
      %v2021 = vsel %vm276, %v1946, 0
      %v2024 = vsel %vm276, %v1947, 0
      %v2027 = vsel %vm276, %v1948, 0
      %v2030 = vsel %vm276, %v1949, 0
      %v2033 = vsel %vm276, %v1950, 0
      %v2036 = vsel %vm276, %v1951, 0
      %v2039 = vsel %vm276, %v1952, 0
      %v2042 = vsel %vm276, %v1953, 0
      %v2045 = vsel %vm276, %v1954, 0
      %v2048 = vsel %vm276, %v1955, 0
      %v2051 = vsel %vm276, %v1956, 0
      %v2054 = vsel %vm276, %v1957, 0
      %v2057 = vsel %vm1255, %v1959, 0
      %2059 = vmatpush.msra.mxu0 0.0
      %2060 = vmatpush.msra.mxu0 0.0
      %2061 = vmatpush.msra.mxu0 0.0
      %2062 = vmatpush.msra.mxu0 0.0
      %2063 = vmatpush.msra.mxu0 0.0
      %2064 = vmatpush.msra.mxu0 0.0
      %2065 = vmatpush.msra.mxu0 0.0
      %2066 = vmatpush.msra.mxu0 0.0
      %2067 = vmatpush.msra.mxu0 0.0
      %2068 = vmatpush.msra.mxu0 0.0
      %2069 = vmatpush.msra.mxu0 0.0
      %2070 = vmatpush.msra.mxu0 0.0
      %2071 = vmatpush.msra.mxu0 0.0
      %2072 = vmatpush.msra.mxu0 0.0
      %2073 = vmatpush.msra.mxu0 0.0
      %2074 = vmatpush.msra.mxu0 %v2057
      %2075 = vmatmul.f32.gmra.mxu0 %v1961
      %v2076 = vpop.f32.mrf.mxu0
      %v2077 = vadd.f32 0.0, %v2076
      %2078 = vmatmul.f32.gmra.mxu0 %v1964
      %v2079 = vpop.f32.mrf.mxu0
      %v2080 = vadd.f32 0.0, %v2079
      %2081 = vmatmul.f32.gmra.mxu0 %v1967
      %v2082 = vpop.f32.mrf.mxu0
      %v2083 = vadd.f32 0.0, %v2082
      %2084 = vmatmul.f32.gmra.mxu0 %v1970
      %v2085 = vpop.f32.mrf.mxu0
      %v2086 = vadd.f32 0.0, %v2085
      %2087 = vmatmul.f32.gmra.mxu0 %v1973
      %v2088 = vpop.f32.mrf.mxu0
      %v2089 = vadd.f32 0.0, %v2088
      %2090 = vmatmul.f32.gmra.mxu0 %v1976
      %v2091 = vpop.f32.mrf.mxu0
      %v2092 = vadd.f32 0.0, %v2091
      %2093 = vmatmul.f32.gmra.mxu0 %v1979
      %v2094 = vpop.f32.mrf.mxu0
      %v2095 = vadd.f32 0.0, %v2094
      %2096 = vmatmul.f32.gmra.mxu0 %v1982
      %v2097 = vpop.f32.mrf.mxu0
      %v2098 = vadd.f32 0.0, %v2097
      %2099 = vmatmul.f32.gmra.mxu0 %v1985
      %v2100 = vpop.f32.mrf.mxu0
      %v2101 = vadd.f32 0.0, %v2100
      %2102 = vmatmul.f32.gmra.mxu0 %v1988
      %v2103 = vpop.f32.mrf.mxu0
      %v2104 = vadd.f32 0.0, %v2103
      %2105 = vmatmul.f32.gmra.mxu0 %v1991
      %v2106 = vpop.f32.mrf.mxu0
      %v2107 = vadd.f32 0.0, %v2106
      %2108 = vmatmul.f32.gmra.mxu0 %v1994
      %v2109 = vpop.f32.mrf.mxu0
      %v2110 = vadd.f32 0.0, %v2109
      %2111 = vmatmul.f32.gmra.mxu0 %v1997
      %v2112 = vpop.f32.mrf.mxu0
      %v2113 = vadd.f32 0.0, %v2112
      %2114 = vmatmul.f32.gmra.mxu0 %v2000
      %v2115 = vpop.f32.mrf.mxu0
      %v2116 = vadd.f32 0.0, %v2115
      %2117 = vmatmul.f32.gmra.mxu0 %v2003
      %v2118 = vpop.f32.mrf.mxu0
      %v2119 = vadd.f32 0.0, %v2118
      %2120 = vmatmul.f32.gmra.mxu0 %v2006
      %v2121 = vpop.f32.mrf.mxu0
      %v2122 = vadd.f32 0.0, %v2121
      %2123 = vmatmul.f32.gmra.mxu0 %v2009
      %v2124 = vpop.f32.mrf.mxu0
      %v2125 = vadd.f32 0.0, %v2124
      %2126 = vmatmul.f32.gmra.mxu0 %v2012
      %v2127 = vpop.f32.mrf.mxu0
      %v2128 = vadd.f32 0.0, %v2127
      %2129 = vmatmul.f32.gmra.mxu0 %v2015
      %v2130 = vpop.f32.mrf.mxu0
      %v2131 = vadd.f32 0.0, %v2130
      %2132 = vmatmul.f32.gmra.mxu0 %v2018
      %v2133 = vpop.f32.mrf.mxu0
      %v2134 = vadd.f32 0.0, %v2133
      %2135 = vmatmul.f32.gmra.mxu0 %v2021
      %v2136 = vpop.f32.mrf.mxu0
      %v2137 = vadd.f32 0.0, %v2136
      %2138 = vmatmul.f32.gmra.mxu0 %v2024
      %v2139 = vpop.f32.mrf.mxu0
      %v2140 = vadd.f32 0.0, %v2139
      %2141 = vmatmul.f32.gmra.mxu0 %v2027
      %v2142 = vpop.f32.mrf.mxu0
      %v2143 = vadd.f32 0.0, %v2142
      %2144 = vmatmul.f32.gmra.mxu0 %v2030
      %v2145 = vpop.f32.mrf.mxu0
      %v2146 = vadd.f32 0.0, %v2145
      %2147 = vmatmul.f32.gmra.mxu0 %v2033
      %v2148 = vpop.f32.mrf.mxu0
      %v2149 = vadd.f32 0.0, %v2148
      %2150 = vmatmul.f32.gmra.mxu0 %v2036
      %v2151 = vpop.f32.mrf.mxu0
      %v2152 = vadd.f32 0.0, %v2151
      %2153 = vmatmul.f32.gmra.mxu0 %v2039
      %v2154 = vpop.f32.mrf.mxu0
      %v2155 = vadd.f32 0.0, %v2154
      %2156 = vmatmul.f32.gmra.mxu0 %v2042
      %v2157 = vpop.f32.mrf.mxu0
      %v2158 = vadd.f32 0.0, %v2157
      %2159 = vmatmul.f32.gmra.mxu0 %v2045
      %v2160 = vpop.f32.mrf.mxu0
      %v2161 = vadd.f32 0.0, %v2160
      %2162 = vmatmul.f32.gmra.mxu0 %v2048
      %v2163 = vpop.f32.mrf.mxu0
      %v2164 = vadd.f32 0.0, %v2163
      %2165 = vmatmul.f32.gmra.mxu0 %v2051
      %v2166 = vpop.f32.mrf.mxu0
      %v2167 = vadd.f32 0.0, %v2166
      %2168 = vmatmul.f32.gmra.mxu0 %v2054
      %v2169 = vpop.f32.mrf.mxu0
      %v2170 = vadd.f32 0.0, %v2169
      %2171 = vdwg.mxu0
      %v2172 = vadd.f32 %v1862, %v2077
      %v2173 = vadd.f32 %v1863, %v2080
      %v2174 = vadd.f32 %v1864, %v2083
      %v2175 = vadd.f32 %v1865, %v2086
      %v2176 = vadd.f32 %v1866, %v2089
      %v2177 = vadd.f32 %v1867, %v2092
      %v2178 = vadd.f32 %v1868, %v2095
      %v2179 = vadd.f32 %v1869, %v2098
      %v2180 = vadd.f32 %v1870, %v2101
      %v2181 = vadd.f32 %v1871, %v2104
      %v2182 = vadd.f32 %v1872, %v2107
      %v2183 = vadd.f32 %v1873, %v2110
      %v2184 = vadd.f32 %v1874, %v2113
      %v2185 = vadd.f32 %v1875, %v2116
      %v2186 = vadd.f32 %v1876, %v2119
      %v2187 = vadd.f32 %v1877, %v2122
      %v2188 = vadd.f32 %v1878, %v2125
      %v2189 = vadd.f32 %v1879, %v2128
      %v2190 = vadd.f32 %v1880, %v2131
      %v2191 = vadd.f32 %v1881, %v2134
      %v2192 = vadd.f32 %v1882, %v2137
      %v2193 = vadd.f32 %v1883, %v2140
      %v2194 = vadd.f32 %v1884, %v2143
      %v2195 = vadd.f32 %v1885, %v2146
      %v2196 = vadd.f32 %v1886, %v2149
      %v2197 = vadd.f32 %v1887, %v2152
      %v2198 = vadd.f32 %v1888, %v2155
      %v2199 = vadd.f32 %v1889, %v2158
      %v2200 = vadd.f32 %v1890, %v2161
      %v2201 = vadd.f32 %v1891, %v2164
      %v2202 = vadd.f32 %v1892, %v2167
      %v2203 = vadd.f32 %v1893, %v2170
      %v2204 = vld [vmem:[#allocation2 + $0x18] sm:$0xff]
      %v2205 = vld [vmem:[#allocation2 + $0x20] sm:$0xff]
      %v2206 = vld [vmem:[#allocation2 + $0x28] sm:$0xff]
      %v2207 = vld [vmem:[#allocation2 + $0x30] sm:$0xff]
      %v2208 = vld [vmem:[#allocation2 + $0x38] sm:$0xff]
      %v2209 = vld [vmem:[#allocation2 + $0x40] sm:$0xff]
      %v2210 = vld [vmem:[#allocation2 + $0x48] sm:$0xff]
      %v2211 = vld [vmem:[#allocation2 + $0x50] sm:$0xff]
      %v2212 = vld [vmem:[#allocation2 + $0x58] sm:$0xff]
      %v2213 = vld [vmem:[#allocation2 + $0x60] sm:$0xff]
      %v2214 = vld [vmem:[#allocation2 + $0x68] sm:$0xff]
      %v2215 = vld [vmem:[#allocation2 + $0x70] sm:$0xff]
      %v2216 = vld [vmem:[#allocation2 + $0x78] sm:$0xff]
      %v2217 = vld [vmem:[#allocation2 + $0x80] sm:$0xff]
      %v2218 = vld [vmem:[#allocation2 + $0x88] sm:$0xff]
      %v2219 = vld [vmem:[#allocation2 + $0x90] sm:$0xff]
      %v2220 = vld [vmem:[#allocation2 + $0x98] sm:$0xff]
      %v2221 = vld [vmem:[#allocation2 + $0xa0] sm:$0xff]
      %v2222 = vld [vmem:[#allocation2 + $0xa8] sm:$0xff]
      %v2223 = vld [vmem:[#allocation2 + $0xb0] sm:$0xff]
      %v2224 = vld [vmem:[#allocation2 + $0xb8] sm:$0xff]
      %v2225 = vld [vmem:[#allocation2 + $0xc0] sm:$0xff]
      %v2226 = vld [vmem:[#allocation2 + $0xc8] sm:$0xff]
      %v2227 = vld [vmem:[#allocation2 + $0xd0] sm:$0xff]
      %v2228 = vld [vmem:[#allocation2 + $0xd8] sm:$0xff]
      %v2229 = vld [vmem:[#allocation2 + $0xe0] sm:$0xff]
      %v2230 = vld [vmem:[#allocation2 + $0xe8] sm:$0xff]
      %v2231 = vld [vmem:[#allocation2 + $0xf0] sm:$0xff]
      %v2232 = vld [vmem:[#allocation2 + $0xf8] sm:$0xff]
      %v2233 = vld [vmem:[#allocation2 + $0x100] sm:$0xff]
      %v2234 = vld [vmem:[#allocation2 + $0x108] sm:$0xff]
      %v2235 = vld [vmem:[#allocation2 + $0x110] sm:$0xff]
      %s2236 = scalar_lea.vmem %s3, 16
      %v2237 = vld [vmem:[%s2236] sm:$0xf]
      %v2239 = vsel %vm276, %v2204, 0
      %v2242 = vsel %vm276, %v2205, 0
      %v2245 = vsel %vm276, %v2206, 0
      %v2248 = vsel %vm276, %v2207, 0
      %v2251 = vsel %vm276, %v2208, 0
      %v2254 = vsel %vm276, %v2209, 0
      %v2257 = vsel %vm276, %v2210, 0
      %v2260 = vsel %vm276, %v2211, 0
      %v2263 = vsel %vm276, %v2212, 0
      %v2266 = vsel %vm276, %v2213, 0
      %v2269 = vsel %vm276, %v2214, 0
      %v2272 = vsel %vm276, %v2215, 0
      %v2275 = vsel %vm276, %v2216, 0
      %v2278 = vsel %vm276, %v2217, 0
      %v2281 = vsel %vm276, %v2218, 0
      %v2284 = vsel %vm276, %v2219, 0
      %v2287 = vsel %vm276, %v2220, 0
      %v2290 = vsel %vm276, %v2221, 0
      %v2293 = vsel %vm276, %v2222, 0
      %v2296 = vsel %vm276, %v2223, 0
      %v2299 = vsel %vm276, %v2224, 0
      %v2302 = vsel %vm276, %v2225, 0
      %v2305 = vsel %vm276, %v2226, 0
      %v2308 = vsel %vm276, %v2227, 0
      %v2311 = vsel %vm276, %v2228, 0
      %v2314 = vsel %vm276, %v2229, 0
      %v2317 = vsel %vm276, %v2230, 0
      %v2320 = vsel %vm276, %v2231, 0
      %v2323 = vsel %vm276, %v2232, 0
      %v2326 = vsel %vm276, %v2233, 0
      %v2329 = vsel %vm276, %v2234, 0
      %v2332 = vsel %vm276, %v2235, 0
      %v2335 = vsel %vm1255, %v2237, 0
      %2337 = vmatpush.msra.mxu0 0.0
      %2338 = vmatpush.msra.mxu0 0.0
      %2339 = vmatpush.msra.mxu0 0.0
      %2340 = vmatpush.msra.mxu0 0.0
      %2341 = vmatpush.msra.mxu0 0.0
      %2342 = vmatpush.msra.mxu0 0.0
      %2343 = vmatpush.msra.mxu0 0.0
      %2344 = vmatpush.msra.mxu0 0.0
      %2345 = vmatpush.msra.mxu0 0.0
      %2346 = vmatpush.msra.mxu0 0.0
      %2347 = vmatpush.msra.mxu0 0.0
      %2348 = vmatpush.msra.mxu0 0.0
      %2349 = vmatpush.msra.mxu0 0.0
      %2350 = vmatpush.msra.mxu0 0.0
      %2351 = vmatpush.msra.mxu0 0.0
      %2352 = vmatpush.msra.mxu0 %v2335
      %2353 = vmatmul.f32.gmra.mxu0 %v2239
      %v2354 = vpop.f32.mrf.mxu0
      %v2355 = vadd.f32 0.0, %v2354
      %2356 = vmatmul.f32.gmra.mxu0 %v2242
      %v2357 = vpop.f32.mrf.mxu0
      %v2358 = vadd.f32 0.0, %v2357
      %2359 = vmatmul.f32.gmra.mxu0 %v2245
      %v2360 = vpop.f32.mrf.mxu0
      %v2361 = vadd.f32 0.0, %v2360
      %2362 = vmatmul.f32.gmra.mxu0 %v2248
      %v2363 = vpop.f32.mrf.mxu0
      %v2364 = vadd.f32 0.0, %v2363
      %2365 = vmatmul.f32.gmra.mxu0 %v2251
      %v2366 = vpop.f32.mrf.mxu0
      %v2367 = vadd.f32 0.0, %v2366
      %2368 = vmatmul.f32.gmra.mxu0 %v2254
      %v2369 = vpop.f32.mrf.mxu0
      %v2370 = vadd.f32 0.0, %v2369
      %2371 = vmatmul.f32.gmra.mxu0 %v2257
      %v2372 = vpop.f32.mrf.mxu0
      %v2373 = vadd.f32 0.0, %v2372
      %2374 = vmatmul.f32.gmra.mxu0 %v2260
      %v2375 = vpop.f32.mrf.mxu0
      %v2376 = vadd.f32 0.0, %v2375
      %2377 = vmatmul.f32.gmra.mxu0 %v2263
      %v2378 = vpop.f32.mrf.mxu0
      %v2379 = vadd.f32 0.0, %v2378
      %2380 = vmatmul.f32.gmra.mxu0 %v2266
      %v2381 = vpop.f32.mrf.mxu0
      %v2382 = vadd.f32 0.0, %v2381
      %2383 = vmatmul.f32.gmra.mxu0 %v2269
      %v2384 = vpop.f32.mrf.mxu0
      %v2385 = vadd.f32 0.0, %v2384
      %2386 = vmatmul.f32.gmra.mxu0 %v2272
      %v2387 = vpop.f32.mrf.mxu0
      %v2388 = vadd.f32 0.0, %v2387
      %2389 = vmatmul.f32.gmra.mxu0 %v2275
      %v2390 = vpop.f32.mrf.mxu0
      %v2391 = vadd.f32 0.0, %v2390
      %2392 = vmatmul.f32.gmra.mxu0 %v2278
      %v2393 = vpop.f32.mrf.mxu0
      %v2394 = vadd.f32 0.0, %v2393
      %2395 = vmatmul.f32.gmra.mxu0 %v2281
      %v2396 = vpop.f32.mrf.mxu0
      %v2397 = vadd.f32 0.0, %v2396
      %2398 = vmatmul.f32.gmra.mxu0 %v2284
      %v2399 = vpop.f32.mrf.mxu0
      %v2400 = vadd.f32 0.0, %v2399
      %2401 = vmatmul.f32.gmra.mxu0 %v2287
      %v2402 = vpop.f32.mrf.mxu0
      %v2403 = vadd.f32 0.0, %v2402
      %2404 = vmatmul.f32.gmra.mxu0 %v2290
      %v2405 = vpop.f32.mrf.mxu0
      %v2406 = vadd.f32 0.0, %v2405
      %2407 = vmatmul.f32.gmra.mxu0 %v2293
      %v2408 = vpop.f32.mrf.mxu0
      %v2409 = vadd.f32 0.0, %v2408
      %2410 = vmatmul.f32.gmra.mxu0 %v2296
      %v2411 = vpop.f32.mrf.mxu0
      %v2412 = vadd.f32 0.0, %v2411
      %2413 = vmatmul.f32.gmra.mxu0 %v2299
      %v2414 = vpop.f32.mrf.mxu0
      %v2415 = vadd.f32 0.0, %v2414
      %2416 = vmatmul.f32.gmra.mxu0 %v2302
      %v2417 = vpop.f32.mrf.mxu0
      %v2418 = vadd.f32 0.0, %v2417
      %2419 = vmatmul.f32.gmra.mxu0 %v2305
      %v2420 = vpop.f32.mrf.mxu0
      %v2421 = vadd.f32 0.0, %v2420
      %2422 = vmatmul.f32.gmra.mxu0 %v2308
      %v2423 = vpop.f32.mrf.mxu0
      %v2424 = vadd.f32 0.0, %v2423
      %2425 = vmatmul.f32.gmra.mxu0 %v2311
      %v2426 = vpop.f32.mrf.mxu0
      %v2427 = vadd.f32 0.0, %v2426
      %2428 = vmatmul.f32.gmra.mxu0 %v2314
      %v2429 = vpop.f32.mrf.mxu0
      %v2430 = vadd.f32 0.0, %v2429
      %2431 = vmatmul.f32.gmra.mxu0 %v2317
      %v2432 = vpop.f32.mrf.mxu0
      %v2433 = vadd.f32 0.0, %v2432
      %2434 = vmatmul.f32.gmra.mxu0 %v2320
      %v2435 = vpop.f32.mrf.mxu0
      %v2436 = vadd.f32 0.0, %v2435
      %2437 = vmatmul.f32.gmra.mxu0 %v2323
      %v2438 = vpop.f32.mrf.mxu0
      %v2439 = vadd.f32 0.0, %v2438
      %2440 = vmatmul.f32.gmra.mxu0 %v2326
      %v2441 = vpop.f32.mrf.mxu0
      %v2442 = vadd.f32 0.0, %v2441
      %2443 = vmatmul.f32.gmra.mxu0 %v2329
      %v2444 = vpop.f32.mrf.mxu0
      %v2445 = vadd.f32 0.0, %v2444
      %2446 = vmatmul.f32.gmra.mxu0 %v2332
      %v2447 = vpop.f32.mrf.mxu0
      %v2448 = vadd.f32 0.0, %v2447
      %2449 = vdwg.mxu0
      %v2450 = vadd.f32 %v2172, %v2355
      %v2451 = vadd.f32 %v2173, %v2358
      %v2452 = vadd.f32 %v2174, %v2361
      %v2453 = vadd.f32 %v2175, %v2364
      %v2454 = vadd.f32 %v2176, %v2367
      %v2455 = vadd.f32 %v2177, %v2370
      %v2456 = vadd.f32 %v2178, %v2373
      %v2457 = vadd.f32 %v2179, %v2376
      %v2458 = vadd.f32 %v2180, %v2379
      %v2459 = vadd.f32 %v2181, %v2382
      %v2460 = vadd.f32 %v2182, %v2385
      %v2461 = vadd.f32 %v2183, %v2388
      %v2462 = vadd.f32 %v2184, %v2391
      %v2463 = vadd.f32 %v2185, %v2394
      %v2464 = vadd.f32 %v2186, %v2397
      %v2465 = vadd.f32 %v2187, %v2400
      %v2466 = vadd.f32 %v2188, %v2403
      %v2467 = vadd.f32 %v2189, %v2406
      %v2468 = vadd.f32 %v2190, %v2409
      %v2469 = vadd.f32 %v2191, %v2412
      %v2470 = vadd.f32 %v2192, %v2415
      %v2471 = vadd.f32 %v2193, %v2418
      %v2472 = vadd.f32 %v2194, %v2421
      %v2473 = vadd.f32 %v2195, %v2424
      %v2474 = vadd.f32 %v2196, %v2427
      %v2475 = vadd.f32 %v2197, %v2430
      %v2476 = vadd.f32 %v2198, %v2433
      %v2477 = vadd.f32 %v2199, %v2436
      %v2478 = vadd.f32 %v2200, %v2439
      %v2479 = vadd.f32 %v2201, %v2442
      %v2480 = vadd.f32 %v2202, %v2445
      %v2481 = vadd.f32 %v2203, %v2448
      %v2482 = vld [vmem:[#allocation2 + $0x19] sm:$0xff]
      %v2483 = vld [vmem:[#allocation2 + $0x21] sm:$0xff]
      %v2484 = vld [vmem:[#allocation2 + $0x29] sm:$0xff]
      %v2485 = vld [vmem:[#allocation2 + $0x31] sm:$0xff]
      %v2486 = vld [vmem:[#allocation2 + $0x39] sm:$0xff]
      %v2487 = vld [vmem:[#allocation2 + $0x41] sm:$0xff]
      %v2488 = vld [vmem:[#allocation2 + $0x49] sm:$0xff]
      %v2489 = vld [vmem:[#allocation2 + $0x51] sm:$0xff]
      %v2490 = vld [vmem:[#allocation2 + $0x59] sm:$0xff]
      %v2491 = vld [vmem:[#allocation2 + $0x61] sm:$0xff]
      %v2492 = vld [vmem:[#allocation2 + $0x69] sm:$0xff]
      %v2493 = vld [vmem:[#allocation2 + $0x71] sm:$0xff]
      %v2494 = vld [vmem:[#allocation2 + $0x79] sm:$0xff]
      %v2495 = vld [vmem:[#allocation2 + $0x81] sm:$0xff]
      %v2496 = vld [vmem:[#allocation2 + $0x89] sm:$0xff]
      %v2497 = vld [vmem:[#allocation2 + $0x91] sm:$0xff]
      %v2498 = vld [vmem:[#allocation2 + $0x99] sm:$0xff]
      %v2499 = vld [vmem:[#allocation2 + $0xa1] sm:$0xff]
      %v2500 = vld [vmem:[#allocation2 + $0xa9] sm:$0xff]
      %v2501 = vld [vmem:[#allocation2 + $0xb1] sm:$0xff]
      %v2502 = vld [vmem:[#allocation2 + $0xb9] sm:$0xff]
      %v2503 = vld [vmem:[#allocation2 + $0xc1] sm:$0xff]
      %v2504 = vld [vmem:[#allocation2 + $0xc9] sm:$0xff]
      %v2505 = vld [vmem:[#allocation2 + $0xd1] sm:$0xff]
      %v2506 = vld [vmem:[#allocation2 + $0xd9] sm:$0xff]
      %v2507 = vld [vmem:[#allocation2 + $0xe1] sm:$0xff]
      %v2508 = vld [vmem:[#allocation2 + $0xe9] sm:$0xff]
      %v2509 = vld [vmem:[#allocation2 + $0xf1] sm:$0xff]
      %v2510 = vld [vmem:[#allocation2 + $0xf9] sm:$0xff]
      %v2511 = vld [vmem:[#allocation2 + $0x101] sm:$0xff]
      %v2512 = vld [vmem:[#allocation2 + $0x109] sm:$0xff]
      %v2513 = vld [vmem:[#allocation2 + $0x111] sm:$0xff]
      %v2514 = vmul.f32 %v2482, %v1028
      %v2515 = vmul.f32 %v2483, %v1029
      %v2516 = vmul.f32 %v2484, %v1030
      %v2517 = vmul.f32 %v2485, %v1031
      %v2518 = vmul.f32 %v2486, %v1032
      %v2519 = vmul.f32 %v2487, %v1033
      %v2520 = vmul.f32 %v2488, %v1034
      %v2521 = vmul.f32 %v2489, %v1035
      %v2522 = vmul.f32 %v2490, %v1036
      %v2523 = vmul.f32 %v2491, %v1037
      %v2524 = vmul.f32 %v2492, %v1038
      %v2525 = vmul.f32 %v2493, %v1039
      %v2526 = vmul.f32 %v2494, %v1040
      %v2527 = vmul.f32 %v2495, %v1041
      %v2528 = vmul.f32 %v2496, %v1042
      %v2529 = vmul.f32 %v2497, %v1043
      %v2530 = vmul.f32 %v2498, %v1044
      %v2531 = vmul.f32 %v2499, %v1045
      %v2532 = vmul.f32 %v2500, %v1046
      %v2533 = vmul.f32 %v2501, %v1047
      %v2534 = vmul.f32 %v2502, %v1048
      %v2535 = vmul.f32 %v2503, %v1049
      %v2536 = vmul.f32 %v2504, %v1050
      %v2537 = vmul.f32 %v2505, %v1051
      %v2538 = vmul.f32 %v2506, %v1052
      %v2539 = vmul.f32 %v2507, %v1053
      %v2540 = vmul.f32 %v2508, %v1054
      %v2541 = vmul.f32 %v2509, %v1055
      %v2542 = vmul.f32 %v2510, %v1056
      %v2543 = vmul.f32 %v2511, %v1057
      %v2544 = vmul.f32 %v2512, %v1058
      %v2545 = vmul.f32 %v2513, %v1059
      %s2546 = scalar_lea.vmem %s3, 20
      %v2547 = vld [vmem:[%s2546] sm:$0xf]
      %v2549 = vsel %vm276, %v2514, 0
      %v2552 = vsel %vm276, %v2515, 0
      %v2555 = vsel %vm276, %v2516, 0
      %v2558 = vsel %vm276, %v2517, 0
      %v2561 = vsel %vm276, %v2518, 0
      %v2564 = vsel %vm276, %v2519, 0
      %v2567 = vsel %vm276, %v2520, 0
      %v2570 = vsel %vm276, %v2521, 0
      %v2573 = vsel %vm276, %v2522, 0
      %v2576 = vsel %vm276, %v2523, 0
      %v2579 = vsel %vm276, %v2524, 0
      %v2582 = vsel %vm276, %v2525, 0
      %v2585 = vsel %vm276, %v2526, 0
      %v2588 = vsel %vm276, %v2527, 0
      %v2591 = vsel %vm276, %v2528, 0
      %v2594 = vsel %vm276, %v2529, 0
      %v2597 = vsel %vm276, %v2530, 0
      %v2600 = vsel %vm276, %v2531, 0
      %v2603 = vsel %vm276, %v2532, 0
      %v2606 = vsel %vm276, %v2533, 0
      %v2609 = vsel %vm276, %v2534, 0
      %v2612 = vsel %vm276, %v2535, 0
      %v2615 = vsel %vm276, %v2536, 0
      %v2618 = vsel %vm276, %v2537, 0
      %v2621 = vsel %vm276, %v2538, 0
      %v2624 = vsel %vm276, %v2539, 0
      %v2627 = vsel %vm276, %v2540, 0
      %v2630 = vsel %vm276, %v2541, 0
      %v2633 = vsel %vm276, %v2542, 0
      %v2636 = vsel %vm276, %v2543, 0
      %v2639 = vsel %vm276, %v2544, 0
      %v2642 = vsel %vm276, %v2545, 0
      %v2645 = vsel %vm1255, %v2547, 0
      %2647 = vmatpush.msra.mxu0 0.0
      %2648 = vmatpush.msra.mxu0 0.0
      %2649 = vmatpush.msra.mxu0 0.0
      %2650 = vmatpush.msra.mxu0 0.0
      %2651 = vmatpush.msra.mxu0 0.0
      %2652 = vmatpush.msra.mxu0 0.0
      %2653 = vmatpush.msra.mxu0 0.0
      %2654 = vmatpush.msra.mxu0 0.0
      %2655 = vmatpush.msra.mxu0 0.0
      %2656 = vmatpush.msra.mxu0 0.0
      %2657 = vmatpush.msra.mxu0 0.0
      %2658 = vmatpush.msra.mxu0 0.0
      %2659 = vmatpush.msra.mxu0 0.0
      %2660 = vmatpush.msra.mxu0 0.0
      %2661 = vmatpush.msra.mxu0 0.0
      %2662 = vmatpush.msra.mxu0 %v2645
      %2663 = vmatmul.f32.gmra.mxu0 %v2549
      %v2664 = vpop.f32.mrf.mxu0
      %v2665 = vadd.f32 0.0, %v2664
      %2666 = vmatmul.f32.gmra.mxu0 %v2552
      %v2667 = vpop.f32.mrf.mxu0
      %v2668 = vadd.f32 0.0, %v2667
      %2669 = vmatmul.f32.gmra.mxu0 %v2555
      %v2670 = vpop.f32.mrf.mxu0
      %v2671 = vadd.f32 0.0, %v2670
      %2672 = vmatmul.f32.gmra.mxu0 %v2558
      %v2673 = vpop.f32.mrf.mxu0
      %v2674 = vadd.f32 0.0, %v2673
      %2675 = vmatmul.f32.gmra.mxu0 %v2561
      %v2676 = vpop.f32.mrf.mxu0
      %v2677 = vadd.f32 0.0, %v2676
      %2678 = vmatmul.f32.gmra.mxu0 %v2564
      %v2679 = vpop.f32.mrf.mxu0
      %v2680 = vadd.f32 0.0, %v2679
      %2681 = vmatmul.f32.gmra.mxu0 %v2567
      %v2682 = vpop.f32.mrf.mxu0
      %v2683 = vadd.f32 0.0, %v2682
      %2684 = vmatmul.f32.gmra.mxu0 %v2570
      %v2685 = vpop.f32.mrf.mxu0
      %v2686 = vadd.f32 0.0, %v2685
      %2687 = vmatmul.f32.gmra.mxu0 %v2573
      %v2688 = vpop.f32.mrf.mxu0
      %v2689 = vadd.f32 0.0, %v2688
      %2690 = vmatmul.f32.gmra.mxu0 %v2576
      %v2691 = vpop.f32.mrf.mxu0
      %v2692 = vadd.f32 0.0, %v2691
      %2693 = vmatmul.f32.gmra.mxu0 %v2579
      %v2694 = vpop.f32.mrf.mxu0
      %v2695 = vadd.f32 0.0, %v2694
      %2696 = vmatmul.f32.gmra.mxu0 %v2582
      %v2697 = vpop.f32.mrf.mxu0
      %v2698 = vadd.f32 0.0, %v2697
      %2699 = vmatmul.f32.gmra.mxu0 %v2585
      %v2700 = vpop.f32.mrf.mxu0
      %v2701 = vadd.f32 0.0, %v2700
      %2702 = vmatmul.f32.gmra.mxu0 %v2588
      %v2703 = vpop.f32.mrf.mxu0
      %v2704 = vadd.f32 0.0, %v2703
      %2705 = vmatmul.f32.gmra.mxu0 %v2591
      %v2706 = vpop.f32.mrf.mxu0
      %v2707 = vadd.f32 0.0, %v2706
      %2708 = vmatmul.f32.gmra.mxu0 %v2594
      %v2709 = vpop.f32.mrf.mxu0
      %v2710 = vadd.f32 0.0, %v2709
      %2711 = vmatmul.f32.gmra.mxu0 %v2597
      %v2712 = vpop.f32.mrf.mxu0
      %v2713 = vadd.f32 0.0, %v2712
      %2714 = vmatmul.f32.gmra.mxu0 %v2600
      %v2715 = vpop.f32.mrf.mxu0
      %v2716 = vadd.f32 0.0, %v2715
      %2717 = vmatmul.f32.gmra.mxu0 %v2603
      %v2718 = vpop.f32.mrf.mxu0
      %v2719 = vadd.f32 0.0, %v2718
      %2720 = vmatmul.f32.gmra.mxu0 %v2606
      %v2721 = vpop.f32.mrf.mxu0
      %v2722 = vadd.f32 0.0, %v2721
      %2723 = vmatmul.f32.gmra.mxu0 %v2609
      %v2724 = vpop.f32.mrf.mxu0
      %v2725 = vadd.f32 0.0, %v2724
      %2726 = vmatmul.f32.gmra.mxu0 %v2612
      %v2727 = vpop.f32.mrf.mxu0
      %v2728 = vadd.f32 0.0, %v2727
      %2729 = vmatmul.f32.gmra.mxu0 %v2615
      %v2730 = vpop.f32.mrf.mxu0
      %v2731 = vadd.f32 0.0, %v2730
      %2732 = vmatmul.f32.gmra.mxu0 %v2618
      %v2733 = vpop.f32.mrf.mxu0
      %v2734 = vadd.f32 0.0, %v2733
      %2735 = vmatmul.f32.gmra.mxu0 %v2621
      %v2736 = vpop.f32.mrf.mxu0
      %v2737 = vadd.f32 0.0, %v2736
      %2738 = vmatmul.f32.gmra.mxu0 %v2624
      %v2739 = vpop.f32.mrf.mxu0
      %v2740 = vadd.f32 0.0, %v2739
      %2741 = vmatmul.f32.gmra.mxu0 %v2627
      %v2742 = vpop.f32.mrf.mxu0
      %v2743 = vadd.f32 0.0, %v2742
      %2744 = vmatmul.f32.gmra.mxu0 %v2630
      %v2745 = vpop.f32.mrf.mxu0
      %v2746 = vadd.f32 0.0, %v2745
      %2747 = vmatmul.f32.gmra.mxu0 %v2633
      %v2748 = vpop.f32.mrf.mxu0
      %v2749 = vadd.f32 0.0, %v2748
      %2750 = vmatmul.f32.gmra.mxu0 %v2636
      %v2751 = vpop.f32.mrf.mxu0
      %v2752 = vadd.f32 0.0, %v2751
      %2753 = vmatmul.f32.gmra.mxu0 %v2639
      %v2754 = vpop.f32.mrf.mxu0
      %v2755 = vadd.f32 0.0, %v2754
      %2756 = vmatmul.f32.gmra.mxu0 %v2642
      %v2757 = vpop.f32.mrf.mxu0
      %v2758 = vadd.f32 0.0, %v2757
      %2759 = vdwg.mxu0
      %v2760 = vadd.f32 %v2450, %v2665
      %v2761 = vadd.f32 %v2451, %v2668
      %v2762 = vadd.f32 %v2452, %v2671
      %v2763 = vadd.f32 %v2453, %v2674
      %v2764 = vadd.f32 %v2454, %v2677
      %v2765 = vadd.f32 %v2455, %v2680
      %v2766 = vadd.f32 %v2456, %v2683
      %v2767 = vadd.f32 %v2457, %v2686
      %v2768 = vadd.f32 %v2458, %v2689
      %v2769 = vadd.f32 %v2459, %v2692
      %v2770 = vadd.f32 %v2460, %v2695
      %v2771 = vadd.f32 %v2461, %v2698
      %v2772 = vadd.f32 %v2462, %v2701
      %v2773 = vadd.f32 %v2463, %v2704
      %v2774 = vadd.f32 %v2464, %v2707
      %v2775 = vadd.f32 %v2465, %v2710
      %v2776 = vadd.f32 %v2466, %v2713
      %v2777 = vadd.f32 %v2467, %v2716
      %v2778 = vadd.f32 %v2468, %v2719
      %v2779 = vadd.f32 %v2469, %v2722
      %v2780 = vadd.f32 %v2470, %v2725
      %v2781 = vadd.f32 %v2471, %v2728
      %v2782 = vadd.f32 %v2472, %v2731
      %v2783 = vadd.f32 %v2473, %v2734
      %v2784 = vadd.f32 %v2474, %v2737
      %v2785 = vadd.f32 %v2475, %v2740
      %v2786 = vadd.f32 %v2476, %v2743
      %v2787 = vadd.f32 %v2477, %v2746
      %v2788 = vadd.f32 %v2478, %v2749
      %v2789 = vadd.f32 %v2479, %v2752
      %v2790 = vadd.f32 %v2480, %v2755
      %v2791 = vadd.f32 %v2481, %v2758
      %v2792 = vld [vmem:[#allocation2 + $0x27] sm:$0xff]
      %v2793 = vld [vmem:[#allocation2 + $0x2f] sm:$0xff]
      %v2794 = vld [vmem:[#allocation2 + $0x37] sm:$0xff]
      %v2795 = vld [vmem:[#allocation2 + $0x3f] sm:$0xff]
      %v2796 = vld [vmem:[#allocation2 + $0x47] sm:$0xff]
      %v2797 = vld [vmem:[#allocation2 + $0x4f] sm:$0xff]
      %v2798 = vld [vmem:[#allocation2 + $0x57] sm:$0xff]
      %v2799 = vld [vmem:[#allocation2 + $0x5f] sm:$0xff]
      %v2800 = vld [vmem:[#allocation2 + $0x67] sm:$0xff]
      %v2801 = vld [vmem:[#allocation2 + $0x6f] sm:$0xff]
      %v2802 = vld [vmem:[#allocation2 + $0x77] sm:$0xff]
      %v2803 = vld [vmem:[#allocation2 + $0x7f] sm:$0xff]
      %v2804 = vld [vmem:[#allocation2 + $0x87] sm:$0xff]
      %v2805 = vld [vmem:[#allocation2 + $0x8f] sm:$0xff]
      %v2806 = vld [vmem:[#allocation2 + $0x97] sm:$0xff]
      %v2807 = vld [vmem:[#allocation2 + $0x9f] sm:$0xff]
      %v2808 = vld [vmem:[#allocation2 + $0xa7] sm:$0xff]
      %v2809 = vld [vmem:[#allocation2 + $0xaf] sm:$0xff]
      %v2810 = vld [vmem:[#allocation2 + $0xb7] sm:$0xff]
      %v2811 = vld [vmem:[#allocation2 + $0xbf] sm:$0xff]
      %v2812 = vld [vmem:[#allocation2 + $0xc7] sm:$0xff]
      %v2813 = vld [vmem:[#allocation2 + $0xcf] sm:$0xff]
      %v2814 = vld [vmem:[#allocation2 + $0xd7] sm:$0xff]
      %v2815 = vld [vmem:[#allocation2 + $0xdf] sm:$0xff]
      %v2816 = vld [vmem:[#allocation2 + $0xe7] sm:$0xff]
      %v2817 = vld [vmem:[#allocation2 + $0xef] sm:$0xff]
      %v2818 = vld [vmem:[#allocation2 + $0xf7] sm:$0xff]
      %v2819 = vld [vmem:[#allocation2 + $0xff] sm:$0xff]
      %v2820 = vld [vmem:[#allocation2 + $0x107] sm:$0xff]
      %v2821 = vld [vmem:[#allocation2 + $0x10f] sm:$0xff]
      %v2822 = vld [vmem:[#allocation2 + $0x117] sm:$0xff]
      %v2823 = vld [vmem:[#allocation2 + $0x11f] sm:$0xff]
      %v2824 = vmul.f32 %v2792, %v932
      %v2825 = vmul.f32 %v2793, %v933
      %v2826 = vmul.f32 %v2794, %v934
      %v2827 = vmul.f32 %v2795, %v935
      %v2828 = vmul.f32 %v2796, %v936
      %v2829 = vmul.f32 %v2797, %v937
      %v2830 = vmul.f32 %v2798, %v938
      %v2831 = vmul.f32 %v2799, %v939
      %v2832 = vmul.f32 %v2800, %v940
      %v2833 = vmul.f32 %v2801, %v941
      %v2834 = vmul.f32 %v2802, %v942
      %v2835 = vmul.f32 %v2803, %v943
      %v2836 = vmul.f32 %v2804, %v944
      %v2837 = vmul.f32 %v2805, %v945
      %v2838 = vmul.f32 %v2806, %v946
      %v2839 = vmul.f32 %v2807, %v947
      %v2840 = vmul.f32 %v2808, %v948
      %v2841 = vmul.f32 %v2809, %v949
      %v2842 = vmul.f32 %v2810, %v950
      %v2843 = vmul.f32 %v2811, %v951
      %v2844 = vmul.f32 %v2812, %v952
      %v2845 = vmul.f32 %v2813, %v953
      %v2846 = vmul.f32 %v2814, %v954
      %v2847 = vmul.f32 %v2815, %v955
      %v2848 = vmul.f32 %v2816, %v956
      %v2849 = vmul.f32 %v2817, %v957
      %v2850 = vmul.f32 %v2818, %v958
      %v2851 = vmul.f32 %v2819, %v959
      %v2852 = vmul.f32 %v2820, %v960
      %v2853 = vmul.f32 %v2821, %v961
      %v2854 = vmul.f32 %v2822, %v962
      %v2855 = vmul.f32 %v2823, %v963
      %s2856 = scalar_lea.vmem %s3, 24
      %v2857 = vld [vmem:[%s2856] sm:$0xf]
      %v2859 = vsel %vm276, %v2824, 0
      %v2862 = vsel %vm276, %v2825, 0
      %v2865 = vsel %vm276, %v2826, 0
      %v2868 = vsel %vm276, %v2827, 0
      %v2871 = vsel %vm276, %v2828, 0
      %v2874 = vsel %vm276, %v2829, 0
      %v2877 = vsel %vm276, %v2830, 0
      %v2880 = vsel %vm276, %v2831, 0
      %v2883 = vsel %vm276, %v2832, 0
      %v2886 = vsel %vm276, %v2833, 0
      %v2889 = vsel %vm276, %v2834, 0
      %v2892 = vsel %vm276, %v2835, 0
      %v2895 = vsel %vm276, %v2836, 0
      %v2898 = vsel %vm276, %v2837, 0
      %v2901 = vsel %vm276, %v2838, 0
      %v2904 = vsel %vm276, %v2839, 0
      %v2907 = vsel %vm276, %v2840, 0
      %v2910 = vsel %vm276, %v2841, 0
      %v2913 = vsel %vm276, %v2842, 0
      %v2916 = vsel %vm276, %v2843, 0
      %v2919 = vsel %vm276, %v2844, 0
      %v2922 = vsel %vm276, %v2845, 0
      %v2925 = vsel %vm276, %v2846, 0
      %v2928 = vsel %vm276, %v2847, 0
      %v2931 = vsel %vm276, %v2848, 0
      %v2934 = vsel %vm276, %v2849, 0
      %v2937 = vsel %vm276, %v2850, 0
      %v2940 = vsel %vm276, %v2851, 0
      %v2943 = vsel %vm276, %v2852, 0
      %v2946 = vsel %vm276, %v2853, 0
      %v2949 = vsel %vm276, %v2854, 0
      %v2952 = vsel %vm276, %v2855, 0
      %v2955 = vsel %vm1255, %v2857, 0
      %2957 = vmatpush.msra.mxu0 0.0
      %2958 = vmatpush.msra.mxu0 0.0
      %2959 = vmatpush.msra.mxu0 0.0
      %2960 = vmatpush.msra.mxu0 0.0
      %2961 = vmatpush.msra.mxu0 0.0
      %2962 = vmatpush.msra.mxu0 0.0
      %2963 = vmatpush.msra.mxu0 0.0
      %2964 = vmatpush.msra.mxu0 0.0
      %2965 = vmatpush.msra.mxu0 0.0
      %2966 = vmatpush.msra.mxu0 0.0
      %2967 = vmatpush.msra.mxu0 0.0
      %2968 = vmatpush.msra.mxu0 0.0
      %2969 = vmatpush.msra.mxu0 0.0
      %2970 = vmatpush.msra.mxu0 0.0
      %2971 = vmatpush.msra.mxu0 0.0
      %2972 = vmatpush.msra.mxu0 %v2955
      %2973 = vmatmul.f32.gmra.mxu0 %v2859
      %v2974 = vpop.f32.mrf.mxu0
      %v2975 = vadd.f32 0.0, %v2974
      %2976 = vmatmul.f32.gmra.mxu0 %v2862
      %v2977 = vpop.f32.mrf.mxu0
      %v2978 = vadd.f32 0.0, %v2977
      %2979 = vmatmul.f32.gmra.mxu0 %v2865
      %v2980 = vpop.f32.mrf.mxu0
      %v2981 = vadd.f32 0.0, %v2980
      %2982 = vmatmul.f32.gmra.mxu0 %v2868
      %v2983 = vpop.f32.mrf.mxu0
      %v2984 = vadd.f32 0.0, %v2983
      %2985 = vmatmul.f32.gmra.mxu0 %v2871
      %v2986 = vpop.f32.mrf.mxu0
      %v2987 = vadd.f32 0.0, %v2986
      %2988 = vmatmul.f32.gmra.mxu0 %v2874
      %v2989 = vpop.f32.mrf.mxu0
      %v2990 = vadd.f32 0.0, %v2989
      %2991 = vmatmul.f32.gmra.mxu0 %v2877
      %v2992 = vpop.f32.mrf.mxu0
      %v2993 = vadd.f32 0.0, %v2992
      %2994 = vmatmul.f32.gmra.mxu0 %v2880
      %v2995 = vpop.f32.mrf.mxu0
      %v2996 = vadd.f32 0.0, %v2995
      %2997 = vmatmul.f32.gmra.mxu0 %v2883
      %v2998 = vpop.f32.mrf.mxu0
      %v2999 = vadd.f32 0.0, %v2998
      %3000 = vmatmul.f32.gmra.mxu0 %v2886
      %v3001 = vpop.f32.mrf.mxu0
      %v3002 = vadd.f32 0.0, %v3001
      %3003 = vmatmul.f32.gmra.mxu0 %v2889
      %v3004 = vpop.f32.mrf.mxu0
      %v3005 = vadd.f32 0.0, %v3004
      %3006 = vmatmul.f32.gmra.mxu0 %v2892
      %v3007 = vpop.f32.mrf.mxu0
      %v3008 = vadd.f32 0.0, %v3007
      %3009 = vmatmul.f32.gmra.mxu0 %v2895
      %v3010 = vpop.f32.mrf.mxu0
      %v3011 = vadd.f32 0.0, %v3010
      %3012 = vmatmul.f32.gmra.mxu0 %v2898
      %v3013 = vpop.f32.mrf.mxu0
      %v3014 = vadd.f32 0.0, %v3013
      %3015 = vmatmul.f32.gmra.mxu0 %v2901
      %v3016 = vpop.f32.mrf.mxu0
      %v3017 = vadd.f32 0.0, %v3016
      %3018 = vmatmul.f32.gmra.mxu0 %v2904
      %v3019 = vpop.f32.mrf.mxu0
      %v3020 = vadd.f32 0.0, %v3019
      %3021 = vmatmul.f32.gmra.mxu0 %v2907
      %v3022 = vpop.f32.mrf.mxu0
      %v3023 = vadd.f32 0.0, %v3022
      %3024 = vmatmul.f32.gmra.mxu0 %v2910
      %v3025 = vpop.f32.mrf.mxu0
      %v3026 = vadd.f32 0.0, %v3025
      %3027 = vmatmul.f32.gmra.mxu0 %v2913
      %v3028 = vpop.f32.mrf.mxu0
      %v3029 = vadd.f32 0.0, %v3028
      %3030 = vmatmul.f32.gmra.mxu0 %v2916
      %v3031 = vpop.f32.mrf.mxu0
      %v3032 = vadd.f32 0.0, %v3031
      %3033 = vmatmul.f32.gmra.mxu0 %v2919
      %v3034 = vpop.f32.mrf.mxu0
      %v3035 = vadd.f32 0.0, %v3034
      %3036 = vmatmul.f32.gmra.mxu0 %v2922
      %v3037 = vpop.f32.mrf.mxu0
      %v3038 = vadd.f32 0.0, %v3037
      %3039 = vmatmul.f32.gmra.mxu0 %v2925
      %v3040 = vpop.f32.mrf.mxu0
      %v3041 = vadd.f32 0.0, %v3040
      %3042 = vmatmul.f32.gmra.mxu0 %v2928
      %v3043 = vpop.f32.mrf.mxu0
      %v3044 = vadd.f32 0.0, %v3043
      %3045 = vmatmul.f32.gmra.mxu0 %v2931
      %v3046 = vpop.f32.mrf.mxu0
      %v3047 = vadd.f32 0.0, %v3046
      %3048 = vmatmul.f32.gmra.mxu0 %v2934
      %v3049 = vpop.f32.mrf.mxu0
      %v3050 = vadd.f32 0.0, %v3049
      %3051 = vmatmul.f32.gmra.mxu0 %v2937
      %v3052 = vpop.f32.mrf.mxu0
      %v3053 = vadd.f32 0.0, %v3052
      %3054 = vmatmul.f32.gmra.mxu0 %v2940
      %v3055 = vpop.f32.mrf.mxu0
      %v3056 = vadd.f32 0.0, %v3055
      %3057 = vmatmul.f32.gmra.mxu0 %v2943
      %v3058 = vpop.f32.mrf.mxu0
      %v3059 = vadd.f32 0.0, %v3058
      %3060 = vmatmul.f32.gmra.mxu0 %v2946
      %v3061 = vpop.f32.mrf.mxu0
      %v3062 = vadd.f32 0.0, %v3061
      %3063 = vmatmul.f32.gmra.mxu0 %v2949
      %v3064 = vpop.f32.mrf.mxu0
      %v3065 = vadd.f32 0.0, %v3064
      %3066 = vmatmul.f32.gmra.mxu0 %v2952
      %v3067 = vpop.f32.mrf.mxu0
      %v3068 = vadd.f32 0.0, %v3067
      %3069 = vdwg.mxu0
      %v3070 = vadd.f32 %v2760, %v2975
      %v3071 = vadd.f32 %v2761, %v2978
      %v3072 = vadd.f32 %v2762, %v2981
      %v3073 = vadd.f32 %v2763, %v2984
      %v3074 = vadd.f32 %v2764, %v2987
      %v3075 = vadd.f32 %v2765, %v2990
      %v3076 = vadd.f32 %v2766, %v2993
      %v3077 = vadd.f32 %v2767, %v2996
      %v3078 = vadd.f32 %v2768, %v2999
      %v3079 = vadd.f32 %v2769, %v3002
      %v3080 = vadd.f32 %v2770, %v3005
      %v3081 = vadd.f32 %v2771, %v3008
      %v3082 = vadd.f32 %v2772, %v3011
      %v3083 = vadd.f32 %v2773, %v3014
      %v3084 = vadd.f32 %v2774, %v3017
      %v3085 = vadd.f32 %v2775, %v3020
      %v3086 = vadd.f32 %v2776, %v3023
      %v3087 = vadd.f32 %v2777, %v3026
      %v3088 = vadd.f32 %v2778, %v3029
      %v3089 = vadd.f32 %v2779, %v3032
      %v3090 = vadd.f32 %v2780, %v3035
      %v3091 = vadd.f32 %v2781, %v3038
      %v3092 = vadd.f32 %v2782, %v3041
      %v3093 = vadd.f32 %v2783, %v3044
      %v3094 = vadd.f32 %v2784, %v3047
      %v3095 = vadd.f32 %v2785, %v3050
      %v3096 = vadd.f32 %v2786, %v3053
      %v3097 = vadd.f32 %v2787, %v3056
      %v3098 = vadd.f32 %v2788, %v3059
      %v3099 = vadd.f32 %v2789, %v3062
      %v3100 = vadd.f32 %v2790, %v3065
      %v3101 = vadd.f32 %v2791, %v3068
      %v3102 = vld [vmem:[#allocation2 + $0x28] sm:$0xff]
      %v3103 = vld [vmem:[#allocation2 + $0x30] sm:$0xff]
      %v3104 = vld [vmem:[#allocation2 + $0x38] sm:$0xff]
      %v3105 = vld [vmem:[#allocation2 + $0x40] sm:$0xff]
      %v3106 = vld [vmem:[#allocation2 + $0x48] sm:$0xff]
      %v3107 = vld [vmem:[#allocation2 + $0x50] sm:$0xff]
      %v3108 = vld [vmem:[#allocation2 + $0x58] sm:$0xff]
      %v3109 = vld [vmem:[#allocation2 + $0x60] sm:$0xff]
      %v3110 = vld [vmem:[#allocation2 + $0x68] sm:$0xff]
      %v3111 = vld [vmem:[#allocation2 + $0x70] sm:$0xff]
      %v3112 = vld [vmem:[#allocation2 + $0x78] sm:$0xff]
      %v3113 = vld [vmem:[#allocation2 + $0x80] sm:$0xff]
      %v3114 = vld [vmem:[#allocation2 + $0x88] sm:$0xff]
      %v3115 = vld [vmem:[#allocation2 + $0x90] sm:$0xff]
      %v3116 = vld [vmem:[#allocation2 + $0x98] sm:$0xff]
      %v3117 = vld [vmem:[#allocation2 + $0xa0] sm:$0xff]
      %v3118 = vld [vmem:[#allocation2 + $0xa8] sm:$0xff]
      %v3119 = vld [vmem:[#allocation2 + $0xb0] sm:$0xff]
      %v3120 = vld [vmem:[#allocation2 + $0xb8] sm:$0xff]
      %v3121 = vld [vmem:[#allocation2 + $0xc0] sm:$0xff]
      %v3122 = vld [vmem:[#allocation2 + $0xc8] sm:$0xff]
      %v3123 = vld [vmem:[#allocation2 + $0xd0] sm:$0xff]
      %v3124 = vld [vmem:[#allocation2 + $0xd8] sm:$0xff]
      %v3125 = vld [vmem:[#allocation2 + $0xe0] sm:$0xff]
      %v3126 = vld [vmem:[#allocation2 + $0xe8] sm:$0xff]
      %v3127 = vld [vmem:[#allocation2 + $0xf0] sm:$0xff]
      %v3128 = vld [vmem:[#allocation2 + $0xf8] sm:$0xff]
      %v3129 = vld [vmem:[#allocation2 + $0x100] sm:$0xff]
      %v3130 = vld [vmem:[#allocation2 + $0x108] sm:$0xff]
      %v3131 = vld [vmem:[#allocation2 + $0x110] sm:$0xff]
      %v3132 = vld [vmem:[#allocation2 + $0x118] sm:$0xff]
      %v3133 = vld [vmem:[#allocation2 + $0x120] sm:$0xff]
      %s3134 = scalar_lea.vmem %s3, 28
      %v3135 = vld [vmem:[%s3134] sm:$0xf]
      %v3137 = vsel %vm276, %v3102, 0
      %v3140 = vsel %vm276, %v3103, 0
      %v3143 = vsel %vm276, %v3104, 0
      %v3146 = vsel %vm276, %v3105, 0
      %v3149 = vsel %vm276, %v3106, 0
      %v3152 = vsel %vm276, %v3107, 0
      %v3155 = vsel %vm276, %v3108, 0
      %v3158 = vsel %vm276, %v3109, 0
      %v3161 = vsel %vm276, %v3110, 0
      %v3164 = vsel %vm276, %v3111, 0
      %v3167 = vsel %vm276, %v3112, 0
      %v3170 = vsel %vm276, %v3113, 0
      %v3173 = vsel %vm276, %v3114, 0
      %v3176 = vsel %vm276, %v3115, 0
      %v3179 = vsel %vm276, %v3116, 0
      %v3182 = vsel %vm276, %v3117, 0
      %v3185 = vsel %vm276, %v3118, 0
      %v3188 = vsel %vm276, %v3119, 0
      %v3191 = vsel %vm276, %v3120, 0
      %v3194 = vsel %vm276, %v3121, 0
      %v3197 = vsel %vm276, %v3122, 0
      %v3200 = vsel %vm276, %v3123, 0
      %v3203 = vsel %vm276, %v3124, 0
      %v3206 = vsel %vm276, %v3125, 0
      %v3209 = vsel %vm276, %v3126, 0
      %v3212 = vsel %vm276, %v3127, 0
      %v3215 = vsel %vm276, %v3128, 0
      %v3218 = vsel %vm276, %v3129, 0
      %v3221 = vsel %vm276, %v3130, 0
      %v3224 = vsel %vm276, %v3131, 0
      %v3227 = vsel %vm276, %v3132, 0
      %v3230 = vsel %vm276, %v3133, 0
      %v3233 = vsel %vm1255, %v3135, 0
      %3235 = vmatpush.msra.mxu0 0.0
      %3236 = vmatpush.msra.mxu0 0.0
      %3237 = vmatpush.msra.mxu0 0.0
      %3238 = vmatpush.msra.mxu0 0.0
      %3239 = vmatpush.msra.mxu0 0.0
      %3240 = vmatpush.msra.mxu0 0.0
      %3241 = vmatpush.msra.mxu0 0.0
      %3242 = vmatpush.msra.mxu0 0.0
      %3243 = vmatpush.msra.mxu0 0.0
      %3244 = vmatpush.msra.mxu0 0.0
      %3245 = vmatpush.msra.mxu0 0.0
      %3246 = vmatpush.msra.mxu0 0.0
      %3247 = vmatpush.msra.mxu0 0.0
      %3248 = vmatpush.msra.mxu0 0.0
      %3249 = vmatpush.msra.mxu0 0.0
      %3250 = vmatpush.msra.mxu0 %v3233
      %3251 = vmatmul.f32.gmra.mxu0 %v3137
      %v3252 = vpop.f32.mrf.mxu0
      %v3253 = vadd.f32 0.0, %v3252
      %3254 = vmatmul.f32.gmra.mxu0 %v3140
      %v3255 = vpop.f32.mrf.mxu0
      %v3256 = vadd.f32 0.0, %v3255
      %3257 = vmatmul.f32.gmra.mxu0 %v3143
      %v3258 = vpop.f32.mrf.mxu0
      %v3259 = vadd.f32 0.0, %v3258
      %3260 = vmatmul.f32.gmra.mxu0 %v3146
      %v3261 = vpop.f32.mrf.mxu0
      %v3262 = vadd.f32 0.0, %v3261
      %3263 = vmatmul.f32.gmra.mxu0 %v3149
      %v3264 = vpop.f32.mrf.mxu0
      %v3265 = vadd.f32 0.0, %v3264
      %3266 = vmatmul.f32.gmra.mxu0 %v3152
      %v3267 = vpop.f32.mrf.mxu0
      %v3268 = vadd.f32 0.0, %v3267
      %3269 = vmatmul.f32.gmra.mxu0 %v3155
      %v3270 = vpop.f32.mrf.mxu0
      %v3271 = vadd.f32 0.0, %v3270
      %3272 = vmatmul.f32.gmra.mxu0 %v3158
      %v3273 = vpop.f32.mrf.mxu0
      %v3274 = vadd.f32 0.0, %v3273
      %3275 = vmatmul.f32.gmra.mxu0 %v3161
      %v3276 = vpop.f32.mrf.mxu0
      %v3277 = vadd.f32 0.0, %v3276
      %3278 = vmatmul.f32.gmra.mxu0 %v3164
      %v3279 = vpop.f32.mrf.mxu0
      %v3280 = vadd.f32 0.0, %v3279
      %3281 = vmatmul.f32.gmra.mxu0 %v3167
      %v3282 = vpop.f32.mrf.mxu0
      %v3283 = vadd.f32 0.0, %v3282
      %3284 = vmatmul.f32.gmra.mxu0 %v3170
      %v3285 = vpop.f32.mrf.mxu0
      %v3286 = vadd.f32 0.0, %v3285
      %3287 = vmatmul.f32.gmra.mxu0 %v3173
      %v3288 = vpop.f32.mrf.mxu0
      %v3289 = vadd.f32 0.0, %v3288
      %3290 = vmatmul.f32.gmra.mxu0 %v3176
      %v3291 = vpop.f32.mrf.mxu0
      %v3292 = vadd.f32 0.0, %v3291
      %3293 = vmatmul.f32.gmra.mxu0 %v3179
      %v3294 = vpop.f32.mrf.mxu0
      %v3295 = vadd.f32 0.0, %v3294
      %3296 = vmatmul.f32.gmra.mxu0 %v3182
      %v3297 = vpop.f32.mrf.mxu0
      %v3298 = vadd.f32 0.0, %v3297
      %3299 = vmatmul.f32.gmra.mxu0 %v3185
      %v3300 = vpop.f32.mrf.mxu0
      %v3301 = vadd.f32 0.0, %v3300
      %3302 = vmatmul.f32.gmra.mxu0 %v3188
      %v3303 = vpop.f32.mrf.mxu0
      %v3304 = vadd.f32 0.0, %v3303
      %3305 = vmatmul.f32.gmra.mxu0 %v3191
      %v3306 = vpop.f32.mrf.mxu0
      %v3307 = vadd.f32 0.0, %v3306
      %3308 = vmatmul.f32.gmra.mxu0 %v3194
      %v3309 = vpop.f32.mrf.mxu0
      %v3310 = vadd.f32 0.0, %v3309
      %3311 = vmatmul.f32.gmra.mxu0 %v3197
      %v3312 = vpop.f32.mrf.mxu0
      %v3313 = vadd.f32 0.0, %v3312
      %3314 = vmatmul.f32.gmra.mxu0 %v3200
      %v3315 = vpop.f32.mrf.mxu0
      %v3316 = vadd.f32 0.0, %v3315
      %3317 = vmatmul.f32.gmra.mxu0 %v3203
      %v3318 = vpop.f32.mrf.mxu0
      %v3319 = vadd.f32 0.0, %v3318
      %3320 = vmatmul.f32.gmra.mxu0 %v3206
      %v3321 = vpop.f32.mrf.mxu0
      %v3322 = vadd.f32 0.0, %v3321
      %3323 = vmatmul.f32.gmra.mxu0 %v3209
      %v3324 = vpop.f32.mrf.mxu0
      %v3325 = vadd.f32 0.0, %v3324
      %3326 = vmatmul.f32.gmra.mxu0 %v3212
      %v3327 = vpop.f32.mrf.mxu0
      %v3328 = vadd.f32 0.0, %v3327
      %3329 = vmatmul.f32.gmra.mxu0 %v3215
      %v3330 = vpop.f32.mrf.mxu0
      %v3331 = vadd.f32 0.0, %v3330
      %3332 = vmatmul.f32.gmra.mxu0 %v3218
      %v3333 = vpop.f32.mrf.mxu0
      %v3334 = vadd.f32 0.0, %v3333
      %3335 = vmatmul.f32.gmra.mxu0 %v3221
      %v3336 = vpop.f32.mrf.mxu0
      %v3337 = vadd.f32 0.0, %v3336
      %3338 = vmatmul.f32.gmra.mxu0 %v3224
      %v3339 = vpop.f32.mrf.mxu0
      %v3340 = vadd.f32 0.0, %v3339
      %3341 = vmatmul.f32.gmra.mxu0 %v3227
      %v3342 = vpop.f32.mrf.mxu0
      %v3343 = vadd.f32 0.0, %v3342
      %3344 = vmatmul.f32.gmra.mxu0 %v3230
      %v3345 = vpop.f32.mrf.mxu0
      %v3346 = vadd.f32 0.0, %v3345
      %3347 = vdwg.mxu0
      %v3348 = vadd.f32 %v3070, %v3253
      %v3349 = vadd.f32 %v3071, %v3256
      %v3350 = vadd.f32 %v3072, %v3259
      %v3351 = vadd.f32 %v3073, %v3262
      %v3352 = vadd.f32 %v3074, %v3265
      %v3353 = vadd.f32 %v3075, %v3268
      %v3354 = vadd.f32 %v3076, %v3271
      %v3355 = vadd.f32 %v3077, %v3274
      %v3356 = vadd.f32 %v3078, %v3277
      %v3357 = vadd.f32 %v3079, %v3280
      %v3358 = vadd.f32 %v3080, %v3283
      %v3359 = vadd.f32 %v3081, %v3286
      %v3360 = vadd.f32 %v3082, %v3289
      %v3361 = vadd.f32 %v3083, %v3292
      %v3362 = vadd.f32 %v3084, %v3295
      %v3363 = vadd.f32 %v3085, %v3298
      %v3364 = vadd.f32 %v3086, %v3301
      %v3365 = vadd.f32 %v3087, %v3304
      %v3366 = vadd.f32 %v3088, %v3307
      %v3367 = vadd.f32 %v3089, %v3310
      %v3368 = vadd.f32 %v3090, %v3313
      %v3369 = vadd.f32 %v3091, %v3316
      %v3370 = vadd.f32 %v3092, %v3319
      %v3371 = vadd.f32 %v3093, %v3322
      %v3372 = vadd.f32 %v3094, %v3325
      %v3373 = vadd.f32 %v3095, %v3328
      %v3374 = vadd.f32 %v3096, %v3331
      %v3375 = vadd.f32 %v3097, %v3334
      %v3376 = vadd.f32 %v3098, %v3337
      %v3377 = vadd.f32 %v3099, %v3340
      %v3378 = vadd.f32 %v3100, %v3343
      %v3379 = vadd.f32 %v3101, %v3346
      %v3380 = vld [vmem:[#allocation2 + $0x29] sm:$0xff]
      %v3381 = vld [vmem:[#allocation2 + $0x31] sm:$0xff]
      %v3382 = vld [vmem:[#allocation2 + $0x39] sm:$0xff]
      %v3383 = vld [vmem:[#allocation2 + $0x41] sm:$0xff]
      %v3384 = vld [vmem:[#allocation2 + $0x49] sm:$0xff]
      %v3385 = vld [vmem:[#allocation2 + $0x51] sm:$0xff]
      %v3386 = vld [vmem:[#allocation2 + $0x59] sm:$0xff]
      %v3387 = vld [vmem:[#allocation2 + $0x61] sm:$0xff]
      %v3388 = vld [vmem:[#allocation2 + $0x69] sm:$0xff]
      %v3389 = vld [vmem:[#allocation2 + $0x71] sm:$0xff]
      %v3390 = vld [vmem:[#allocation2 + $0x79] sm:$0xff]
      %v3391 = vld [vmem:[#allocation2 + $0x81] sm:$0xff]
      %v3392 = vld [vmem:[#allocation2 + $0x89] sm:$0xff]
      %v3393 = vld [vmem:[#allocation2 + $0x91] sm:$0xff]
      %v3394 = vld [vmem:[#allocation2 + $0x99] sm:$0xff]
      %v3395 = vld [vmem:[#allocation2 + $0xa1] sm:$0xff]
      %v3396 = vld [vmem:[#allocation2 + $0xa9] sm:$0xff]
      %v3397 = vld [vmem:[#allocation2 + $0xb1] sm:$0xff]
      %v3398 = vld [vmem:[#allocation2 + $0xb9] sm:$0xff]
      %v3399 = vld [vmem:[#allocation2 + $0xc1] sm:$0xff]
      %v3400 = vld [vmem:[#allocation2 + $0xc9] sm:$0xff]
      %v3401 = vld [vmem:[#allocation2 + $0xd1] sm:$0xff]
      %v3402 = vld [vmem:[#allocation2 + $0xd9] sm:$0xff]
      %v3403 = vld [vmem:[#allocation2 + $0xe1] sm:$0xff]
      %v3404 = vld [vmem:[#allocation2 + $0xe9] sm:$0xff]
      %v3405 = vld [vmem:[#allocation2 + $0xf1] sm:$0xff]
      %v3406 = vld [vmem:[#allocation2 + $0xf9] sm:$0xff]
      %v3407 = vld [vmem:[#allocation2 + $0x101] sm:$0xff]
      %v3408 = vld [vmem:[#allocation2 + $0x109] sm:$0xff]
      %v3409 = vld [vmem:[#allocation2 + $0x111] sm:$0xff]
      %v3410 = vld [vmem:[#allocation2 + $0x119] sm:$0xff]
      %v3411 = vld [vmem:[#allocation2 + $0x121] sm:$0xff]
      %v3412 = vmul.f32 %v3380, %v1028
      %v3413 = vmul.f32 %v3381, %v1029
      %v3414 = vmul.f32 %v3382, %v1030
      %v3415 = vmul.f32 %v3383, %v1031
      %v3416 = vmul.f32 %v3384, %v1032
      %v3417 = vmul.f32 %v3385, %v1033
      %v3418 = vmul.f32 %v3386, %v1034
      %v3419 = vmul.f32 %v3387, %v1035
      %v3420 = vmul.f32 %v3388, %v1036
      %v3421 = vmul.f32 %v3389, %v1037
      %v3422 = vmul.f32 %v3390, %v1038
      %v3423 = vmul.f32 %v3391, %v1039
      %v3424 = vmul.f32 %v3392, %v1040
      %v3425 = vmul.f32 %v3393, %v1041
      %v3426 = vmul.f32 %v3394, %v1042
      %v3427 = vmul.f32 %v3395, %v1043
      %v3428 = vmul.f32 %v3396, %v1044
      %v3429 = vmul.f32 %v3397, %v1045
      %v3430 = vmul.f32 %v3398, %v1046
      %v3431 = vmul.f32 %v3399, %v1047
      %v3432 = vmul.f32 %v3400, %v1048
      %v3433 = vmul.f32 %v3401, %v1049
      %v3434 = vmul.f32 %v3402, %v1050
      %v3435 = vmul.f32 %v3403, %v1051
      %v3436 = vmul.f32 %v3404, %v1052
      %v3437 = vmul.f32 %v3405, %v1053
      %v3438 = vmul.f32 %v3406, %v1054
      %v3439 = vmul.f32 %v3407, %v1055
      %v3440 = vmul.f32 %v3408, %v1056
      %v3441 = vmul.f32 %v3409, %v1057
      %v3442 = vmul.f32 %v3410, %v1058
      %v3443 = vmul.f32 %v3411, %v1059
      %s3444 = scalar_lea.vmem %s3, 32
      %v3445 = vld [vmem:[%s3444] sm:$0xf]
      %v3447 = vsel %vm276, %v3412, 0
      %v3450 = vsel %vm276, %v3413, 0
      %v3453 = vsel %vm276, %v3414, 0
      %v3456 = vsel %vm276, %v3415, 0
      %v3459 = vsel %vm276, %v3416, 0
      %v3462 = vsel %vm276, %v3417, 0
      %v3465 = vsel %vm276, %v3418, 0
      %v3468 = vsel %vm276, %v3419, 0
      %v3471 = vsel %vm276, %v3420, 0
      %v3474 = vsel %vm276, %v3421, 0
      %v3477 = vsel %vm276, %v3422, 0
      %v3480 = vsel %vm276, %v3423, 0
      %v3483 = vsel %vm276, %v3424, 0
      %v3486 = vsel %vm276, %v3425, 0
      %v3489 = vsel %vm276, %v3426, 0
      %v3492 = vsel %vm276, %v3427, 0
      %v3495 = vsel %vm276, %v3428, 0
      %v3498 = vsel %vm276, %v3429, 0
      %v3501 = vsel %vm276, %v3430, 0
      %v3504 = vsel %vm276, %v3431, 0
      %v3507 = vsel %vm276, %v3432, 0
      %v3510 = vsel %vm276, %v3433, 0
      %v3513 = vsel %vm276, %v3434, 0
      %v3516 = vsel %vm276, %v3435, 0
      %v3519 = vsel %vm276, %v3436, 0
      %v3522 = vsel %vm276, %v3437, 0
      %v3525 = vsel %vm276, %v3438, 0
      %v3528 = vsel %vm276, %v3439, 0
      %v3531 = vsel %vm276, %v3440, 0
      %v3534 = vsel %vm276, %v3441, 0
      %v3537 = vsel %vm276, %v3442, 0
      %v3540 = vsel %vm276, %v3443, 0
      %v3543 = vsel %vm1255, %v3445, 0
      %3545 = vmatpush.msra.mxu0 0.0
      %3546 = vmatpush.msra.mxu0 0.0
      %3547 = vmatpush.msra.mxu0 0.0
      %3548 = vmatpush.msra.mxu0 0.0
      %3549 = vmatpush.msra.mxu0 0.0
      %3550 = vmatpush.msra.mxu0 0.0
      %3551 = vmatpush.msra.mxu0 0.0
      %3552 = vmatpush.msra.mxu0 0.0
      %3553 = vmatpush.msra.mxu0 0.0
      %3554 = vmatpush.msra.mxu0 0.0
      %3555 = vmatpush.msra.mxu0 0.0
      %3556 = vmatpush.msra.mxu0 0.0
      %3557 = vmatpush.msra.mxu0 0.0
      %3558 = vmatpush.msra.mxu0 0.0
      %3559 = vmatpush.msra.mxu0 0.0
      %3560 = vmatpush.msra.mxu0 %v3543
      %3561 = vmatmul.f32.gmra.mxu0 %v3447
      %v3562 = vpop.f32.mrf.mxu0
      %v3563 = vadd.f32 0.0, %v3562
      %3564 = vmatmul.f32.gmra.mxu0 %v3450
      %v3565 = vpop.f32.mrf.mxu0
      %v3566 = vadd.f32 0.0, %v3565
      %3567 = vmatmul.f32.gmra.mxu0 %v3453
      %v3568 = vpop.f32.mrf.mxu0
      %v3569 = vadd.f32 0.0, %v3568
      %3570 = vmatmul.f32.gmra.mxu0 %v3456
      %v3571 = vpop.f32.mrf.mxu0
      %v3572 = vadd.f32 0.0, %v3571
      %3573 = vmatmul.f32.gmra.mxu0 %v3459
      %v3574 = vpop.f32.mrf.mxu0
      %v3575 = vadd.f32 0.0, %v3574
      %3576 = vmatmul.f32.gmra.mxu0 %v3462
      %v3577 = vpop.f32.mrf.mxu0
      %v3578 = vadd.f32 0.0, %v3577
      %3579 = vmatmul.f32.gmra.mxu0 %v3465
      %v3580 = vpop.f32.mrf.mxu0
      %v3581 = vadd.f32 0.0, %v3580
      %3582 = vmatmul.f32.gmra.mxu0 %v3468
      %v3583 = vpop.f32.mrf.mxu0
      %v3584 = vadd.f32 0.0, %v3583
      %3585 = vmatmul.f32.gmra.mxu0 %v3471
      %v3586 = vpop.f32.mrf.mxu0
      %v3587 = vadd.f32 0.0, %v3586
      %3588 = vmatmul.f32.gmra.mxu0 %v3474
      %v3589 = vpop.f32.mrf.mxu0
      %v3590 = vadd.f32 0.0, %v3589
      %3591 = vmatmul.f32.gmra.mxu0 %v3477
      %v3592 = vpop.f32.mrf.mxu0
      %v3593 = vadd.f32 0.0, %v3592
      %3594 = vmatmul.f32.gmra.mxu0 %v3480
      %v3595 = vpop.f32.mrf.mxu0
      %v3596 = vadd.f32 0.0, %v3595
      %3597 = vmatmul.f32.gmra.mxu0 %v3483
      %v3598 = vpop.f32.mrf.mxu0
      %v3599 = vadd.f32 0.0, %v3598
      %3600 = vmatmul.f32.gmra.mxu0 %v3486
      %v3601 = vpop.f32.mrf.mxu0
      %v3602 = vadd.f32 0.0, %v3601
      %3603 = vmatmul.f32.gmra.mxu0 %v3489
      %v3604 = vpop.f32.mrf.mxu0
      %v3605 = vadd.f32 0.0, %v3604
      %3606 = vmatmul.f32.gmra.mxu0 %v3492
      %v3607 = vpop.f32.mrf.mxu0
      %v3608 = vadd.f32 0.0, %v3607
      %3609 = vmatmul.f32.gmra.mxu0 %v3495
      %v3610 = vpop.f32.mrf.mxu0
      %v3611 = vadd.f32 0.0, %v3610
      %3612 = vmatmul.f32.gmra.mxu0 %v3498
      %v3613 = vpop.f32.mrf.mxu0
      %v3614 = vadd.f32 0.0, %v3613
      %3615 = vmatmul.f32.gmra.mxu0 %v3501
      %v3616 = vpop.f32.mrf.mxu0
      %v3617 = vadd.f32 0.0, %v3616
      %3618 = vmatmul.f32.gmra.mxu0 %v3504
      %v3619 = vpop.f32.mrf.mxu0
      %v3620 = vadd.f32 0.0, %v3619
      %3621 = vmatmul.f32.gmra.mxu0 %v3507
      %v3622 = vpop.f32.mrf.mxu0
      %v3623 = vadd.f32 0.0, %v3622
      %3624 = vmatmul.f32.gmra.mxu0 %v3510
      %v3625 = vpop.f32.mrf.mxu0
      %v3626 = vadd.f32 0.0, %v3625
      %3627 = vmatmul.f32.gmra.mxu0 %v3513
      %v3628 = vpop.f32.mrf.mxu0
      %v3629 = vadd.f32 0.0, %v3628
      %3630 = vmatmul.f32.gmra.mxu0 %v3516
      %v3631 = vpop.f32.mrf.mxu0
      %v3632 = vadd.f32 0.0, %v3631
      %3633 = vmatmul.f32.gmra.mxu0 %v3519
      %v3634 = vpop.f32.mrf.mxu0
      %v3635 = vadd.f32 0.0, %v3634
      %3636 = vmatmul.f32.gmra.mxu0 %v3522
      %v3637 = vpop.f32.mrf.mxu0
      %v3638 = vadd.f32 0.0, %v3637
      %3639 = vmatmul.f32.gmra.mxu0 %v3525
      %v3640 = vpop.f32.mrf.mxu0
      %v3641 = vadd.f32 0.0, %v3640
      %3642 = vmatmul.f32.gmra.mxu0 %v3528
      %v3643 = vpop.f32.mrf.mxu0
      %v3644 = vadd.f32 0.0, %v3643
      %3645 = vmatmul.f32.gmra.mxu0 %v3531
      %v3646 = vpop.f32.mrf.mxu0
      %v3647 = vadd.f32 0.0, %v3646
      %3648 = vmatmul.f32.gmra.mxu0 %v3534
      %v3649 = vpop.f32.mrf.mxu0
      %v3650 = vadd.f32 0.0, %v3649
      %3651 = vmatmul.f32.gmra.mxu0 %v3537
      %v3652 = vpop.f32.mrf.mxu0
      %v3653 = vadd.f32 0.0, %v3652
      %3654 = vmatmul.f32.gmra.mxu0 %v3540
      %v3655 = vpop.f32.mrf.mxu0
      %v3656 = vadd.f32 0.0, %v3655
      %3657 = vdwg.mxu0
      %v3658 = vadd.f32 %v3348, %v3563
      %v3659 = vadd.f32 %v3349, %v3566
      %v3660 = vadd.f32 %v3350, %v3569
      %v3661 = vadd.f32 %v3351, %v3572
      %v3662 = vadd.f32 %v3352, %v3575
      %v3663 = vadd.f32 %v3353, %v3578
      %v3664 = vadd.f32 %v3354, %v3581
      %v3665 = vadd.f32 %v3355, %v3584
      %v3666 = vadd.f32 %v3356, %v3587
      %v3667 = vadd.f32 %v3357, %v3590
      %v3668 = vadd.f32 %v3358, %v3593
      %v3669 = vadd.f32 %v3359, %v3596
      %v3670 = vadd.f32 %v3360, %v3599
      %v3671 = vadd.f32 %v3361, %v3602
      %v3672 = vadd.f32 %v3362, %v3605
      %v3673 = vadd.f32 %v3363, %v3608
      %v3674 = vadd.f32 %v3364, %v3611
      %v3675 = vadd.f32 %v3365, %v3614
      %v3676 = vadd.f32 %v3366, %v3617
      %v3677 = vadd.f32 %v3367, %v3620
      %v3678 = vadd.f32 %v3368, %v3623
      %v3679 = vadd.f32 %v3369, %v3626
      %v3680 = vadd.f32 %v3370, %v3629
      %v3681 = vadd.f32 %v3371, %v3632
      %v3682 = vadd.f32 %v3372, %v3635
      %v3683 = vadd.f32 %v3373, %v3638
      %v3684 = vadd.f32 %v3374, %v3641
      %v3685 = vadd.f32 %v3375, %v3644
      %v3686 = vadd.f32 %v3376, %v3647
      %v3687 = vadd.f32 %v3377, %v3650
      %v3688 = vadd.f32 %v3378, %v3653
      %v3689 = vadd.f32 %v3379, %v3656
      %3690 = vst.msk [vmem:[%s266] sm:$0xff] %vm276, %v3658
      %3691 = vst.msk [vmem:[%s266 + $0x8] sm:$0xff] %vm276, %v3659
      %3692 = vst.msk [vmem:[%s266 + $0x10] sm:$0xff] %vm276, %v3660
      %3693 = vst.msk [vmem:[%s266 + $0x18] sm:$0xff] %vm276, %v3661
      %3694 = vst.msk [vmem:[%s266 + $0x20] sm:$0xff] %vm276, %v3662
      %3695 = vst.msk [vmem:[%s266 + $0x28] sm:$0xff] %vm276, %v3663
      %3696 = vst.msk [vmem:[%s266 + $0x30] sm:$0xff] %vm276, %v3664
      %3697 = vst.msk [vmem:[%s266 + $0x38] sm:$0xff] %vm276, %v3665
      %3698 = vst.msk [vmem:[%s266 + $0x40] sm:$0xff] %vm276, %v3666
      %3699 = vst.msk [vmem:[%s266 + $0x48] sm:$0xff] %vm276, %v3667
      %3700 = vst.msk [vmem:[%s266 + $0x50] sm:$0xff] %vm276, %v3668
      %3701 = vst.msk [vmem:[%s266 + $0x58] sm:$0xff] %vm276, %v3669
      %3702 = vst.msk [vmem:[%s266 + $0x60] sm:$0xff] %vm276, %v3670
      %3703 = vst.msk [vmem:[%s266 + $0x68] sm:$0xff] %vm276, %v3671
      %3704 = vst.msk [vmem:[%s266 + $0x70] sm:$0xff] %vm276, %v3672
      %3705 = vst.msk [vmem:[%s266 + $0x78] sm:$0xff] %vm276, %v3673
      %3706 = vst.msk [vmem:[%s266 + $0x80] sm:$0xff] %vm276, %v3674
      %3707 = vst.msk [vmem:[%s266 + $0x88] sm:$0xff] %vm276, %v3675
      %3708 = vst.msk [vmem:[%s266 + $0x90] sm:$0xff] %vm276, %v3676
      %3709 = vst.msk [vmem:[%s266 + $0x98] sm:$0xff] %vm276, %v3677
      %3710 = vst.msk [vmem:[%s266 + $0xa0] sm:$0xff] %vm276, %v3678
      %3711 = vst.msk [vmem:[%s266 + $0xa8] sm:$0xff] %vm276, %v3679
      %3712 = vst.msk [vmem:[%s266 + $0xb0] sm:$0xff] %vm276, %v3680
      %3713 = vst.msk [vmem:[%s266 + $0xb8] sm:$0xff] %vm276, %v3681
      %3714 = vst.msk [vmem:[%s266 + $0xc0] sm:$0xff] %vm276, %v3682
      %3715 = vst.msk [vmem:[%s266 + $0xc8] sm:$0xff] %vm276, %v3683
      %3716 = vst.msk [vmem:[%s266 + $0xd0] sm:$0xff] %vm276, %v3684
      %3717 = vst.msk [vmem:[%s266 + $0xd8] sm:$0xff] %vm276, %v3685
      %3718 = vst.msk [vmem:[%s266 + $0xe0] sm:$0xff] %vm276, %v3686
      %3719 = vst.msk [vmem:[%s266 + $0xe8] sm:$0xff] %vm276, %v3687
      %3720 = vst.msk [vmem:[%s266 + $0xf0] sm:$0xff] %vm276, %v3688
      %3721 = vst.msk [vmem:[%s266 + $0xf8] sm:$0xff] %vm276, %v3689
      %v3722 = vsel %vm276, %v3658, 0.0
      %v3723 = vsel %vm276, %v3659, 0.0
      %v3724 = vadd.f32 %v3722, %v3723
      %v3725 = vsel %vm276, %v3660, 0.0
      %v3726 = vadd.f32 %v3724, %v3725
      %v3727 = vsel %vm276, %v3661, 0.0
      %v3728 = vadd.f32 %v3726, %v3727
      %v3729 = vsel %vm276, %v3662, 0.0
      %v3730 = vadd.f32 %v3728, %v3729
      %v3731 = vsel %vm276, %v3663, 0.0
      %v3732 = vadd.f32 %v3730, %v3731
      %v3733 = vsel %vm276, %v3664, 0.0
      %v3734 = vadd.f32 %v3732, %v3733
      %v3735 = vsel %vm276, %v3665, 0.0
      %v3736 = vadd.f32 %v3734, %v3735
      %v3737 = vsel %vm276, %v3666, 0.0
      %v3738 = vadd.f32 %v3736, %v3737
      %v3739 = vsel %vm276, %v3667, 0.0
      %v3740 = vadd.f32 %v3738, %v3739
      %v3741 = vsel %vm276, %v3668, 0.0
      %v3742 = vadd.f32 %v3740, %v3741
      %v3743 = vsel %vm276, %v3669, 0.0
      %v3744 = vadd.f32 %v3742, %v3743
      %v3745 = vsel %vm276, %v3670, 0.0
      %v3746 = vadd.f32 %v3744, %v3745
      %v3747 = vsel %vm276, %v3671, 0.0
      %v3748 = vadd.f32 %v3746, %v3747
      %v3749 = vsel %vm276, %v3672, 0.0
      %v3750 = vadd.f32 %v3748, %v3749
      %v3751 = vsel %vm276, %v3673, 0.0
      %v3752 = vadd.f32 %v3750, %v3751
      %v3753 = vsel %vm276, %v3674, 0.0
      %v3754 = vadd.f32 %v3752, %v3753
      %v3755 = vsel %vm276, %v3675, 0.0
      %v3756 = vadd.f32 %v3754, %v3755
      %v3757 = vsel %vm276, %v3676, 0.0
      %v3758 = vadd.f32 %v3756, %v3757
      %v3759 = vsel %vm276, %v3677, 0.0
      %v3760 = vadd.f32 %v3758, %v3759
      %v3761 = vsel %vm276, %v3678, 0.0
      %v3762 = vadd.f32 %v3760, %v3761
      %v3763 = vsel %vm276, %v3679, 0.0
      %v3764 = vadd.f32 %v3762, %v3763
      %v3765 = vsel %vm276, %v3680, 0.0
      %v3766 = vadd.f32 %v3764, %v3765
      %v3767 = vsel %vm276, %v3681, 0.0
      %v3768 = vadd.f32 %v3766, %v3767
      %v3769 = vsel %vm276, %v3682, 0.0
      %v3770 = vadd.f32 %v3768, %v3769
      %v3771 = vsel %vm276, %v3683, 0.0
      %v3772 = vadd.f32 %v3770, %v3771
      %v3773 = vsel %vm276, %v3684, 0.0
      %v3774 = vadd.f32 %v3772, %v3773
      %v3775 = vsel %vm276, %v3685, 0.0
      %v3776 = vadd.f32 %v3774, %v3775
      %v3777 = vsel %vm276, %v3686, 0.0
      %v3778 = vadd.f32 %v3776, %v3777
      %v3779 = vsel %vm276, %v3687, 0.0
      %v3780 = vadd.f32 %v3778, %v3779
      %v3781 = vsel %vm276, %v3688, 0.0
      %v3782 = vadd.f32 %v3780, %v3781
      %v3783 = vsel %vm276, %v3689, 0.0
      %v3784 = vadd.f32 %v3782, %v3783
      %v3785 = vrot.slane %v3784, 4
      %v3786 = vadd.f32 %v3784, %v3785
      %v3787 = vrot.slane %v3786, 2
      %v3788 = vadd.f32 %v3786, %v3787
      %v3789 = vrot.slane %v3788, 1
      %v3790 = vadd.f32 %v3788, %v3789
      %vm3791 = vcmp.eq.s32.totalorder %v452, 0
      %v3792 = vsel %vm3791, %v3790, 0.0
      %3793 = vst.msk [vmem:[%s271] sm:$0xff] %vm276, %v3792
      %v3794 = vmul.f32 %v3658, %v3658
      %v3795 = vmul.f32 %v3659, %v3659
      %v3796 = vmul.f32 %v3660, %v3660
      %v3797 = vmul.f32 %v3661, %v3661
      %v3798 = vmul.f32 %v3662, %v3662
      %v3799 = vmul.f32 %v3663, %v3663
      %v3800 = vmul.f32 %v3664, %v3664
      %v3801 = vmul.f32 %v3665, %v3665
      %v3802 = vmul.f32 %v3666, %v3666
      %v3803 = vmul.f32 %v3667, %v3667
      %v3804 = vmul.f32 %v3668, %v3668
      %v3805 = vmul.f32 %v3669, %v3669
      %v3806 = vmul.f32 %v3670, %v3670
      %v3807 = vmul.f32 %v3671, %v3671
      %v3808 = vmul.f32 %v3672, %v3672
      %v3809 = vmul.f32 %v3673, %v3673
      %v3810 = vmul.f32 %v3674, %v3674
      %v3811 = vmul.f32 %v3675, %v3675
      %v3812 = vmul.f32 %v3676, %v3676
      %v3813 = vmul.f32 %v3677, %v3677
      %v3814 = vmul.f32 %v3678, %v3678
      %v3815 = vmul.f32 %v3679, %v3679
      %v3816 = vmul.f32 %v3680, %v3680
      %v3817 = vmul.f32 %v3681, %v3681
      %v3818 = vmul.f32 %v3682, %v3682
      %v3819 = vmul.f32 %v3683, %v3683
      %v3820 = vmul.f32 %v3684, %v3684
      %v3821 = vmul.f32 %v3685, %v3685
      %v3822 = vmul.f32 %v3686, %v3686
      %v3823 = vmul.f32 %v3687, %v3687
      %v3824 = vmul.f32 %v3688, %v3688
      %v3825 = vmul.f32 %v3689, %v3689
      %v3826 = vsel %vm276, %v3794, 0.0
      %v3827 = vsel %vm276, %v3795, 0.0
      %v3828 = vadd.f32 %v3826, %v3827
      %v3829 = vsel %vm276, %v3796, 0.0
      %v3830 = vadd.f32 %v3828, %v3829
      %v3831 = vsel %vm276, %v3797, 0.0
      %v3832 = vadd.f32 %v3830, %v3831
      %v3833 = vsel %vm276, %v3798, 0.0
      %v3834 = vadd.f32 %v3832, %v3833
      %v3835 = vsel %vm276, %v3799, 0.0
      %v3836 = vadd.f32 %v3834, %v3835
      %v3837 = vsel %vm276, %v3800, 0.0
      %v3838 = vadd.f32 %v3836, %v3837
      %v3839 = vsel %vm276, %v3801, 0.0
      %v3840 = vadd.f32 %v3838, %v3839
      %v3841 = vsel %vm276, %v3802, 0.0
      %v3842 = vadd.f32 %v3840, %v3841
      %v3843 = vsel %vm276, %v3803, 0.0
      %v3844 = vadd.f32 %v3842, %v3843
      %v3845 = vsel %vm276, %v3804, 0.0
      %v3846 = vadd.f32 %v3844, %v3845
      %v3847 = vsel %vm276, %v3805, 0.0
      %v3848 = vadd.f32 %v3846, %v3847
      %v3849 = vsel %vm276, %v3806, 0.0
      %v3850 = vadd.f32 %v3848, %v3849
      %v3851 = vsel %vm276, %v3807, 0.0
      %v3852 = vadd.f32 %v3850, %v3851
      %v3853 = vsel %vm276, %v3808, 0.0
      %v3854 = vadd.f32 %v3852, %v3853
      %v3855 = vsel %vm276, %v3809, 0.0
      %v3856 = vadd.f32 %v3854, %v3855
      %v3857 = vsel %vm276, %v3810, 0.0
      %v3858 = vadd.f32 %v3856, %v3857
      %v3859 = vsel %vm276, %v3811, 0.0
      %v3860 = vadd.f32 %v3858, %v3859
      %v3861 = vsel %vm276, %v3812, 0.0
      %v3862 = vadd.f32 %v3860, %v3861
      %v3863 = vsel %vm276, %v3813, 0.0
      %v3864 = vadd.f32 %v3862, %v3863
      %v3865 = vsel %vm276, %v3814, 0.0
      %v3866 = vadd.f32 %v3864, %v3865
      %v3867 = vsel %vm276, %v3815, 0.0
      %v3868 = vadd.f32 %v3866, %v3867
      %v3869 = vsel %vm276, %v3816, 0.0
      %v3870 = vadd.f32 %v3868, %v3869
      %v3871 = vsel %vm276, %v3817, 0.0
      %v3872 = vadd.f32 %v3870, %v3871
      %v3873 = vsel %vm276, %v3818, 0.0
      %v3874 = vadd.f32 %v3872, %v3873
      %v3875 = vsel %vm276, %v3819, 0.0
      %v3876 = vadd.f32 %v3874, %v3875
      %v3877 = vsel %vm276, %v3820, 0.0
      %v3878 = vadd.f32 %v3876, %v3877
      %v3879 = vsel %vm276, %v3821, 0.0
      %v3880 = vadd.f32 %v3878, %v3879
      %v3881 = vsel %vm276, %v3822, 0.0
      %v3882 = vadd.f32 %v3880, %v3881
      %v3883 = vsel %vm276, %v3823, 0.0
      %v3884 = vadd.f32 %v3882, %v3883
      %v3885 = vsel %vm276, %v3824, 0.0
      %v3886 = vadd.f32 %v3884, %v3885
      %v3887 = vsel %vm276, %v3825, 0.0
      %v3888 = vadd.f32 %v3886, %v3887
      %v3889 = vrot.slane %v3888, 4
      %v3890 = vadd.f32 %v3888, %v3889
      %v3891 = vrot.slane %v3890, 2
      %v3892 = vadd.f32 %v3890, %v3891
      %v3893 = vrot.slane %v3892, 1
      %v3894 = vadd.f32 %v3892, %v3893
      %v3895 = vsel %vm3791, %v3894, 0.0
      %3896 = vst.msk [vmem:[%s275] sm:$0xff] %vm276, %v3895
      %s3897 = smul.u32 32, %s18
      %p3898 = scmp.lt.s32.totalorder %s3897, 63
      %s3899 = scalar_select %p3898, %s3897, 63
      %s3900 = smul.addr %s3899, 8
      %s3901 = scalar_lea.vmem %s4, %s3900
      %p3902 = scmp.lt.s32.totalorder %s18, 1
      %s3903 = scalar_select %p3902, %s18, 1
      %s3904 = smul.addr %s3903, 8
      %s3905 = scalar_lea.vmem %s5, %s3904
      %p3906 = scmp.lt.s32.totalorder %s18, 1
      %s3907 = scalar_select %p3906, %s18, 1
      %s3908 = smul.addr %s3907, 8
      %s3909 = scalar_lea.vmem %s6, %s3908
      // Predicated region
      $region37: #{bottleneck_forward.5} parent=35 // pred_check
        %p3910 = pneg %p125
      $region38: #{bottleneck_forward.5} parent=35 // pred_check_branch
        %3912 = sbr.rel (%p3910) target = $region40
      $region39: #{bottleneck_forward.5} parent=35 // pred_region
        %s3913 = smul.u32 32, %s18
      $region40: #{bottleneck_forward.5} parent=35 // pred_fallthru
        _
      // Predicated region
      $region41: #{bottleneck_forward.5} parent=35 // pred_check
        %p3914 = pneg %p151
      $region42: #{bottleneck_forward.5} parent=35 // pred_check_branch
        %3916 = sbr.rel (%p3914) target = $region44
      $region43: #{bottleneck_forward.5} parent=35 // pred_region
        _
      $region44: #{bottleneck_forward.5} parent=35 // pred_fallthru
        _
      // Predicated region
      $region45: #{bottleneck_forward.5} parent=35 // pred_check
        %p3917 = pneg %p177
      $region46: #{bottleneck_forward.5} parent=35 // pred_check_branch
        %3919 = sbr.rel (%p3917) target = $region48
      $region47: #{bottleneck_forward.5} parent=35 // pred_region
        _
      $region48: #{bottleneck_forward.5} parent=35 // pred_fallthru
        _
    $region36: #{bottleneck_forward.5} parent=5 // pred_fallthru
      _
    %p3920 = scmp.le.s32.totalorder 2, %s13
    // Predicated region
    $region49: #{bottleneck_forward.5} parent=5 // pred_check
      %p3921 = pneg %p3920
    $region50: #{bottleneck_forward.5} parent=5 // pred_check_branch
      %3923 = sbr.rel (%p3921) target = $region52
    $region51: #{bottleneck_forward.5} parent=5 // pred_region
      %s3924 = ssub.s32 %s13, 2
      // Predicated region
      $region53: #{bottleneck_forward.5} parent=51 // pred_check
        %p3925 = pneg %p131
      $region54: #{bottleneck_forward.5} parent=51 // pred_check_branch
        %3927 = sbr.rel (%p3925) target = $region56
      $region55: #{bottleneck_forward.5} parent=51 // pred_region
        %s3928 = smul.u32 32, %s19
        %p3929 = scmp.lt.s32.totalorder %s3928, 63
        %s3930 = scalar_select %p3929, %s3928, 63
        %s3931 = smul.addr %s3930, 8
        %s3932 = scalar_lea.vmem %s4, %s3931
      $region56: #{bottleneck_forward.5} parent=51 // pred_fallthru
        _
      // Predicated region
      $region57: #{bottleneck_forward.5} parent=51 // pred_check
        %p3933 = pneg %p157
      $region58: #{bottleneck_forward.5} parent=51 // pred_check_branch
        %3935 = sbr.rel (%p3933) target = $region60
      $region59: #{bottleneck_forward.5} parent=51 // pred_region
        %p3936 = scmp.lt.s32.totalorder %s19, 1
        %s3937 = scalar_select %p3936, %s19, 1
        %s3938 = smul.addr %s3937, 8
        %s3939 = scalar_lea.vmem %s5, %s3938
      $region60: #{bottleneck_forward.5} parent=51 // pred_fallthru
        _
      // Predicated region
      $region61: #{bottleneck_forward.5} parent=51 // pred_check
        %p3940 = pneg %p183
      $region62: #{bottleneck_forward.5} parent=51 // pred_check_branch
        %3942 = sbr.rel (%p3940) target = $region64
      $region63: #{bottleneck_forward.5} parent=51 // pred_region
        %p3943 = scmp.lt.s32.totalorder %s19, 1
        %s3944 = scalar_select %p3943, %s19, 1
        %s3945 = smul.addr %s3944, 8
        %s3946 = scalar_lea.vmem %s6, %s3945
      $region64: #{bottleneck_forward.5} parent=51 // pred_fallthru
        _
    $region52: #{bottleneck_forward.5} parent=5 // pred_fallthru
      _
  $region6: #{bottleneck_forward.5} parent=0 // loop_footer
    %s17 = sadd.s32 1, %s13
  $region7: #{bottleneck_forward.5} parent=0 // loop_footer_branch
    %12 = sbr.rel target = $region3
  $region8: #{bottleneck_forward.5} parent=0 // loop_exit
    _

</llo_original>
